<compile_context>
chip_gen: v5e
topology: v5e:2x2
jax: 0.10.0
libtpu: 0.0.40
codegen_flags: <defaults>
</compile_context>

<pallas_src>
import functools

import jax
import jax.numpy as jnp
from jax import lax
from jax.experimental import pallas as pl
from jax.experimental.pallas import tpu as pltpu

EPS = 1e-5  # nn.BatchNorm1d default eps


def _generator_kernel(dims,
                      x_ref, w1, w2, w3, gall_ref, ball_ref, b5_ref,
                      w4_hbm, w5_hbm,
                      o_ref,
                      w4_buf, w5_buf, w4_sem, w5_sem):
    """Fused MLP generator. Small params VMEM-resident; w4/w5 manually prefetched."""
    # Kick off the DMAs for the two large weight matrices immediately; they
    # overlap with the layer 1-3 (w4) / 1-4 (w5) compute below.  w4 is issued
    # first so it lands first.
    w4_copy = pltpu.make_async_copy(w4_hbm, w4_buf, w4_sem)
    w5_copy = pltpu.make_async_copy(w5_hbm, w5_buf, w5_sem)
    w4_copy.start()
    w5_copy.start()

    g_all = gall_ref[...]   # (1, 128+256+512+1024) concatenated gammas
    b_all = ball_ref[...]   # (1, 1920) concatenated betas

    # Static, lane-tile-aligned per-layer offsets into the concatenated vectors.
    offs = []
    o = 0
    for d in dims[1:5]:
        offs.append((o, o + d))
        o += d

    def gen_block(h, w, lo, hi):
        # Linear (bias omitted: BN's batch-mean subtraction cancels it exactly).
        y = jnp.dot(h.astype(jnp.bfloat16), w,
                    preferred_element_type=jnp.float32)
        # BatchNorm1d, training mode (biased batch statistics); gamma folded
        # into the rsqrt scale so the (B, N) tensor sees one mul + one add.
        mu = jnp.mean(y, axis=0, keepdims=True)
        var = jnp.mean((y - mu) * (y - mu), axis=0, keepdims=True)
        scale = g_all[:, lo:hi] * lax.rsqrt(var + EPS)
        shift = b_all[:, lo:hi] - mu * scale
        # ReLU
        return jnp.maximum(y * scale + shift, 0.0)

    h = x_ref[...]
    h = gen_block(h, w1[...], *offs[0])
    h = gen_block(h, w2[...], *offs[1])
    h = gen_block(h, w3[...], *offs[2])

    w4_copy.wait()
    h = gen_block(h, w4_buf[...], *offs[3])

    # Final Linear + Sigmoid (weights arrive via the prefetched VMEM buffer).
    w5_copy.wait()
    y = jnp.dot(h.astype(jnp.bfloat16), w5_buf[...],
                preferred_element_type=jnp.float32) + b5_ref[...]
    o_ref[...] = jax.nn.sigmoid(y).astype(o_ref.dtype)


def init_params(key, zdim=10, image_dim=784, hidden_dim=128):
    """Deterministic synthetic parameter init (PyTorch-like shapes, pre-transposed)."""
    dims = [zdim, hidden_dim, hidden_dim * 2, hidden_dim * 4, hidden_dim * 8, image_dim]
    params = []
    for i in range(5):
        fan_in, fan_out = dims[i], dims[i + 1]
        key, kw, kb = jax.random.split(key, 3)
        bound = 1.0 / jnp.sqrt(fan_in)
        # stored as (in, out): transpose of PyTorch's (out, in) Linear weight
        w = jax.random.uniform(kw, (fan_in, fan_out), jnp.float32, -bound, bound)
        b = jax.random.uniform(kb, (1, fan_out), jnp.float32, -bound, bound)
        params.append((w, b))
    # BatchNorm affine params (gamma=1, beta=0 as in nn.BatchNorm1d init)
    bn = [(jnp.ones((1, d), jnp.float32), jnp.zeros((1, d), jnp.float32))
          for d in dims[1:5]]
    return params, bn


def prepare_params(params, bn, zdim=10, image_dim=784, hidden_dim=128):
    """One-time kernel-side parameter preparation (NOT per-forward).

    bf16 weight storage (halves weight HBM traffic, native MXU path), w5/b5
    padded to a lane-dense 896-column layout, BN affine vectors concatenated.
    Re-run only when the weights change (e.g. after an optimizer step).
    """
    (w1, _b1), (w2, _b2), (w3, _b3), (w4, _b4), (w5, b5) = params
    dims = (zdim, hidden_dim, hidden_dim * 2, hidden_dim * 4, hidden_dim * 8, image_dim)
    out_pad = pl.cdiv(image_dim, 128) * 128
    pad = out_pad - image_dim
    prep = dict(
        dims=dims,
        image_dim=image_dim,
        out_pad=out_pad,
        w1=w1.astype(jnp.bfloat16),
        w2=w2.astype(jnp.bfloat16),
        w3=w3.astype(jnp.bfloat16),
        w4=w4.astype(jnp.bfloat16),
        w5=jnp.pad(w5, ((0, 0), (0, pad))).astype(jnp.bfloat16),
        b5=jnp.pad(b5, ((0, 0), (0, pad))),
        gamma_all=jnp.concatenate([g for g, _ in bn], axis=1),
        beta_all=jnp.concatenate([be for _, be in bn], axis=1),
    )
    # Materialize now so no prep work leaks into (or is fused with) the forward.
    return jax.tree_util.tree_map(
        lambda a: jax.block_until_ready(a) if isinstance(a, jax.Array) else a, prep)


def generator_forward(x, prep):
    dims = prep["dims"]
    out_pad = prep["out_pad"]
    image_dim = prep["image_dim"]
    B = x.shape[0]

    kernel = functools.partial(_generator_kernel, dims)

    vmem = pl.BlockSpec(memory_space=pltpu.MemorySpace.VMEM)
    hbm = pl.BlockSpec(memory_space=pl.ANY)   # stays in HBM; manual DMA in-kernel

    out = pl.pallas_call(
        kernel,
        out_shape=jax.ShapeDtypeStruct((B, out_pad), jnp.float32),
        in_specs=[vmem,                 # x
                  vmem, vmem, vmem,     # w1, w2, w3 (bf16)
                  vmem, vmem,           # gamma_all, beta_all
                  vmem,                 # b5 (padded)
                  hbm, hbm],            # w4, w5 -> manual prefetch
        out_specs=vmem,
        scratch_shapes=[
            pltpu.VMEM((dims[3], dims[4]), jnp.bfloat16),   # w4 buffer (512, 1024)
            pltpu.VMEM((dims[4], out_pad), jnp.bfloat16),   # w5 buffer (1024, 896)
            pltpu.SemaphoreType.DMA(()),
            pltpu.SemaphoreType.DMA(()),
        ],
        compiler_params=pltpu.CompilerParams(vmem_limit_bytes=16 << 20),
    )(x,
      prep["w1"], prep["w2"], prep["w3"],
      prep["gamma_all"], prep["beta_all"],
      prep["b5"],
      prep["w4"], prep["w5"])
    return out[:, :image_dim]


def mirror_reference(x, params, bn):
    """Pure-JAX reference mirroring the kernel numerics (bf16 matmul inputs)."""
    (w1, _), (w2, _), (w3, _), (w4, _), (w5, b5) = params
    h = x
    for w, (g, be) in zip((w1, w2, w3, w4), bn):
        y = jnp.dot(h.astype(jnp.bfloat16), w.astype(jnp.bfloat16),
                    preferred_element_type=jnp.float32)
        mu = jnp.mean(y, axis=0, keepdims=True)
        var = jnp.mean((y - mu) ** 2, axis=0, keepdims=True)
        scale = g * lax.rsqrt(var + EPS)
        h = jnp.maximum(y * scale + (be - mu * scale), 0.0)
    y = jnp.dot(h.astype(jnp.bfloat16), w5.astype(jnp.bfloat16),
                preferred_element_type=jnp.float32) + b5
    return jax.nn.sigmoid(y)


def reference_forward(x, params, bn):
    """Pure-f32 reference (same math as the PyTorch module in train mode)."""
    h = x
    for i in range(4):
        w, b = params[i]
        g, be = bn[i]
        y = h @ w + b
        mu = jnp.mean(y, axis=0, keepdims=True)
        var = jnp.mean((y - mu) ** 2, axis=0, keepdims=True)
        y = (y - mu) / jnp.sqrt(var + EPS) * g + be
        h = jnp.maximum(y, 0.0)
    w, b = params[4]
    return jax.nn.sigmoid(h @ w + b)


if __name__ == "__main__":
    zdim, image_dim, hidden_dim = 10, 784, 128
    batch = 8

    key = jax.random.PRNGKey(0)
    kx, kp = jax.random.split(key)
    x = jax.random.normal(kx, (batch, zdim), jnp.float32)
    params, bn = init_params(kp, zdim, image_dim, hidden_dim)

    # One-time prep (bf16 / padding / concatenation) — NOT part of the forward.
    prep = prepare_params(params, bn, zdim, image_dim, hidden_dim)

    out = jax.block_until_ready(generator_forward(x, prep))
    assert out.shape == (batch, image_dim), out.shape

    # Tight check against a reference with matched bf16-matmul numerics.
    ref_bf16 = mirror_reference(x, params, bn)
    err_bf16 = float(jnp.max(jnp.abs(out - ref_bf16)))
    assert err_bf16 < 1e-2, err_bf16

    # Looser semantic check against full-f32 PyTorch-style math.
    ref_f32 = reference_forward(x, params, bn)
    err_f32 = float(jnp.max(jnp.abs(out - ref_f32)))
    assert err_f32 < 5e-2, err_f32

    print("KERNEL_OK")
</pallas_src>

<mosaic_0001>
module attributes {stable_mosaic.version = 11 : i64} {
  func.func @_generator_kernel(%arg0: memref<8x10xf32, #tpu.memory_space<vmem>>, %arg1: memref<10x128xbf16, #tpu.memory_space<vmem>>, %arg2: memref<128x256xbf16, #tpu.memory_space<vmem>>, %arg3: memref<256x512xbf16, #tpu.memory_space<vmem>>, %arg4: memref<1x1920xf32, #tpu.memory_space<vmem>>, %arg5: memref<1x1920xf32, #tpu.memory_space<vmem>>, %arg6: memref<1x896xf32, #tpu.memory_space<vmem>>, %arg7: memref<512x1024xbf16, #tpu.memory_space<any>>, %arg8: memref<1024x896xbf16, #tpu.memory_space<any>>, %arg9: memref<8x896xf32, #tpu.memory_space<vmem>>, %arg10: memref<512x1024xbf16, #tpu.memory_space<vmem>>, %arg11: memref<1024x896xbf16, #tpu.memory_space<vmem>>, %arg12: memref<!tpu.dma_semaphore, #tpu.memory_space<semaphore_mem>>, %arg13: memref<!tpu.dma_semaphore, #tpu.memory_space<semaphore_mem>>) attributes {dimension_semantics = [], scalar_prefetch = 0 : i64, scratch_operands = 4 : i64, tpu.core_type = #tpu.core_type<tc>} {
    tpu.enqueue_dma source(%arg7 : memref<512x1024xbf16, #tpu.memory_space<any>>) target(%arg10 : memref<512x1024xbf16, #tpu.memory_space<vmem>>) target_semaphore(%arg12 : memref<!tpu.dma_semaphore, #tpu.memory_space<semaphore_mem>>)
    tpu.enqueue_dma source(%arg8 : memref<1024x896xbf16, #tpu.memory_space<any>>) target(%arg11 : memref<1024x896xbf16, #tpu.memory_space<vmem>>) target_semaphore(%arg13 : memref<!tpu.dma_semaphore, #tpu.memory_space<semaphore_mem>>)
    %c0 = arith.constant 0 : index
    %c0_0 = arith.constant 0 : index
    %0 = vector.load %arg4[%c0, %c0_0] : memref<1x1920xf32, #tpu.memory_space<vmem>>, vector<1x1920xf32>
    %c0_1 = arith.constant 0 : index
    %c0_2 = arith.constant 0 : index
    %1 = vector.load %arg5[%c0_1, %c0_2] : memref<1x1920xf32, #tpu.memory_space<vmem>>, vector<1x1920xf32>
    %c0_3 = arith.constant 0 : index
    %c0_4 = arith.constant 0 : index
    %2 = vector.load %arg0[%c0_3, %c0_4] : memref<8x10xf32, #tpu.memory_space<vmem>>, vector<8x10xf32>
    %c0_5 = arith.constant 0 : index
    %c0_6 = arith.constant 0 : index
    %3 = vector.load %arg1[%c0_5, %c0_6] : memref<10x128xbf16, #tpu.memory_space<vmem>>, vector<10x128xbf16>
    %4 = arith.truncf %2 : vector<8x10xf32> to vector<8x10xbf16>
    %cst = arith.constant dense<0.000000e+00> : vector<8x128xf32>
    %5 = tpu.matmul %4, %3, %cst {dimension_numbers = #tpu.dot_dimension_numbers<[1], [0], [0], [1], [0, 0, 1, 1], [], []>} : vector<8x10xbf16>, vector<10x128xbf16>, vector<8x128xf32> -> vector<8x128xf32>
    %cst_7 = arith.constant dense<0.000000e+00> : vector<128xf32>
    %6 = vector.multi_reduction <add>, %5, %cst_7 [0] : vector<8x128xf32> to vector<128xf32>
    %7 = vector.shape_cast %6 : vector<128xf32> to vector<1x128xf32>
    %cst_8 = arith.constant 8.000000e+00 : f32
    %8 = vector.broadcast %cst_8 : f32 to vector<1x128xf32>
    %9 = arith.divf %7, %8 : vector<1x128xf32>
    %10 = vector.broadcast %9 : vector<1x128xf32> to vector<8x128xf32>
    %11 = arith.subf %5, %10 : vector<8x128xf32>
    %12 = vector.broadcast %9 : vector<1x128xf32> to vector<8x128xf32>
    %13 = arith.subf %5, %12 : vector<8x128xf32>
    %14 = arith.mulf %11, %13 : vector<8x128xf32>
    %cst_9 = arith.constant dense<0.000000e+00> : vector<128xf32>
    %15 = vector.multi_reduction <add>, %14, %cst_9 [0] : vector<8x128xf32> to vector<128xf32>
    %16 = vector.shape_cast %15 : vector<128xf32> to vector<1x128xf32>
    %cst_10 = arith.constant 8.000000e+00 : f32
    %17 = vector.broadcast %cst_10 : f32 to vector<1x128xf32>
    %18 = arith.divf %16, %17 : vector<1x128xf32>
    %19 = vector.extract_strided_slice %0 {offsets = [0, 0], sizes = [1, 128], strides = [1, 1]} : vector<1x1920xf32> to vector<1x128xf32>
    %cst_11 = arith.constant 9.99999974E-6 : f32
    %20 = vector.broadcast %cst_11 : f32 to vector<1x128xf32>
    %21 = arith.addf %18, %20 : vector<1x128xf32>
    %22 = math.rsqrt %21 : vector<1x128xf32>
    %23 = arith.mulf %19, %22 : vector<1x128xf32>
    %24 = vector.extract_strided_slice %1 {offsets = [0, 0], sizes = [1, 128], strides = [1, 1]} : vector<1x1920xf32> to vector<1x128xf32>
    %25 = arith.mulf %9, %23 : vector<1x128xf32>
    %26 = arith.subf %24, %25 : vector<1x128xf32>
    %27 = vector.broadcast %23 : vector<1x128xf32> to vector<8x128xf32>
    %28 = arith.mulf %5, %27 : vector<8x128xf32>
    %29 = vector.broadcast %26 : vector<1x128xf32> to vector<8x128xf32>
    %30 = arith.addf %28, %29 : vector<8x128xf32>
    %cst_12 = arith.constant 0.000000e+00 : f32
    %31 = vector.broadcast %cst_12 : f32 to vector<8x128xf32>
    %32 = arith.maximumf %30, %31 : vector<8x128xf32>
    %c0_13 = arith.constant 0 : index
    %c0_14 = arith.constant 0 : index
    %33 = vector.load %arg2[%c0_13, %c0_14] : memref<128x256xbf16, #tpu.memory_space<vmem>>, vector<128x256xbf16>
    %34 = arith.truncf %32 : vector<8x128xf32> to vector<8x128xbf16>
    %cst_15 = arith.constant dense<0.000000e+00> : vector<8x256xf32>
    %35 = tpu.matmul %34, %33, %cst_15 {dimension_numbers = #tpu.dot_dimension_numbers<[1], [0], [0], [1], [0, 0, 1, 1], [], []>} : vector<8x128xbf16>, vector<128x256xbf16>, vector<8x256xf32> -> vector<8x256xf32>
    %cst_16 = arith.constant dense<0.000000e+00> : vector<256xf32>
    %36 = vector.multi_reduction <add>, %35, %cst_16 [0] : vector<8x256xf32> to vector<256xf32>
    %37 = vector.shape_cast %36 : vector<256xf32> to vector<1x256xf32>
    %cst_17 = arith.constant 8.000000e+00 : f32
    %38 = vector.broadcast %cst_17 : f32 to vector<1x256xf32>
    %39 = arith.divf %37, %38 : vector<1x256xf32>
    %40 = vector.broadcast %39 : vector<1x256xf32> to vector<8x256xf32>
    %41 = arith.subf %35, %40 : vector<8x256xf32>
    %42 = vector.broadcast %39 : vector<1x256xf32> to vector<8x256xf32>
    %43 = arith.subf %35, %42 : vector<8x256xf32>
    %44 = arith.mulf %41, %43 : vector<8x256xf32>
    %cst_18 = arith.constant dense<0.000000e+00> : vector<256xf32>
    %45 = vector.multi_reduction <add>, %44, %cst_18 [0] : vector<8x256xf32> to vector<256xf32>
    %46 = vector.shape_cast %45 : vector<256xf32> to vector<1x256xf32>
    %cst_19 = arith.constant 8.000000e+00 : f32
    %47 = vector.broadcast %cst_19 : f32 to vector<1x256xf32>
    %48 = arith.divf %46, %47 : vector<1x256xf32>
    %49 = vector.extract_strided_slice %0 {offsets = [0, 128], sizes = [1, 256], strides = [1, 1]} : vector<1x1920xf32> to vector<1x256xf32>
    %cst_20 = arith.constant 9.99999974E-6 : f32
    %50 = vector.broadcast %cst_20 : f32 to vector<1x256xf32>
    %51 = arith.addf %48, %50 : vector<1x256xf32>
    %52 = math.rsqrt %51 : vector<1x256xf32>
    %53 = arith.mulf %49, %52 : vector<1x256xf32>
    %54 = vector.extract_strided_slice %1 {offsets = [0, 128], sizes = [1, 256], strides = [1, 1]} : vector<1x1920xf32> to vector<1x256xf32>
    %55 = arith.mulf %39, %53 : vector<1x256xf32>
    %56 = arith.subf %54, %55 : vector<1x256xf32>
    %57 = vector.broadcast %53 : vector<1x256xf32> to vector<8x256xf32>
    %58 = arith.mulf %35, %57 : vector<8x256xf32>
    %59 = vector.broadcast %56 : vector<1x256xf32> to vector<8x256xf32>
    %60 = arith.addf %58, %59 : vector<8x256xf32>
    %cst_21 = arith.constant 0.000000e+00 : f32
    %61 = vector.broadcast %cst_21 : f32 to vector<8x256xf32>
    %62 = arith.maximumf %60, %61 : vector<8x256xf32>
    %c0_22 = arith.constant 0 : index
    %c0_23 = arith.constant 0 : index
    %63 = vector.load %arg3[%c0_22, %c0_23] : memref<256x512xbf16, #tpu.memory_space<vmem>>, vector<256x512xbf16>
    %64 = arith.truncf %62 : vector<8x256xf32> to vector<8x256xbf16>
    %cst_24 = arith.constant dense<0.000000e+00> : vector<8x512xf32>
    %65 = tpu.matmul %64, %63, %cst_24 {dimension_numbers = #tpu.dot_dimension_numbers<[1], [0], [0], [1], [0, 0, 1, 1], [], []>} : vector<8x256xbf16>, vector<256x512xbf16>, vector<8x512xf32> -> vector<8x512xf32>
    %cst_25 = arith.constant dense<0.000000e+00> : vector<512xf32>
    %66 = vector.multi_reduction <add>, %65, %cst_25 [0] : vector<8x512xf32> to vector<512xf32>
    %67 = vector.shape_cast %66 : vector<512xf32> to vector<1x512xf32>
    %cst_26 = arith.constant 8.000000e+00 : f32
    %68 = vector.broadcast %cst_26 : f32 to vector<1x512xf32>
    %69 = arith.divf %67, %68 : vector<1x512xf32>
    %70 = vector.broadcast %69 : vector<1x512xf32> to vector<8x512xf32>
    %71 = arith.subf %65, %70 : vector<8x512xf32>
    %72 = vector.broadcast %69 : vector<1x512xf32> to vector<8x512xf32>
    %73 = arith.subf %65, %72 : vector<8x512xf32>
    %74 = arith.mulf %71, %73 : vector<8x512xf32>
    %cst_27 = arith.constant dense<0.000000e+00> : vector<512xf32>
    %75 = vector.multi_reduction <add>, %74, %cst_27 [0] : vector<8x512xf32> to vector<512xf32>
    %76 = vector.shape_cast %75 : vector<512xf32> to vector<1x512xf32>
    %cst_28 = arith.constant 8.000000e+00 : f32
    %77 = vector.broadcast %cst_28 : f32 to vector<1x512xf32>
    %78 = arith.divf %76, %77 : vector<1x512xf32>
    %79 = vector.extract_strided_slice %0 {offsets = [0, 384], sizes = [1, 512], strides = [1, 1]} : vector<1x1920xf32> to vector<1x512xf32>
    %cst_29 = arith.constant 9.99999974E-6 : f32
    %80 = vector.broadcast %cst_29 : f32 to vector<1x512xf32>
    %81 = arith.addf %78, %80 : vector<1x512xf32>
    %82 = math.rsqrt %81 : vector<1x512xf32>
    %83 = arith.mulf %79, %82 : vector<1x512xf32>
    %84 = vector.extract_strided_slice %1 {offsets = [0, 384], sizes = [1, 512], strides = [1, 1]} : vector<1x1920xf32> to vector<1x512xf32>
    %85 = arith.mulf %69, %83 : vector<1x512xf32>
    %86 = arith.subf %84, %85 : vector<1x512xf32>
    %87 = vector.broadcast %83 : vector<1x512xf32> to vector<8x512xf32>
    %88 = arith.mulf %65, %87 : vector<8x512xf32>
    %89 = vector.broadcast %86 : vector<1x512xf32> to vector<8x512xf32>
    %90 = arith.addf %88, %89 : vector<8x512xf32>
    %cst_30 = arith.constant 0.000000e+00 : f32
    %91 = vector.broadcast %cst_30 : f32 to vector<8x512xf32>
    %92 = arith.maximumf %90, %91 : vector<8x512xf32>
    tpu.wait_dma2 semaphore(%arg12 : memref<!tpu.dma_semaphore, #tpu.memory_space<semaphore_mem>>) src(%arg7 : memref<512x1024xbf16, #tpu.memory_space<any>>) dst(%arg10 : memref<512x1024xbf16, #tpu.memory_space<vmem>>)
    %c0_31 = arith.constant 0 : index
    %c0_32 = arith.constant 0 : index
    %93 = vector.load %arg10[%c0_31, %c0_32] : memref<512x1024xbf16, #tpu.memory_space<vmem>>, vector<512x1024xbf16>
    %94 = arith.truncf %92 : vector<8x512xf32> to vector<8x512xbf16>
    %cst_33 = arith.constant dense<0.000000e+00> : vector<8x1024xf32>
    %95 = tpu.matmul %94, %93, %cst_33 {dimension_numbers = #tpu.dot_dimension_numbers<[1], [0], [0], [1], [0, 0, 1, 1], [], []>} : vector<8x512xbf16>, vector<512x1024xbf16>, vector<8x1024xf32> -> vector<8x1024xf32>
    %cst_34 = arith.constant dense<0.000000e+00> : vector<1024xf32>
    %96 = vector.multi_reduction <add>, %95, %cst_34 [0] : vector<8x1024xf32> to vector<1024xf32>
    %97 = vector.shape_cast %96 : vector<1024xf32> to vector<1x1024xf32>
    %cst_35 = arith.constant 8.000000e+00 : f32
    %98 = vector.broadcast %cst_35 : f32 to vector<1x1024xf32>
    %99 = arith.divf %97, %98 : vector<1x1024xf32>
    %100 = vector.broadcast %99 : vector<1x1024xf32> to vector<8x1024xf32>
    %101 = arith.subf %95, %100 : vector<8x1024xf32>
    %102 = vector.broadcast %99 : vector<1x1024xf32> to vector<8x1024xf32>
    %103 = arith.subf %95, %102 : vector<8x1024xf32>
    %104 = arith.mulf %101, %103 : vector<8x1024xf32>
    %cst_36 = arith.constant dense<0.000000e+00> : vector<1024xf32>
    %105 = vector.multi_reduction <add>, %104, %cst_36 [0] : vector<8x1024xf32> to vector<1024xf32>
    %106 = vector.shape_cast %105 : vector<1024xf32> to vector<1x1024xf32>
    %cst_37 = arith.constant 8.000000e+00 : f32
    %107 = vector.broadcast %cst_37 : f32 to vector<1x1024xf32>
    %108 = arith.divf %106, %107 : vector<1x1024xf32>
    %109 = vector.extract_strided_slice %0 {offsets = [0, 896], sizes = [1, 1024], strides = [1, 1]} : vector<1x1920xf32> to vector<1x1024xf32>
    %cst_38 = arith.constant 9.99999974E-6 : f32
    %110 = vector.broadcast %cst_38 : f32 to vector<1x1024xf32>
    %111 = arith.addf %108, %110 : vector<1x1024xf32>
    %112 = math.rsqrt %111 : vector<1x1024xf32>
    %113 = arith.mulf %109, %112 : vector<1x1024xf32>
    %114 = vector.extract_strided_slice %1 {offsets = [0, 896], sizes = [1, 1024], strides = [1, 1]} : vector<1x1920xf32> to vector<1x1024xf32>
    %115 = arith.mulf %99, %113 : vector<1x1024xf32>
    %116 = arith.subf %114, %115 : vector<1x1024xf32>
    %117 = vector.broadcast %113 : vector<1x1024xf32> to vector<8x1024xf32>
    %118 = arith.mulf %95, %117 : vector<8x1024xf32>
    %119 = vector.broadcast %116 : vector<1x1024xf32> to vector<8x1024xf32>
    %120 = arith.addf %118, %119 : vector<8x1024xf32>
    %cst_39 = arith.constant 0.000000e+00 : f32
    %121 = vector.broadcast %cst_39 : f32 to vector<8x1024xf32>
    %122 = arith.maximumf %120, %121 : vector<8x1024xf32>
    tpu.wait_dma2 semaphore(%arg13 : memref<!tpu.dma_semaphore, #tpu.memory_space<semaphore_mem>>) src(%arg8 : memref<1024x896xbf16, #tpu.memory_space<any>>) dst(%arg11 : memref<1024x896xbf16, #tpu.memory_space<vmem>>)
    %123 = arith.truncf %122 : vector<8x1024xf32> to vector<8x1024xbf16>
    %c0_40 = arith.constant 0 : index
    %c0_41 = arith.constant 0 : index
    %124 = vector.load %arg11[%c0_40, %c0_41] : memref<1024x896xbf16, #tpu.memory_space<vmem>>, vector<1024x896xbf16>
    %cst_42 = arith.constant dense<0.000000e+00> : vector<8x896xf32>
    %125 = tpu.matmul %123, %124, %cst_42 {dimension_numbers = #tpu.dot_dimension_numbers<[1], [0], [0], [1], [0, 0, 1, 1], [], []>} : vector<8x1024xbf16>, vector<1024x896xbf16>, vector<8x896xf32> -> vector<8x896xf32>
    %c0_43 = arith.constant 0 : index
    %c0_44 = arith.constant 0 : index
    %126 = vector.load %arg6[%c0_43, %c0_44] : memref<1x896xf32, #tpu.memory_space<vmem>>, vector<1x896xf32>
    %127 = vector.broadcast %126 : vector<1x896xf32> to vector<8x896xf32>
    %128 = arith.addf %125, %127 : vector<8x896xf32>
    %129 = arith.negf %128 : vector<8x896xf32>
    %130 = math.exp %129 : vector<8x896xf32>
    %cst_45 = arith.constant 1.000000e+00 : f32
    %131 = vector.broadcast %cst_45 : f32 to vector<8x896xf32>
    %132 = arith.addf %131, %130 : vector<8x896xf32>
    %133 = arith.divf %131, %132 : vector<8x896xf32>
    %c0_46 = arith.constant 0 : index
    %c0_47 = arith.constant 0 : index
    %134 = vector.load %arg9[%c0_46, %c0_47] : memref<8x896xf32, #tpu.memory_space<vmem>>, vector<8x896xf32>
    tpu.vector_store %arg9[%c0_46, %c0_47], %133 {strides = array<i32>} : memref<8x896xf32, #tpu.memory_space<vmem>>, vector<8x896xf32>,
    return
  }
}

</mosaic_0001>

<llo_original>
// kernel: tpu_custom_call.1
$region0: #{tpu_custom_call.1}
  #allocation0 [shape = 'u32[]', space=smem, size = 0x4, offset = 0x4, fixed_abs, tag = 'smem constant byte address 0x4 - core index']
  #allocation1 [shape = 'u32[72,128]{1,0:T(1,128)}', space=vmem, size = 0x9000, scoped, tag = 'internal scratch']
  #allocation2 [shape = 'bf16[512,1024]{1,0:T(8,128)(2,1)}', space=vmem, size = 0x100000, scoped, tag = 'scratch operand']
  #allocation3 [shape = 'bf16[1024,896]{1,0:T(8,128)(2,1)}', space=vmem, size = 0x1c0000, scoped, tag = 'scratch operand']
  #allocation4 [shape = 's32[1]{0}', space=sflag, size = 0x4, scoped, tag = 'scratch operand']
  #allocation5 [shape = 's32[1]{0}', space=sflag, size = 0x4, scoped, tag = 'scratch operand']
  #allocation19 [shape = 's32[]', space=sflag, size = 0x4, offset = 0, fixed_abs, tag = 'sflag constant byte address 0x0 - dummy sync flag']
  #allocation20 [shape = 's32[]', space=sflag, size = 0x4, offset = 0, fixed_abs, tag = 'sflag constant byte address 0x0 - dummy sync flag']
  #allocation21 [shape = 'u32[]', space=smem, size = 0x4, offset = 0x44, fixed_abs, tag = 'smem constant byte address 0x44 - assertion arg 0']
  #allocation22 [shape = 'u32[]', space=smem, size = 0x4, offset = 0x48, fixed_abs, tag = 'smem constant byte address 0x48 - assertion arg 1']
  #allocation23 [shape = 's32[]', space=sflag, size = 0x4, offset = 0, fixed_abs, tag = 'sflag constant byte address 0x0 - dummy sync flag']
  #allocation24 [shape = 's32[]', space=sflag, size = 0x4, offset = 0, fixed_abs, tag = 'sflag constant byte address 0x0 - dummy sync flag']
  %s0 = inlined_call_operand.hbm [shape: f32[8,10], index: 0, kind: input, shape index: {}]
  %s1 = inlined_call_operand.hbm [shape: bf16[10,128], index: 1, kind: input, shape index: {}]
  %s2 = inlined_call_operand.hbm [shape: bf16[128,256], index: 2, kind: input, shape index: {}]
  %s3 = inlined_call_operand.hbm [shape: bf16[256,512], index: 3, kind: input, shape index: {}]
  %s4 = inlined_call_operand.hbm [shape: f32[1,1920], index: 4, kind: input, shape index: {}]
  %s5 = inlined_call_operand.hbm [shape: f32[1,1920], index: 5, kind: input, shape index: {}]
  %s6 = inlined_call_operand.hbm [shape: f32[1,896], index: 6, kind: input, shape index: {}]
  %s7 = inlined_call_operand.hbm [shape: bf16[512,1024], index: 7, kind: input, shape index: {}]
  %s8 = inlined_call_operand.hbm [shape: bf16[1024,896], index: 8, kind: input, shape index: {}]
  %s9 = inlined_call_operand.hbm [shape: f32[8,896], index: 9, kind: output, shape index: {}]
  %s10 = sld [smem:[#allocation0]]
  $region74: #{tpu_custom_call.1} parent=0
    _
  %s12 = ssub.s32 1, %s10
  %s13 = scalar_select 0, %s12, %s10
  $region1: #{tpu_custom_call.1} parent=0
    #allocation6 [shape = 'u8[4096]{0}', space=vmem, size = 0x1000, scoped, tag = 'input window, operand 0, single buffered']
    #allocation7 [shape = 's32[1]{0}', space=sflag, size = 0x4, scoped, tag = 'scoped memory for tpu_custom_call.1']
    #allocation8 [shape = 's32[1]{0}', space=sflag, size = 0x4, scoped, tag = 'scoped memory for tpu_custom_call.1']
    #allocation9 [shape = 'u8[4096]{0}', space=vmem, size = 0x1000, scoped, tag = 'input window, operand 1, single buffered']
    #allocation10 [shape = 's32[1]{0}', space=sflag, size = 0x4, scoped, tag = 'scoped memory for tpu_custom_call.1']
    #allocation11 [shape = 'u8[65536]{0}', space=vmem, size = 0x10000, scoped, tag = 'input window, operand 2, single buffered']
    #allocation12 [shape = 'u8[262144]{0}', space=vmem, size = 0x40000, scoped, tag = 'input window, operand 3, single buffered']
    #allocation13 [shape = 's32[1]{0}', space=sflag, size = 0x4, scoped, tag = 'scoped memory for tpu_custom_call.1']
    #allocation14 [shape = 'u8[7680]{0}', space=vmem, size = 0x2000, scoped, tag = 'input window, operand 4, single buffered']
    #allocation15 [shape = 'u8[7680]{0}', space=vmem, size = 0x2000, scoped, tag = 'input window, operand 5, single buffered']
    #allocation16 [shape = 's32[1]{0}', space=sflag, size = 0x4, scoped, tag = 'scoped memory for tpu_custom_call.1']
    #allocation17 [shape = 'u8[3584]{0}', space=vmem, size = 0x1000, scoped, tag = 'input window, operand 6, single buffered']
    #allocation18 [shape = 'u8[28672]{0}', space=vmem, size = 0x7000, scoped, tag = 'output window, operand 0, single buffered']
    %14 = vsyncpa [#allocation7], 0
    %15 = vsyncpa [#allocation10], 0
    %16 = vsyncpa [#allocation13], 0
    %17 = vsyncpa [#allocation16], 0
    %18 = vsyncpa [#allocation8], 0
    // Predicated region
    $region2: #{tpu_custom_call.1} parent=1 // pred_check
      _
    $region3: #{tpu_custom_call.1} parent=1 // pred_check_branch
      %20 = sbr.rel (0) target = $region5
    $region4: #{tpu_custom_call.1} parent=1 // pred_region
      %22 = vsyncadd [#allocation7], 0
      %s24 = sshll.u32 %s0, 4
      %s25 = int_to_ptr.hbm [resolvable:$true] %s24
      %s26 = sshll.u32 [#allocation6], 4
      %s27 = int_to_ptr.vmem [resolvable:$true] %s26
      %29 = dma.hbm_to_vmem [thread:$0]  %s25, 128, %s27, [#allocation7]
    $region5: #{tpu_custom_call.1} parent=1 // pred_fallthru
      _
    // Predicated region
    $region6: #{tpu_custom_call.1} parent=1 // pred_check
      _
    $region7: #{tpu_custom_call.1} parent=1 // pred_check_branch
      %31 = sbr.rel (0) target = $region9
    $region8: #{tpu_custom_call.1} parent=1 // pred_region
      %33 = vsyncadd [#allocation10], 0
      %s34 = sshll.u32 %s1, 4
      %s35 = int_to_ptr.hbm [resolvable:$true] %s34
      %s36 = sshll.u32 [#allocation9], 4
      %s37 = int_to_ptr.vmem [resolvable:$true] %s36
      %42 = dma.hbm_to_vmem [thread:$0]  %s35, 128, %s37, [#allocation10], 64, 64, 4
    $region9: #{tpu_custom_call.1} parent=1 // pred_fallthru
      _
    // Predicated region
    $region10: #{tpu_custom_call.1} parent=1 // pred_check
      _
    $region11: #{tpu_custom_call.1} parent=1 // pred_check_branch
      %44 = sbr.rel (0) target = $region13
    $region12: #{tpu_custom_call.1} parent=1 // pred_region
      %46 = vsyncadd [#allocation10], 0
      %s47 = sshll.u32 %s2, 4
      %s48 = int_to_ptr.hbm [resolvable:$true] %s47
      %s49 = sshll.u32 [#allocation11], 4
      %s50 = int_to_ptr.vmem [resolvable:$true] %s49
      %55 = dma.hbm_to_vmem [thread:$0]  %s48, 2048, %s50, [#allocation10], 128, 128, 8
    $region13: #{tpu_custom_call.1} parent=1 // pred_fallthru
      _
    // Predicated region
    $region14: #{tpu_custom_call.1} parent=1 // pred_check
      _
    $region15: #{tpu_custom_call.1} parent=1 // pred_check_branch
      %57 = sbr.rel (0) target = $region17
    $region16: #{tpu_custom_call.1} parent=1 // pred_region
      %59 = vsyncadd [#allocation13], 0
      %s60 = sshll.u32 %s3, 4
      %s61 = int_to_ptr.hbm [resolvable:$true] %s60
      %s62 = sshll.u32 [#allocation12], 4
      %s63 = int_to_ptr.vmem [resolvable:$true] %s62
      %68 = dma.hbm_to_vmem [thread:$0]  %s61, 8192, %s63, [#allocation13], 256, 256, 16
    $region17: #{tpu_custom_call.1} parent=1 // pred_fallthru
      _
    // Predicated region
    $region18: #{tpu_custom_call.1} parent=1 // pred_check
      _
    $region19: #{tpu_custom_call.1} parent=1 // pred_check_branch
      %70 = sbr.rel (0) target = $region21
    $region20: #{tpu_custom_call.1} parent=1 // pred_region
      %72 = vsyncadd [#allocation13], 0
      %s74 = sshll.u32 %s4, 4
      %s75 = int_to_ptr.hbm [resolvable:$true] %s74
      %s76 = sshll.u32 [#allocation14], 4
      %s77 = int_to_ptr.vmem [resolvable:$true] %s76
      %79 = dma.hbm_to_vmem [thread:$0]  %s75, 240, %s77, [#allocation13]
    $region21: #{tpu_custom_call.1} parent=1 // pred_fallthru
      _
    // Predicated region
    $region22: #{tpu_custom_call.1} parent=1 // pred_check
      _
    $region23: #{tpu_custom_call.1} parent=1 // pred_check_branch
      %81 = sbr.rel (0) target = $region25
    $region24: #{tpu_custom_call.1} parent=1 // pred_region
      %83 = vsyncadd [#allocation16], 0
      %s85 = sshll.u32 %s5, 4
      %s86 = int_to_ptr.hbm [resolvable:$true] %s85
      %s87 = sshll.u32 [#allocation15], 4
      %s88 = int_to_ptr.vmem [resolvable:$true] %s87
      %90 = dma.hbm_to_vmem [thread:$0]  %s86, 240, %s88, [#allocation16]
    $region25: #{tpu_custom_call.1} parent=1 // pred_fallthru
      _
    // Predicated region
    $region26: #{tpu_custom_call.1} parent=1 // pred_check
      _
    $region27: #{tpu_custom_call.1} parent=1 // pred_check_branch
      %92 = sbr.rel (0) target = $region29
    $region28: #{tpu_custom_call.1} parent=1 // pred_region
      %94 = vsyncadd [#allocation16], 0
      %s96 = sshll.u32 %s6, 4
      %s97 = int_to_ptr.hbm [resolvable:$true] %s96
      %s98 = sshll.u32 [#allocation17], 4
      %s99 = int_to_ptr.vmem [resolvable:$true] %s98
      %101 = dma.hbm_to_vmem [thread:$0]  %s97, 112, %s99, [#allocation16]
    $region29: #{tpu_custom_call.1} parent=1 // pred_fallthru
      _
    // Predicated region
    $region30: #{tpu_custom_call.1} parent=1 // pred_check
      _
    $region31: #{tpu_custom_call.1} parent=1 // pred_check_branch
      %103 = sbr.rel (0) target = $region33
    $region32: #{tpu_custom_call.1} parent=1 // pred_region
      %105 = dma.done [#allocation7], 128
    $region33: #{tpu_custom_call.1} parent=1 // pred_fallthru
      _
    // Predicated region
    $region34: #{tpu_custom_call.1} parent=1 // pred_check
      _
    $region35: #{tpu_custom_call.1} parent=1 // pred_check_branch
      %107 = sbr.rel (0) target = $region37
    $region36: #{tpu_custom_call.1} parent=1 // pred_region
      %109 = dma.done [#allocation10], 128
    $region37: #{tpu_custom_call.1} parent=1 // pred_fallthru
      _
    // Predicated region
    $region38: #{tpu_custom_call.1} parent=1 // pred_check
      _
    $region39: #{tpu_custom_call.1} parent=1 // pred_check_branch
      %111 = sbr.rel (0) target = $region41
    $region40: #{tpu_custom_call.1} parent=1 // pred_region
      %113 = dma.done [#allocation10], 2048
    $region41: #{tpu_custom_call.1} parent=1 // pred_fallthru
      _
    // Predicated region
    $region42: #{tpu_custom_call.1} parent=1 // pred_check
      _
    $region43: #{tpu_custom_call.1} parent=1 // pred_check_branch
      %115 = sbr.rel (0) target = $region45
    $region44: #{tpu_custom_call.1} parent=1 // pred_region
      %117 = dma.done [#allocation13], 8192
    $region45: #{tpu_custom_call.1} parent=1 // pred_fallthru
      _
    // Predicated region
    $region46: #{tpu_custom_call.1} parent=1 // pred_check
      _
    $region47: #{tpu_custom_call.1} parent=1 // pred_check_branch
      %119 = sbr.rel (0) target = $region49
    $region48: #{tpu_custom_call.1} parent=1 // pred_region
      %121 = dma.done [#allocation13], 240
    $region49: #{tpu_custom_call.1} parent=1 // pred_fallthru
      _
    // Predicated region
    $region50: #{tpu_custom_call.1} parent=1 // pred_check
      _
    $region51: #{tpu_custom_call.1} parent=1 // pred_check_branch
      %123 = sbr.rel (0) target = $region53
    $region52: #{tpu_custom_call.1} parent=1 // pred_region
      %125 = dma.done [#allocation16], 240
    $region53: #{tpu_custom_call.1} parent=1 // pred_fallthru
      _
    // Predicated region
    $region54: #{tpu_custom_call.1} parent=1 // pred_check
      _
    $region55: #{tpu_custom_call.1} parent=1 // pred_check_branch
      %127 = sbr.rel (0) target = $region57
    $region56: #{tpu_custom_call.1} parent=1 // pred_region
      %129 = dma.done [#allocation16], 112
    $region57: #{tpu_custom_call.1} parent=1 // pred_fallthru
      _
    // Predicated region
    $region58: #{tpu_custom_call.1} parent=1 // pred_check
      _
    $region59: #{tpu_custom_call.1} parent=1 // pred_check_branch
      %132 = sbr.rel target = $region61
    $region60: #{tpu_custom_call.1} parent=1 // pred_region
      %133 = sst [smem:[#allocation21]] [#allocation20]
      %134 = sst [smem:[#allocation22]] [#allocation19]
    $region61: #{tpu_custom_call.1} parent=1 // pred_fallthru
      _
    %136 = shalt.err (0)
    %s138 = sshll.u32 %s7, 4
    %s139 = int_to_ptr.hbm [resolvable:$true] %s138
    %s140 = sshll.u32 [#allocation2], 4
    %s141 = int_to_ptr.vmem [resolvable:$true] %s140
    %143 = dma.hbm_to_vmem [thread:$0]  %s139, 32768, %s141, [#allocation4]
    // Predicated region
    $region62: #{tpu_custom_call.1} parent=1 // pred_check
      _
    $region63: #{tpu_custom_call.1} parent=1 // pred_check_branch
      %145 = sbr.rel target = $region65
    $region64: #{tpu_custom_call.1} parent=1 // pred_region
      %146 = sst [smem:[#allocation21]] [#allocation24]
      %147 = sst [smem:[#allocation22]] [#allocation23]
    $region65: #{tpu_custom_call.1} parent=1 // pred_fallthru
      _
    %149 = shalt.err (0)
    %s151 = sshll.u32 %s8, 4
    %s152 = int_to_ptr.hbm [resolvable:$true] %s151
    %s153 = sshll.u32 [#allocation3], 4
    %s154 = int_to_ptr.vmem [resolvable:$true] %s153
    %156 = dma.hbm_to_vmem [thread:$0]  %s152, 57344, %s154, [#allocation5]
    %v157 = vld [vmem:[#allocation14] sm:$0xff]
    %v158 = vld [vmem:[#allocation14 + $0x8] sm:$0xff]
    %v159 = vld [vmem:[#allocation15] sm:$0xff]
    %v160 = vld [vmem:[#allocation15 + $0x8] sm:$0xff]
    %v161 = vld [vmem:[#allocation6] sm:$0xff]
    %v162 = vld [vmem:[#allocation9] sm:$0xf]
    %v163 = vld [vmem:[#allocation9 + $0x4] sm:$0x1]
    %v164 = vpack.c.bf16 %v161, %v161
    %v167 = vunpack.c.l.b16 %v162
    %v168 = vunpack.c.l.b16 %v163
    %v169 = vpack.c.b16 %v168, %v167
    %vm170 = vcmask 80896
    %v172 = vsel %vm170, %v164, 0
    %vm174 = vcmask 1044480
    %v176 = vsel %vm174, %v169, 0
    %178 = vmatpush.bf16.msra.mxu0 0
    %179 = vmatpush.bf16.msra.mxu0 0
    %180 = vmatpush.bf16.msra.mxu0 0
    %181 = vmatpush.bf16.msra.mxu0 0
    %182 = vmatpush.bf16.msra.mxu0 0
    %183 = vmatpush.bf16.msra.mxu0 0
    %184 = vmatpush.bf16.msra.mxu0 0
    %185 = vmatpush.bf16.msra.mxu0 %v176
    %186 = vmatmul.bf16.gmra.mxu0 %v172
    %v187 = vpop.f32.mrf.mxu0
    %v188 = vadd.f32 0.0, %v187
    %v189 = vpop.f32.mrf.mxu0
    %190 = vdwg.mxu0
    %v191 = vrot.slane %v188, 4
    %v192 = vadd.f32 %v188, %v191
    %v193 = vrot.slane %v192, 2
    %v194 = vadd.f32 %v192, %v193
    %v195 = vrot.slane %v194, 1
    %v196 = vadd.f32 %v194, %v195
    %v197 = vrcp.pop 8.0
    %v198 = vmul.f32 8.0, %v197
    %v199 = vsub.f32 1.0, %v198
    %v200 = vmul.f32 %v197, %v199
    %v201 = vadd.f32 %v197, %v200
    %vm202 = vweird.f32 %v197
    %v203 = vsel %vm202, %v197, %v201
    %v204 = vmul.f32 %v196, %v203
    %v205 = vsub.f32 %v188, %v204
    %v206 = vmul.f32 %v205, %v205
    %v207 = vrot.slane %v206, 4
    %v208 = vadd.f32 %v206, %v207
    %v209 = vrot.slane %v208, 2
    %v210 = vadd.f32 %v208, %v209
    %v211 = vrot.slane %v210, 1
    %v212 = vadd.f32 %v210, %v211
    %v213 = vmul.f32 %v212, %v203
    %v214 = vadd.f32 %v213, 1e-05
    %v215 = vrsqrt.pop %v214
    %v216 = vmul.f32 %v215, %v214
    %v217 = vmul.f32 %v216, %v215
    %v218 = vmul.f32 0.5, %v217
    %v219 = vsub.f32 1.5, %v218
    %v220 = vmul.f32 %v215, %v219
    %vm221 = vweird.f32 %v214
    %vm222 = vweird.f32 %v215
    %vm223 = vmor %vm221, %vm222
    %v224 = vsel %vm223, %v215, %v220
    %v225 = vmul.f32 %v157, %v224
    %v226 = vmul.f32 %v204, %v225
    %v227 = vsub.f32 %v159, %v226
    %v229 = vperm.slane %v225, 0
    %v231 = vmul.f32 %v188, %v229
    %v233 = vperm.slane %v227, 0
    %v235 = vadd.f32 %v231, %v233
    %v236 = vmax.f32 %v235, 0.0
    %v237 = vld [vmem:[#allocation11] sm:$0xff]
    %v238 = vld [vmem:[#allocation11 + $0x8] sm:$0xff]
    %v239 = vld [vmem:[#allocation11 + $0x10] sm:$0xff]
    %v240 = vld [vmem:[#allocation11 + $0x18] sm:$0xff]
    %v241 = vld [vmem:[#allocation11 + $0x20] sm:$0xff]
    %v242 = vld [vmem:[#allocation11 + $0x28] sm:$0xff]
    %v243 = vld [vmem:[#allocation11 + $0x30] sm:$0xff]
    %v244 = vld [vmem:[#allocation11 + $0x38] sm:$0xff]
    %v245 = vld [vmem:[#allocation11 + $0x40] sm:$0xff]
    %v246 = vld [vmem:[#allocation11 + $0x48] sm:$0xff]
    %v247 = vld [vmem:[#allocation11 + $0x50] sm:$0xff]
    %v248 = vld [vmem:[#allocation11 + $0x58] sm:$0xff]
    %v249 = vld [vmem:[#allocation11 + $0x60] sm:$0xff]
    %v250 = vld [vmem:[#allocation11 + $0x68] sm:$0xff]
    %v251 = vld [vmem:[#allocation11 + $0x70] sm:$0xff]
    %v252 = vld [vmem:[#allocation11 + $0x78] sm:$0xff]
    %v253 = vpack.c.bf16 %v236, %v236
    %v270 = vunpack.c.l.b16 %v237
    %v271 = vunpack.c.h.b16 %v237
    %v272 = vunpack.c.l.b16 %v238
    %v273 = vunpack.c.h.b16 %v238
    %v274 = vunpack.c.l.b16 %v239
    %v275 = vunpack.c.h.b16 %v239
    %v276 = vunpack.c.l.b16 %v240
    %v277 = vunpack.c.h.b16 %v240
    %v278 = vunpack.c.l.b16 %v241
    %v279 = vunpack.c.h.b16 %v241
    %v280 = vunpack.c.l.b16 %v242
    %v281 = vunpack.c.h.b16 %v242
    %v282 = vunpack.c.l.b16 %v243
    %v283 = vunpack.c.h.b16 %v243
    %v284 = vunpack.c.l.b16 %v244
    %v285 = vunpack.c.h.b16 %v244
    %v286 = vunpack.c.l.b16 %v245
    %v287 = vunpack.c.h.b16 %v245
    %v288 = vunpack.c.l.b16 %v246
    %v289 = vunpack.c.h.b16 %v246
    %v290 = vunpack.c.l.b16 %v247
    %v291 = vunpack.c.h.b16 %v247
    %v292 = vunpack.c.l.b16 %v248
    %v293 = vunpack.c.h.b16 %v248
    %v294 = vunpack.c.l.b16 %v249
    %v295 = vunpack.c.h.b16 %v249
    %v296 = vunpack.c.l.b16 %v250
    %v297 = vunpack.c.h.b16 %v250
    %v298 = vunpack.c.l.b16 %v251
    %v299 = vunpack.c.h.b16 %v251
    %v300 = vunpack.c.l.b16 %v252
    %v301 = vunpack.c.h.b16 %v252
    %v302 = vpack.c.b16 %v272, %v270
    %v303 = vpack.c.b16 %v273, %v271
    %v304 = vpack.c.b16 %v276, %v274
    %v305 = vpack.c.b16 %v277, %v275
    %v306 = vpack.c.b16 %v280, %v278
    %v307 = vpack.c.b16 %v281, %v279
    %v308 = vpack.c.b16 %v284, %v282
    %v309 = vpack.c.b16 %v285, %v283
    %v310 = vpack.c.b16 %v288, %v286
    %v311 = vpack.c.b16 %v289, %v287
    %v312 = vpack.c.b16 %v292, %v290
    %v313 = vpack.c.b16 %v293, %v291
    %v314 = vpack.c.b16 %v296, %v294
    %v315 = vpack.c.b16 %v297, %v295
    %v316 = vpack.c.b16 %v300, %v298
    %v317 = vpack.c.b16 %v301, %v299
    %334 = vmatpush.bf16.msra.mxu0 %v316
    %335 = vmatpush.bf16.msra.mxu0 %v314
    %336 = vmatpush.bf16.msra.mxu0 %v312
    %337 = vmatpush.bf16.msra.mxu0 %v310
    %338 = vmatpush.bf16.msra.mxu0 %v308
    %339 = vmatpush.bf16.msra.mxu0 %v306
    %340 = vmatpush.bf16.msra.mxu0 %v304
    %341 = vmatpush.bf16.msra.mxu0 %v302
    %342 = vmatmul.bf16.gmra.mxu0 %v253
    %v343 = vpop.f32.mrf.mxu0
    %v344 = vadd.f32 0.0, %v343
    %v345 = vpop.f32.mrf.mxu0
    %346 = vdwg.mxu0
    %347 = vmatpush.bf16.msra.mxu0 %v317
    %348 = vmatpush.bf16.msra.mxu0 %v315
    %349 = vmatpush.bf16.msra.mxu0 %v313
    %350 = vmatpush.bf16.msra.mxu0 %v311
    %351 = vmatpush.bf16.msra.mxu0 %v309
    %352 = vmatpush.bf16.msra.mxu0 %v307
    %353 = vmatpush.bf16.msra.mxu0 %v305
    %354 = vmatpush.bf16.msra.mxu0 %v303
    %355 = vmatmul.bf16.gmra.mxu0 %v253
    %v356 = vpop.f32.mrf.mxu0
    %v357 = vadd.f32 0.0, %v356
    %v358 = vpop.f32.mrf.mxu0
    %359 = vdwg.mxu0
    %v360 = vrot.slane %v344, 4
    %v361 = vadd.f32 %v344, %v360
    %v362 = vrot.slane %v361, 2
    %v363 = vadd.f32 %v361, %v362
    %v364 = vrot.slane %v363, 1
    %v365 = vadd.f32 %v363, %v364
    %v366 = vrot.slane %v357, 4
    %v367 = vadd.f32 %v357, %v366
    %v368 = vrot.slane %v367, 2
    %v369 = vadd.f32 %v367, %v368
    %v370 = vrot.slane %v369, 1
    %v371 = vadd.f32 %v369, %v370
    %v372 = vmul.f32 %v365, %v203
    %v373 = vmul.f32 %v371, %v203
    %v374 = vsub.f32 %v344, %v372
    %v375 = vsub.f32 %v357, %v373
    %v376 = vmul.f32 %v374, %v374
    %v377 = vmul.f32 %v375, %v375
    %v378 = vrot.slane %v376, 4
    %v379 = vadd.f32 %v376, %v378
    %v380 = vrot.slane %v379, 2
    %v381 = vadd.f32 %v379, %v380
    %v382 = vrot.slane %v381, 1
    %v383 = vadd.f32 %v381, %v382
    %v384 = vrot.slane %v377, 4
    %v385 = vadd.f32 %v377, %v384
    %v386 = vrot.slane %v385, 2
    %v387 = vadd.f32 %v385, %v386
    %v388 = vrot.slane %v387, 1
    %v389 = vadd.f32 %v387, %v388
    %v390 = vmul.f32 %v383, %v203
    %v391 = vmul.f32 %v389, %v203
    %v392 = vadd.f32 %v390, 1e-05
    %v393 = vadd.f32 %v391, 1e-05
    %v394 = vrsqrt.pop %v392
    %v395 = vmul.f32 %v394, %v392
    %v396 = vmul.f32 %v395, %v394
    %v397 = vmul.f32 0.5, %v396
    %v398 = vsub.f32 1.5, %v397
    %v399 = vmul.f32 %v394, %v398
    %vm400 = vweird.f32 %v392
    %vm401 = vweird.f32 %v394
    %vm402 = vmor %vm400, %vm401
    %v403 = vsel %vm402, %v394, %v399
    %v404 = vrsqrt.pop %v393
    %v405 = vmul.f32 %v404, %v393
    %v406 = vmul.f32 %v405, %v404
    %v407 = vmul.f32 0.5, %v406
    %v408 = vsub.f32 1.5, %v407
    %v409 = vmul.f32 %v404, %v408
    %vm410 = vweird.f32 %v393
    %vm411 = vweird.f32 %v404
    %vm412 = vmor %vm410, %vm411
    %v413 = vsel %vm412, %v404, %v409
    %v415 = vrot.slane %v157, 1
    %v419 = vrot.slane %v413, 7
    %vm420 = vcmask 1040384
    %v421 = vsel %vm420, %v403, %v419
    %v423 = vmul.f32 %v415, %v421
    %v425 = vperm.slane %v423, 0
    %v426 = vperm.slane %v423, 1
    %v429 = vmul.f32 %v372, %v425
    %v430 = vmul.f32 %v373, %v426
    %v432 = vrot.slane %v159, 1
    %v436 = vrot.slane %v430, 7
    %v437 = vsel %vm420, %v429, %v436
    %v439 = vsub.f32 %v432, %v437
    %v440 = vmul.f32 %v344, %v425
    %v441 = vmul.f32 %v357, %v426
    %v443 = vperm.slane %v439, 0
    %v444 = vperm.slane %v439, 1
    %v447 = vadd.f32 %v440, %v443
    %v448 = vadd.f32 %v441, %v444
    %v449 = vmax.f32 %v447, 0.0
    %v450 = vmax.f32 %v448, 0.0
    %v451 = vld [vmem:[#allocation12] sm:$0xff]
    %v452 = vld [vmem:[#allocation12 + $0x8] sm:$0xff]
    %v453 = vld [vmem:[#allocation12 + $0x10] sm:$0xff]
    %v454 = vld [vmem:[#allocation12 + $0x18] sm:$0xff]
    %v455 = vld [vmem:[#allocation12 + $0x20] sm:$0xff]
    %v456 = vld [vmem:[#allocation12 + $0x28] sm:$0xff]
    %v457 = vld [vmem:[#allocation12 + $0x30] sm:$0xff]
    %v458 = vld [vmem:[#allocation12 + $0x38] sm:$0xff]
    %v459 = vld [vmem:[#allocation12 + $0x40] sm:$0xff]
    %v460 = vld [vmem:[#allocation12 + $0x48] sm:$0xff]
    %v461 = vld [vmem:[#allocation12 + $0x50] sm:$0xff]
    %v462 = vld [vmem:[#allocation12 + $0x58] sm:$0xff]
    %v463 = vld [vmem:[#allocation12 + $0x60] sm:$0xff]
    %v464 = vld [vmem:[#allocation12 + $0x68] sm:$0xff]
    %v465 = vld [vmem:[#allocation12 + $0x70] sm:$0xff]
    %v466 = vld [vmem:[#allocation12 + $0x78] sm:$0xff]
    %v467 = vld [vmem:[#allocation12 + $0x80] sm:$0xff]
    %v468 = vld [vmem:[#allocation12 + $0x88] sm:$0xff]
    %v469 = vld [vmem:[#allocation12 + $0x90] sm:$0xff]
    %v470 = vld [vmem:[#allocation12 + $0x98] sm:$0xff]
    %v471 = vld [vmem:[#allocation12 + $0xa0] sm:$0xff]
    %v472 = vld [vmem:[#allocation12 + $0xa8] sm:$0xff]
    %v473 = vld [vmem:[#allocation12 + $0xb0] sm:$0xff]
    %v474 = vld [vmem:[#allocation12 + $0xb8] sm:$0xff]
    %v475 = vld [vmem:[#allocation12 + $0xc0] sm:$0xff]
    %v476 = vld [vmem:[#allocation12 + $0xc8] sm:$0xff]
    %v477 = vld [vmem:[#allocation12 + $0xd0] sm:$0xff]
    %v478 = vld [vmem:[#allocation12 + $0xd8] sm:$0xff]
    %v479 = vld [vmem:[#allocation12 + $0xe0] sm:$0xff]
    %v480 = vld [vmem:[#allocation12 + $0xe8] sm:$0xff]
    %v481 = vld [vmem:[#allocation12 + $0xf0] sm:$0xff]
    %v482 = vld [vmem:[#allocation12 + $0xf8] sm:$0xff]
    %v483 = vld [vmem:[#allocation12 + $0x100] sm:$0xff]
    %v484 = vld [vmem:[#allocation12 + $0x108] sm:$0xff]
    %v485 = vld [vmem:[#allocation12 + $0x110] sm:$0xff]
    %v486 = vld [vmem:[#allocation12 + $0x118] sm:$0xff]
    %v487 = vld [vmem:[#allocation12 + $0x120] sm:$0xff]
    %v488 = vld [vmem:[#allocation12 + $0x128] sm:$0xff]
    %v489 = vld [vmem:[#allocation12 + $0x130] sm:$0xff]
    %v490 = vld [vmem:[#allocation12 + $0x138] sm:$0xff]
    %v491 = vld [vmem:[#allocation12 + $0x140] sm:$0xff]
    %v492 = vld [vmem:[#allocation12 + $0x148] sm:$0xff]
    %v493 = vld [vmem:[#allocation12 + $0x150] sm:$0xff]
    %v494 = vld [vmem:[#allocation12 + $0x158] sm:$0xff]
    %v495 = vld [vmem:[#allocation12 + $0x160] sm:$0xff]
    %v496 = vld [vmem:[#allocation12 + $0x168] sm:$0xff]
    %v497 = vld [vmem:[#allocation12 + $0x170] sm:$0xff]
    %v498 = vld [vmem:[#allocation12 + $0x178] sm:$0xff]
    %v499 = vld [vmem:[#allocation12 + $0x180] sm:$0xff]
    %v500 = vld [vmem:[#allocation12 + $0x188] sm:$0xff]
    %v501 = vld [vmem:[#allocation12 + $0x190] sm:$0xff]
    %v502 = vld [vmem:[#allocation12 + $0x198] sm:$0xff]
    %v503 = vld [vmem:[#allocation12 + $0x1a0] sm:$0xff]
    %v504 = vld [vmem:[#allocation12 + $0x1a8] sm:$0xff]
    %v505 = vld [vmem:[#allocation12 + $0x1b0] sm:$0xff]
    %v506 = vld [vmem:[#allocation12 + $0x1b8] sm:$0xff]
    %v507 = vld [vmem:[#allocation12 + $0x1c0] sm:$0xff]
    %v508 = vld [vmem:[#allocation12 + $0x1c8] sm:$0xff]
    %v509 = vld [vmem:[#allocation12 + $0x1d0] sm:$0xff]
    %v510 = vld [vmem:[#allocation12 + $0x1d8] sm:$0xff]
    %v511 = vld [vmem:[#allocation12 + $0x1e0] sm:$0xff]
    %v512 = vld [vmem:[#allocation12 + $0x1e8] sm:$0xff]
    %v513 = vld [vmem:[#allocation12 + $0x1f0] sm:$0xff]
    %v514 = vld [vmem:[#allocation12 + $0x1f8] sm:$0xff]
    %v515 = vpack.c.bf16 %v449, %v449
    %v516 = vpack.c.bf16 %v450, %v450
    %v581 = vunpack.c.l.b16 %v451
    %v582 = vunpack.c.h.b16 %v451
    %v583 = vunpack.c.l.b16 %v452
    %v584 = vunpack.c.h.b16 %v452
    %v585 = vunpack.c.l.b16 %v453
    %v586 = vunpack.c.h.b16 %v453
    %v587 = vunpack.c.l.b16 %v454
    %v588 = vunpack.c.h.b16 %v454
    %v589 = vunpack.c.l.b16 %v455
    %v590 = vunpack.c.h.b16 %v455
    %v591 = vunpack.c.l.b16 %v456
    %v592 = vunpack.c.h.b16 %v456
    %v593 = vunpack.c.l.b16 %v457
    %v594 = vunpack.c.h.b16 %v457
    %v595 = vunpack.c.l.b16 %v458
    %v596 = vunpack.c.h.b16 %v458
    %v597 = vunpack.c.l.b16 %v459
    %v598 = vunpack.c.h.b16 %v459
    %v599 = vunpack.c.l.b16 %v460
    %v600 = vunpack.c.h.b16 %v460
    %v601 = vunpack.c.l.b16 %v461
    %v602 = vunpack.c.h.b16 %v461
    %v603 = vunpack.c.l.b16 %v462
    %v604 = vunpack.c.h.b16 %v462
    %v605 = vunpack.c.l.b16 %v463
    %v606 = vunpack.c.h.b16 %v463
    %v607 = vunpack.c.l.b16 %v464
    %v608 = vunpack.c.h.b16 %v464
    %v609 = vunpack.c.l.b16 %v465
    %v610 = vunpack.c.h.b16 %v465
    %v611 = vunpack.c.l.b16 %v466
    %v612 = vunpack.c.h.b16 %v466
    %v613 = vunpack.c.l.b16 %v467
    %v614 = vunpack.c.h.b16 %v467
    %v615 = vunpack.c.l.b16 %v468
    %v616 = vunpack.c.h.b16 %v468
    %v617 = vunpack.c.l.b16 %v469
    %v618 = vunpack.c.h.b16 %v469
    %v619 = vunpack.c.l.b16 %v470
    %v620 = vunpack.c.h.b16 %v470
    %v621 = vunpack.c.l.b16 %v471
    %v622 = vunpack.c.h.b16 %v471
    %v623 = vunpack.c.l.b16 %v472
    %v624 = vunpack.c.h.b16 %v472
    %v625 = vunpack.c.l.b16 %v473
    %v626 = vunpack.c.h.b16 %v473
    %v627 = vunpack.c.l.b16 %v474
    %v628 = vunpack.c.h.b16 %v474
    %v629 = vunpack.c.l.b16 %v475
    %v630 = vunpack.c.h.b16 %v475
    %v631 = vunpack.c.l.b16 %v476
    %v632 = vunpack.c.h.b16 %v476
    %v633 = vunpack.c.l.b16 %v477
    %v634 = vunpack.c.h.b16 %v477
    %v635 = vunpack.c.l.b16 %v478
    %v636 = vunpack.c.h.b16 %v478
    %v637 = vunpack.c.l.b16 %v479
    %v638 = vunpack.c.h.b16 %v479
    %v639 = vunpack.c.l.b16 %v480
    %v640 = vunpack.c.h.b16 %v480
    %v641 = vunpack.c.l.b16 %v481
    %v642 = vunpack.c.h.b16 %v481
    %v643 = vunpack.c.l.b16 %v482
    %v644 = vunpack.c.h.b16 %v482
    %v645 = vunpack.c.l.b16 %v483
    %v646 = vunpack.c.h.b16 %v483
    %v647 = vunpack.c.l.b16 %v484
    %v648 = vunpack.c.h.b16 %v484
    %v649 = vunpack.c.l.b16 %v485
    %v650 = vunpack.c.h.b16 %v485
    %v651 = vunpack.c.l.b16 %v486
    %v652 = vunpack.c.h.b16 %v486
    %v653 = vunpack.c.l.b16 %v487
    %v654 = vunpack.c.h.b16 %v487
    %v655 = vunpack.c.l.b16 %v488
    %v656 = vunpack.c.h.b16 %v488
    %v657 = vunpack.c.l.b16 %v489
    %v658 = vunpack.c.h.b16 %v489
    %v659 = vunpack.c.l.b16 %v490
    %v660 = vunpack.c.h.b16 %v490
    %v661 = vunpack.c.l.b16 %v491
    %v662 = vunpack.c.h.b16 %v491
    %v663 = vunpack.c.l.b16 %v492
    %v664 = vunpack.c.h.b16 %v492
    %v665 = vunpack.c.l.b16 %v493
    %v666 = vunpack.c.h.b16 %v493
    %v667 = vunpack.c.l.b16 %v494
    %v668 = vunpack.c.h.b16 %v494
    %v669 = vunpack.c.l.b16 %v495
    %v670 = vunpack.c.h.b16 %v495
    %v671 = vunpack.c.l.b16 %v496
    %v672 = vunpack.c.h.b16 %v496
    %v673 = vunpack.c.l.b16 %v497
    %v674 = vunpack.c.h.b16 %v497
    %v675 = vunpack.c.l.b16 %v498
    %v676 = vunpack.c.h.b16 %v498
    %v677 = vunpack.c.l.b16 %v499
    %v678 = vunpack.c.h.b16 %v499
    %v679 = vunpack.c.l.b16 %v500
    %v680 = vunpack.c.h.b16 %v500
    %v681 = vunpack.c.l.b16 %v501
    %v682 = vunpack.c.h.b16 %v501
    %v683 = vunpack.c.l.b16 %v502
    %v684 = vunpack.c.h.b16 %v502
    %v685 = vunpack.c.l.b16 %v503
    %v686 = vunpack.c.h.b16 %v503
    %v687 = vunpack.c.l.b16 %v504
    %v688 = vunpack.c.h.b16 %v504
    %v689 = vunpack.c.l.b16 %v505
    %v690 = vunpack.c.h.b16 %v505
    %v691 = vunpack.c.l.b16 %v506
    %v692 = vunpack.c.h.b16 %v506
    %v693 = vunpack.c.l.b16 %v507
    %v694 = vunpack.c.h.b16 %v507
    %v695 = vunpack.c.l.b16 %v508
    %v696 = vunpack.c.h.b16 %v508
    %v697 = vunpack.c.l.b16 %v509
    %v698 = vunpack.c.h.b16 %v509
    %v699 = vunpack.c.l.b16 %v510
    %v700 = vunpack.c.h.b16 %v510
    %v701 = vunpack.c.l.b16 %v511
    %v702 = vunpack.c.h.b16 %v511
    %v703 = vunpack.c.l.b16 %v512
    %v704 = vunpack.c.h.b16 %v512
    %v705 = vunpack.c.l.b16 %v513
    %v706 = vunpack.c.h.b16 %v513
    %v707 = vunpack.c.l.b16 %v514
    %v708 = vunpack.c.h.b16 %v514
    %v709 = vpack.c.b16 %v585, %v581
    %v710 = vpack.c.b16 %v586, %v582
    %v711 = vpack.c.b16 %v587, %v583
    %v712 = vpack.c.b16 %v588, %v584
    %v713 = vpack.c.b16 %v593, %v589
    %v714 = vpack.c.b16 %v594, %v590
    %v715 = vpack.c.b16 %v595, %v591
    %v716 = vpack.c.b16 %v596, %v592
    %v717 = vpack.c.b16 %v601, %v597
    %v718 = vpack.c.b16 %v602, %v598
    %v719 = vpack.c.b16 %v603, %v599
    %v720 = vpack.c.b16 %v604, %v600
    %v721 = vpack.c.b16 %v609, %v605
    %v722 = vpack.c.b16 %v610, %v606
    %v723 = vpack.c.b16 %v611, %v607
    %v724 = vpack.c.b16 %v612, %v608
    %v725 = vpack.c.b16 %v617, %v613
    %v726 = vpack.c.b16 %v618, %v614
    %v727 = vpack.c.b16 %v619, %v615
    %v728 = vpack.c.b16 %v620, %v616
    %v729 = vpack.c.b16 %v625, %v621
    %v730 = vpack.c.b16 %v626, %v622
    %v731 = vpack.c.b16 %v627, %v623
    %v732 = vpack.c.b16 %v628, %v624
    %v733 = vpack.c.b16 %v633, %v629
    %v734 = vpack.c.b16 %v634, %v630
    %v735 = vpack.c.b16 %v635, %v631
    %v736 = vpack.c.b16 %v636, %v632
    %v737 = vpack.c.b16 %v641, %v637
    %v738 = vpack.c.b16 %v642, %v638
    %v739 = vpack.c.b16 %v643, %v639
    %v740 = vpack.c.b16 %v644, %v640
    %v741 = vpack.c.b16 %v649, %v645
    %v742 = vpack.c.b16 %v650, %v646
    %v743 = vpack.c.b16 %v651, %v647
    %v744 = vpack.c.b16 %v652, %v648
    %v745 = vpack.c.b16 %v657, %v653
    %v746 = vpack.c.b16 %v658, %v654
    %v747 = vpack.c.b16 %v659, %v655
    %v748 = vpack.c.b16 %v660, %v656
    %v749 = vpack.c.b16 %v665, %v661
    %v750 = vpack.c.b16 %v666, %v662
    %v751 = vpack.c.b16 %v667, %v663
    %v752 = vpack.c.b16 %v668, %v664
    %v753 = vpack.c.b16 %v673, %v669
    %v754 = vpack.c.b16 %v674, %v670
    %v755 = vpack.c.b16 %v675, %v671
    %v756 = vpack.c.b16 %v676, %v672
    %v757 = vpack.c.b16 %v681, %v677
    %v758 = vpack.c.b16 %v682, %v678
    %v759 = vpack.c.b16 %v683, %v679
    %v760 = vpack.c.b16 %v684, %v680
    %v761 = vpack.c.b16 %v689, %v685
    %v762 = vpack.c.b16 %v690, %v686
    %v763 = vpack.c.b16 %v691, %v687
    %v764 = vpack.c.b16 %v692, %v688
    %v765 = vpack.c.b16 %v697, %v693
    %v766 = vpack.c.b16 %v698, %v694
    %v767 = vpack.c.b16 %v699, %v695
    %v768 = vpack.c.b16 %v700, %v696
    %v769 = vpack.c.b16 %v705, %v701
    %v770 = vpack.c.b16 %v706, %v702
    %v771 = vpack.c.b16 %v707, %v703
    %v772 = vpack.c.b16 %v708, %v704
    %837 = vmatpush.bf16.msra.mxu0 %v737
    %838 = vmatpush.bf16.msra.mxu0 %v733
    %839 = vmatpush.bf16.msra.mxu0 %v729
    %840 = vmatpush.bf16.msra.mxu0 %v725
    %841 = vmatpush.bf16.msra.mxu0 %v721
    %842 = vmatpush.bf16.msra.mxu0 %v717
    %843 = vmatpush.bf16.msra.mxu0 %v713
    %844 = vmatpush.bf16.msra.mxu0 %v709
    %845 = vmatmul.bf16.gmra.mxu0 %v515
    %v846 = vpop.f32.mrf.mxu0
    %v847 = vadd.f32 0.0, %v846
    %v848 = vpop.f32.mrf.mxu0
    %849 = vdwg.mxu0
    %850 = vmatpush.bf16.msra.mxu0 %v769
    %851 = vmatpush.bf16.msra.mxu0 %v765
    %852 = vmatpush.bf16.msra.mxu0 %v761
    %853 = vmatpush.bf16.msra.mxu0 %v757
    %854 = vmatpush.bf16.msra.mxu0 %v753
    %855 = vmatpush.bf16.msra.mxu0 %v749
    %856 = vmatpush.bf16.msra.mxu0 %v745
    %857 = vmatpush.bf16.msra.mxu0 %v741
    %858 = vmatmul.bf16.gmra.mxu0 %v516
    %v859 = vpop.f32.mrf.mxu0
    %v860 = vadd.f32 %v847, %v859
    %v861 = vpop.f32.mrf.mxu0
    %862 = vdwg.mxu0
    %863 = vmatpush.bf16.msra.mxu0 %v738
    %864 = vmatpush.bf16.msra.mxu0 %v734
    %865 = vmatpush.bf16.msra.mxu0 %v730
    %866 = vmatpush.bf16.msra.mxu0 %v726
    %867 = vmatpush.bf16.msra.mxu0 %v722
    %868 = vmatpush.bf16.msra.mxu0 %v718
    %869 = vmatpush.bf16.msra.mxu0 %v714
    %870 = vmatpush.bf16.msra.mxu0 %v710
    %871 = vmatmul.bf16.gmra.mxu0 %v515
    %v872 = vpop.f32.mrf.mxu0
    %v873 = vadd.f32 0.0, %v872
    %v874 = vpop.f32.mrf.mxu0
    %875 = vdwg.mxu0
    %876 = vmatpush.bf16.msra.mxu0 %v770
    %877 = vmatpush.bf16.msra.mxu0 %v766
    %878 = vmatpush.bf16.msra.mxu0 %v762
    %879 = vmatpush.bf16.msra.mxu0 %v758
    %880 = vmatpush.bf16.msra.mxu0 %v754
    %881 = vmatpush.bf16.msra.mxu0 %v750
    %882 = vmatpush.bf16.msra.mxu0 %v746
    %883 = vmatpush.bf16.msra.mxu0 %v742
    %884 = vmatmul.bf16.gmra.mxu0 %v516
    %v885 = vpop.f32.mrf.mxu0
    %v886 = vadd.f32 %v873, %v885
    %v887 = vpop.f32.mrf.mxu0
    %888 = vdwg.mxu0
    %889 = vmatpush.bf16.msra.mxu0 %v739
    %890 = vmatpush.bf16.msra.mxu0 %v735
    %891 = vmatpush.bf16.msra.mxu0 %v731
    %892 = vmatpush.bf16.msra.mxu0 %v727
    %893 = vmatpush.bf16.msra.mxu0 %v723
    %894 = vmatpush.bf16.msra.mxu0 %v719
    %895 = vmatpush.bf16.msra.mxu0 %v715
    %896 = vmatpush.bf16.msra.mxu0 %v711
    %897 = vmatmul.bf16.gmra.mxu0 %v515
    %v898 = vpop.f32.mrf.mxu0
    %v899 = vadd.f32 0.0, %v898
    %v900 = vpop.f32.mrf.mxu0
    %901 = vdwg.mxu0
    %902 = vmatpush.bf16.msra.mxu0 %v771
    %903 = vmatpush.bf16.msra.mxu0 %v767
    %904 = vmatpush.bf16.msra.mxu0 %v763
    %905 = vmatpush.bf16.msra.mxu0 %v759
    %906 = vmatpush.bf16.msra.mxu0 %v755
    %907 = vmatpush.bf16.msra.mxu0 %v751
    %908 = vmatpush.bf16.msra.mxu0 %v747
    %909 = vmatpush.bf16.msra.mxu0 %v743
    %910 = vmatmul.bf16.gmra.mxu0 %v516
    %v911 = vpop.f32.mrf.mxu0
    %v912 = vadd.f32 %v899, %v911
    %v913 = vpop.f32.mrf.mxu0
    %914 = vdwg.mxu0
    %915 = vmatpush.bf16.msra.mxu0 %v740
    %916 = vmatpush.bf16.msra.mxu0 %v736
    %917 = vmatpush.bf16.msra.mxu0 %v732
    %918 = vmatpush.bf16.msra.mxu0 %v728
    %919 = vmatpush.bf16.msra.mxu0 %v724
    %920 = vmatpush.bf16.msra.mxu0 %v720
    %921 = vmatpush.bf16.msra.mxu0 %v716
    %922 = vmatpush.bf16.msra.mxu0 %v712
    %923 = vmatmul.bf16.gmra.mxu0 %v515
    %v924 = vpop.f32.mrf.mxu0
    %v925 = vadd.f32 0.0, %v924
    %v926 = vpop.f32.mrf.mxu0
    %927 = vdwg.mxu0
    %928 = vmatpush.bf16.msra.mxu0 %v772
    %929 = vmatpush.bf16.msra.mxu0 %v768
    %930 = vmatpush.bf16.msra.mxu0 %v764
    %931 = vmatpush.bf16.msra.mxu0 %v760
    %932 = vmatpush.bf16.msra.mxu0 %v756
    %933 = vmatpush.bf16.msra.mxu0 %v752
    %934 = vmatpush.bf16.msra.mxu0 %v748
    %935 = vmatpush.bf16.msra.mxu0 %v744
    %936 = vmatmul.bf16.gmra.mxu0 %v516
    %v937 = vpop.f32.mrf.mxu0
    %v938 = vadd.f32 %v925, %v937
    %v939 = vpop.f32.mrf.mxu0
    %940 = vdwg.mxu0
    %v941 = vrot.slane %v860, 4
    %v942 = vadd.f32 %v860, %v941
    %v943 = vrot.slane %v942, 2
    %v944 = vadd.f32 %v942, %v943
    %v945 = vrot.slane %v944, 1
    %v946 = vadd.f32 %v944, %v945
    %v947 = vrot.slane %v886, 4
    %v948 = vadd.f32 %v886, %v947
    %v949 = vrot.slane %v948, 2
    %v950 = vadd.f32 %v948, %v949
    %v951 = vrot.slane %v950, 1
    %v952 = vadd.f32 %v950, %v951
    %v953 = vrot.slane %v912, 4
    %v954 = vadd.f32 %v912, %v953
    %v955 = vrot.slane %v954, 2
    %v956 = vadd.f32 %v954, %v955
    %v957 = vrot.slane %v956, 1
    %v958 = vadd.f32 %v956, %v957
    %v959 = vrot.slane %v938, 4
    %v960 = vadd.f32 %v938, %v959
    %v961 = vrot.slane %v960, 2
    %v962 = vadd.f32 %v960, %v961
    %v963 = vrot.slane %v962, 1
    %v964 = vadd.f32 %v962, %v963
    %v965 = vmul.f32 %v946, %v203
    %v966 = vmul.f32 %v952, %v203
    %v967 = vmul.f32 %v958, %v203
    %v968 = vmul.f32 %v964, %v203
    %v969 = vsub.f32 %v860, %v965
    %v970 = vsub.f32 %v886, %v966
    %v971 = vsub.f32 %v912, %v967
    %v972 = vsub.f32 %v938, %v968
    %v973 = vmul.f32 %v969, %v969
    %v974 = vmul.f32 %v970, %v970
    %v975 = vmul.f32 %v971, %v971
    %v976 = vmul.f32 %v972, %v972
    %v977 = vrot.slane %v973, 4
    %v978 = vadd.f32 %v973, %v977
    %v979 = vrot.slane %v978, 2
    %v980 = vadd.f32 %v978, %v979
    %v981 = vrot.slane %v980, 1
    %v982 = vadd.f32 %v980, %v981
    %v983 = vrot.slane %v974, 4
    %v984 = vadd.f32 %v974, %v983
    %v985 = vrot.slane %v984, 2
    %v986 = vadd.f32 %v984, %v985
    %v987 = vrot.slane %v986, 1
    %v988 = vadd.f32 %v986, %v987
    %v989 = vrot.slane %v975, 4
    %v990 = vadd.f32 %v975, %v989
    %v991 = vrot.slane %v990, 2
    %v992 = vadd.f32 %v990, %v991
    %v993 = vrot.slane %v992, 1
    %v994 = vadd.f32 %v992, %v993
    %v995 = vrot.slane %v976, 4
    %v996 = vadd.f32 %v976, %v995
    %v997 = vrot.slane %v996, 2
    %v998 = vadd.f32 %v996, %v997
    %v999 = vrot.slane %v998, 1
    %v1000 = vadd.f32 %v998, %v999
    %v1001 = vmul.f32 %v982, %v203
    %v1002 = vmul.f32 %v988, %v203
    %v1003 = vmul.f32 %v994, %v203
    %v1004 = vmul.f32 %v1000, %v203
    %v1005 = vadd.f32 %v1001, 1e-05
    %v1006 = vadd.f32 %v1002, 1e-05
    %v1007 = vadd.f32 %v1003, 1e-05
    %v1008 = vadd.f32 %v1004, 1e-05
    %v1009 = vrsqrt.pop %v1005
    %v1010 = vmul.f32 %v1009, %v1005
    %v1011 = vmul.f32 %v1010, %v1009
    %v1012 = vmul.f32 0.5, %v1011
    %v1013 = vsub.f32 1.5, %v1012
    %v1014 = vmul.f32 %v1009, %v1013
    %vm1015 = vweird.f32 %v1005
    %vm1016 = vweird.f32 %v1009
    %vm1017 = vmor %vm1015, %vm1016
    %v1018 = vsel %vm1017, %v1009, %v1014
    %v1019 = vrsqrt.pop %v1006
    %v1020 = vmul.f32 %v1019, %v1006
    %v1021 = vmul.f32 %v1020, %v1019
    %v1022 = vmul.f32 0.5, %v1021
    %v1023 = vsub.f32 1.5, %v1022
    %v1024 = vmul.f32 %v1019, %v1023
    %vm1025 = vweird.f32 %v1006
    %vm1026 = vweird.f32 %v1019
    %vm1027 = vmor %vm1025, %vm1026
    %v1028 = vsel %vm1027, %v1019, %v1024
    %v1029 = vrsqrt.pop %v1007
    %v1030 = vmul.f32 %v1029, %v1007
    %v1031 = vmul.f32 %v1030, %v1029
    %v1032 = vmul.f32 0.5, %v1031
    %v1033 = vsub.f32 1.5, %v1032
    %v1034 = vmul.f32 %v1029, %v1033
    %vm1035 = vweird.f32 %v1007
    %vm1036 = vweird.f32 %v1029
    %vm1037 = vmor %vm1035, %vm1036
    %v1038 = vsel %vm1037, %v1029, %v1034
    %v1039 = vrsqrt.pop %v1008
    %v1040 = vmul.f32 %v1039, %v1008
    %v1041 = vmul.f32 %v1040, %v1039
    %v1042 = vmul.f32 0.5, %v1041
    %v1043 = vsub.f32 1.5, %v1042
    %v1044 = vmul.f32 %v1039, %v1043
    %vm1045 = vweird.f32 %v1008
    %vm1046 = vweird.f32 %v1039
    %vm1047 = vmor %vm1045, %vm1046
    %v1048 = vsel %vm1047, %v1039, %v1044
    %v1049 = vrot.slane %v157, 3
    %v1055 = vrot.slane %v1028, 7
    %v1056 = vrot.slane %v1038, 6
    %v1057 = vrot.slane %v1048, 5
    %v1058 = vsel %vm420, %v1018, %v1055
    %vm1059 = vcmask 1042434
    %v1060 = vsel %vm1059, %v1056, %v1057
    %vm1061 = vcmask 1041408
    %v1062 = vsel %vm1061, %v1058, %v1060
    %v1064 = vmul.f32 %v1049, %v1062
    %v1066 = vperm.slane %v1064, 0
    %v1067 = vperm.slane %v1064, 1
    %v1068 = vperm.slane %v1064, 2
    %v1069 = vperm.slane %v1064, 3
    %v1074 = vmul.f32 %v965, %v1066
    %v1075 = vmul.f32 %v966, %v1067
    %v1076 = vmul.f32 %v967, %v1068
    %v1077 = vmul.f32 %v968, %v1069
    %v1078 = vrot.slane %v159, 3
    %v1084 = vrot.slane %v1075, 7
    %v1085 = vrot.slane %v1076, 6
    %v1086 = vrot.slane %v1077, 5
    %v1087 = vsel %vm420, %v1074, %v1084
    %v1088 = vsel %vm1059, %v1085, %v1086
    %v1089 = vsel %vm1061, %v1087, %v1088
    %v1091 = vsub.f32 %v1078, %v1089
    %v1092 = vmul.f32 %v860, %v1066
    %v1093 = vmul.f32 %v886, %v1067
    %v1094 = vmul.f32 %v912, %v1068
    %v1095 = vmul.f32 %v938, %v1069
    %v1097 = vperm.slane %v1091, 0
    %v1098 = vperm.slane %v1091, 1
    %v1099 = vperm.slane %v1091, 2
    %v1100 = vperm.slane %v1091, 3
    %v1105 = vadd.f32 %v1092, %v1097
    %v1106 = vadd.f32 %v1093, %v1098
    %v1107 = vadd.f32 %v1094, %v1099
    %v1108 = vadd.f32 %v1095, %v1100
    %v1109 = vmax.f32 %v1105, 0.0
    %v1110 = vmax.f32 %v1106, 0.0
    %v1111 = vmax.f32 %v1107, 0.0
    %v1112 = vmax.f32 %v1108, 0.0
    %s1113 = smul.u32 4, 64
    %s1114 = smul.u32 %s1113, 8
    %s1115 = sshll.u32 %s1114, 4
    %1116 = dma.done [#allocation4], %s1115
    %v1117 = vld [vmem:[#allocation2] sm:$0xff]
    %v1118 = vld [vmem:[#allocation2 + $0x8] sm:$0xff]
    %v1119 = vld [vmem:[#allocation2 + $0x10] sm:$0xff]
    %v1120 = vld [vmem:[#allocation2 + $0x18] sm:$0xff]
    %v1121 = vld [vmem:[#allocation2 + $0x20] sm:$0xff]
    %v1122 = vld [vmem:[#allocation2 + $0x28] sm:$0xff]
    %v1123 = vld [vmem:[#allocation2 + $0x30] sm:$0xff]
    %v1124 = vld [vmem:[#allocation2 + $0x38] sm:$0xff]
    %v1125 = vld [vmem:[#allocation2 + $0x40] sm:$0xff]
    %v1126 = vld [vmem:[#allocation2 + $0x48] sm:$0xff]
    %v1127 = vld [vmem:[#allocation2 + $0x50] sm:$0xff]
    %v1128 = vld [vmem:[#allocation2 + $0x58] sm:$0xff]
    %v1129 = vld [vmem:[#allocation2 + $0x60] sm:$0xff]
    %v1130 = vld [vmem:[#allocation2 + $0x68] sm:$0xff]
    %v1131 = vld [vmem:[#allocation2 + $0x70] sm:$0xff]
    %v1132 = vld [vmem:[#allocation2 + $0x78] sm:$0xff]
    %v1133 = vld [vmem:[#allocation2 + $0x80] sm:$0xff]
    %v1134 = vld [vmem:[#allocation2 + $0x88] sm:$0xff]
    %v1135 = vld [vmem:[#allocation2 + $0x90] sm:$0xff]
    %v1136 = vld [vmem:[#allocation2 + $0x98] sm:$0xff]
    %v1137 = vld [vmem:[#allocation2 + $0xa0] sm:$0xff]
    %v1138 = vld [vmem:[#allocation2 + $0xa8] sm:$0xff]
    %v1139 = vld [vmem:[#allocation2 + $0xb0] sm:$0xff]
    %v1140 = vld [vmem:[#allocation2 + $0xb8] sm:$0xff]
    %v1141 = vld [vmem:[#allocation2 + $0xc0] sm:$0xff]
    %v1142 = vld [vmem:[#allocation2 + $0xc8] sm:$0xff]
    %v1143 = vld [vmem:[#allocation2 + $0xd0] sm:$0xff]
    %v1144 = vld [vmem:[#allocation2 + $0xd8] sm:$0xff]
    %v1145 = vld [vmem:[#allocation2 + $0xe0] sm:$0xff]
    %v1146 = vld [vmem:[#allocation2 + $0xe8] sm:$0xff]
    %v1147 = vld [vmem:[#allocation2 + $0xf0] sm:$0xff]
    %v1148 = vld [vmem:[#allocation2 + $0xf8] sm:$0xff]
    %v1149 = vld [vmem:[#allocation2 + $0x100] sm:$0xff]
    %v1150 = vld [vmem:[#allocation2 + $0x108] sm:$0xff]
    %v1151 = vld [vmem:[#allocation2 + $0x110] sm:$0xff]
    %v1152 = vld [vmem:[#allocation2 + $0x118] sm:$0xff]
    %v1153 = vld [vmem:[#allocation2 + $0x120] sm:$0xff]
    %v1154 = vld [vmem:[#allocation2 + $0x128] sm:$0xff]
    %v1155 = vld [vmem:[#allocation2 + $0x130] sm:$0xff]
    %v1156 = vld [vmem:[#allocation2 + $0x138] sm:$0xff]
    %v1157 = vld [vmem:[#allocation2 + $0x140] sm:$0xff]
    %v1158 = vld [vmem:[#allocation2 + $0x148] sm:$0xff]
    %v1159 = vld [vmem:[#allocation2 + $0x150] sm:$0xff]
    %v1160 = vld [vmem:[#allocation2 + $0x158] sm:$0xff]
    %v1161 = vld [vmem:[#allocation2 + $0x160] sm:$0xff]
    %v1162 = vld [vmem:[#allocation2 + $0x168] sm:$0xff]
    %v1163 = vld [vmem:[#allocation2 + $0x170] sm:$0xff]
    %v1164 = vld [vmem:[#allocation2 + $0x178] sm:$0xff]
    %v1165 = vld [vmem:[#allocation2 + $0x180] sm:$0xff]
    %v1166 = vld [vmem:[#allocation2 + $0x188] sm:$0xff]
    %v1167 = vld [vmem:[#allocation2 + $0x190] sm:$0xff]
    %v1168 = vld [vmem:[#allocation2 + $0x198] sm:$0xff]
    %v1169 = vld [vmem:[#allocation2 + $0x1a0] sm:$0xff]
    %v1170 = vld [vmem:[#allocation2 + $0x1a8] sm:$0xff]
    %v1171 = vld [vmem:[#allocation2 + $0x1b0] sm:$0xff]
    %v1172 = vld [vmem:[#allocation2 + $0x1b8] sm:$0xff]
    %v1173 = vld [vmem:[#allocation2 + $0x1c0] sm:$0xff]
    %v1174 = vld [vmem:[#allocation2 + $0x1c8] sm:$0xff]
    %v1175 = vld [vmem:[#allocation2 + $0x1d0] sm:$0xff]
    %v1176 = vld [vmem:[#allocation2 + $0x1d8] sm:$0xff]
    %v1177 = vld [vmem:[#allocation2 + $0x1e0] sm:$0xff]
    %v1178 = vld [vmem:[#allocation2 + $0x1e8] sm:$0xff]
    %v1179 = vld [vmem:[#allocation2 + $0x1f0] sm:$0xff]
    %v1180 = vld [vmem:[#allocation2 + $0x1f8] sm:$0xff]
    %v1181 = vld [vmem:[#allocation2 + $0x200] sm:$0xff]
    %v1182 = vld [vmem:[#allocation2 + $0x208] sm:$0xff]
    %v1183 = vld [vmem:[#allocation2 + $0x210] sm:$0xff]
    %v1184 = vld [vmem:[#allocation2 + $0x218] sm:$0xff]
    %v1185 = vld [vmem:[#allocation2 + $0x220] sm:$0xff]
    %v1186 = vld [vmem:[#allocation2 + $0x228] sm:$0xff]
    %v1187 = vld [vmem:[#allocation2 + $0x230] sm:$0xff]
    %v1188 = vld [vmem:[#allocation2 + $0x238] sm:$0xff]
    %v1189 = vld [vmem:[#allocation2 + $0x240] sm:$0xff]
    %v1190 = vld [vmem:[#allocation2 + $0x248] sm:$0xff]
    %v1191 = vld [vmem:[#allocation2 + $0x250] sm:$0xff]
    %v1192 = vld [vmem:[#allocation2 + $0x258] sm:$0xff]
    %v1193 = vld [vmem:[#allocation2 + $0x260] sm:$0xff]
    %v1194 = vld [vmem:[#allocation2 + $0x268] sm:$0xff]
    %v1195 = vld [vmem:[#allocation2 + $0x270] sm:$0xff]
    %v1196 = vld [vmem:[#allocation2 + $0x278] sm:$0xff]
    %v1197 = vld [vmem:[#allocation2 + $0x280] sm:$0xff]
    %v1198 = vld [vmem:[#allocation2 + $0x288] sm:$0xff]
    %v1199 = vld [vmem:[#allocation2 + $0x290] sm:$0xff]
    %v1200 = vld [vmem:[#allocation2 + $0x298] sm:$0xff]
    %v1201 = vld [vmem:[#allocation2 + $0x2a0] sm:$0xff]
    %v1202 = vld [vmem:[#allocation2 + $0x2a8] sm:$0xff]
    %v1203 = vld [vmem:[#allocation2 + $0x2b0] sm:$0xff]
    %v1204 = vld [vmem:[#allocation2 + $0x2b8] sm:$0xff]
    %v1205 = vld [vmem:[#allocation2 + $0x2c0] sm:$0xff]
    %v1206 = vld [vmem:[#allocation2 + $0x2c8] sm:$0xff]
    %v1207 = vld [vmem:[#allocation2 + $0x2d0] sm:$0xff]
    %v1208 = vld [vmem:[#allocation2 + $0x2d8] sm:$0xff]
    %v1209 = vld [vmem:[#allocation2 + $0x2e0] sm:$0xff]
    %v1210 = vld [vmem:[#allocation2 + $0x2e8] sm:$0xff]
    %v1211 = vld [vmem:[#allocation2 + $0x2f0] sm:$0xff]
    %v1212 = vld [vmem:[#allocation2 + $0x2f8] sm:$0xff]
    %v1213 = vld [vmem:[#allocation2 + $0x300] sm:$0xff]
    %v1214 = vld [vmem:[#allocation2 + $0x308] sm:$0xff]
    %v1215 = vld [vmem:[#allocation2 + $0x310] sm:$0xff]
    %v1216 = vld [vmem:[#allocation2 + $0x318] sm:$0xff]
    %v1217 = vld [vmem:[#allocation2 + $0x320] sm:$0xff]
    %v1218 = vld [vmem:[#allocation2 + $0x328] sm:$0xff]
    %v1219 = vld [vmem:[#allocation2 + $0x330] sm:$0xff]
    %v1220 = vld [vmem:[#allocation2 + $0x338] sm:$0xff]
    %v1221 = vld [vmem:[#allocation2 + $0x340] sm:$0xff]
    %v1222 = vld [vmem:[#allocation2 + $0x348] sm:$0xff]
    %v1223 = vld [vmem:[#allocation2 + $0x350] sm:$0xff]
    %v1224 = vld [vmem:[#allocation2 + $0x358] sm:$0xff]
    %v1225 = vld [vmem:[#allocation2 + $0x360] sm:$0xff]
    %v1226 = vld [vmem:[#allocation2 + $0x368] sm:$0xff]
    %v1227 = vld [vmem:[#allocation2 + $0x370] sm:$0xff]
    %v1228 = vld [vmem:[#allocation2 + $0x378] sm:$0xff]
    %v1229 = vld [vmem:[#allocation2 + $0x380] sm:$0xff]
    %v1230 = vld [vmem:[#allocation2 + $0x388] sm:$0xff]
    %v1231 = vld [vmem:[#allocation2 + $0x390] sm:$0xff]
    %v1232 = vld [vmem:[#allocation2 + $0x398] sm:$0xff]
    %v1233 = vld [vmem:[#allocation2 + $0x3a0] sm:$0xff]
    %v1234 = vld [vmem:[#allocation2 + $0x3a8] sm:$0xff]
    %v1235 = vld [vmem:[#allocation2 + $0x3b0] sm:$0xff]
    %v1236 = vld [vmem:[#allocation2 + $0x3b8] sm:$0xff]
    %v1237 = vld [vmem:[#allocation2 + $0x3c0] sm:$0xff]
    %v1238 = vld [vmem:[#allocation2 + $0x3c8] sm:$0xff]
    %v1239 = vld [vmem:[#allocation2 + $0x3d0] sm:$0xff]
    %v1240 = vld [vmem:[#allocation2 + $0x3d8] sm:$0xff]
    %v1241 = vld [vmem:[#allocation2 + $0x3e0] sm:$0xff]
    %v1242 = vld [vmem:[#allocation2 + $0x3e8] sm:$0xff]
    %v1243 = vld [vmem:[#allocation2 + $0x3f0] sm:$0xff]
    %v1244 = vld [vmem:[#allocation2 + $0x3f8] sm:$0xff]
    %v1245 = vld [vmem:[#allocation2 + $0x400] sm:$0xff]
    %v1246 = vld [vmem:[#allocation2 + $0x408] sm:$0xff]
    %v1247 = vld [vmem:[#allocation2 + $0x410] sm:$0xff]
    %v1248 = vld [vmem:[#allocation2 + $0x418] sm:$0xff]
    %v1249 = vld [vmem:[#allocation2 + $0x420] sm:$0xff]
    %v1250 = vld [vmem:[#allocation2 + $0x428] sm:$0xff]
    %v1251 = vld [vmem:[#allocation2 + $0x430] sm:$0xff]
    %v1252 = vld [vmem:[#allocation2 + $0x438] sm:$0xff]
    %v1253 = vld [vmem:[#allocation2 + $0x440] sm:$0xff]
    %v1254 = vld [vmem:[#allocation2 + $0x448] sm:$0xff]
    %v1255 = vld [vmem:[#allocation2 + $0x450] sm:$0xff]
    %v1256 = vld [vmem:[#allocation2 + $0x458] sm:$0xff]
    %v1257 = vld [vmem:[#allocation2 + $0x460] sm:$0xff]
    %v1258 = vld [vmem:[#allocation2 + $0x468] sm:$0xff]
    %v1259 = vld [vmem:[#allocation2 + $0x470] sm:$0xff]
    %v1260 = vld [vmem:[#allocation2 + $0x478] sm:$0xff]
    %v1261 = vld [vmem:[#allocation2 + $0x480] sm:$0xff]
    %v1262 = vld [vmem:[#allocation2 + $0x488] sm:$0xff]
    %v1263 = vld [vmem:[#allocation2 + $0x490] sm:$0xff]
    %v1264 = vld [vmem:[#allocation2 + $0x498] sm:$0xff]
    %v1265 = vld [vmem:[#allocation2 + $0x4a0] sm:$0xff]
    %v1266 = vld [vmem:[#allocation2 + $0x4a8] sm:$0xff]
    %v1267 = vld [vmem:[#allocation2 + $0x4b0] sm:$0xff]
    %v1268 = vld [vmem:[#allocation2 + $0x4b8] sm:$0xff]
    %v1269 = vld [vmem:[#allocation2 + $0x4c0] sm:$0xff]
    %v1270 = vld [vmem:[#allocation2 + $0x4c8] sm:$0xff]
    %v1271 = vld [vmem:[#allocation2 + $0x4d0] sm:$0xff]
    %v1272 = vld [vmem:[#allocation2 + $0x4d8] sm:$0xff]
    %v1273 = vld [vmem:[#allocation2 + $0x4e0] sm:$0xff]
    %v1274 = vld [vmem:[#allocation2 + $0x4e8] sm:$0xff]
    %v1275 = vld [vmem:[#allocation2 + $0x4f0] sm:$0xff]
    %v1276 = vld [vmem:[#allocation2 + $0x4f8] sm:$0xff]
    %v1277 = vld [vmem:[#allocation2 + $0x500] sm:$0xff]
    %v1278 = vld [vmem:[#allocation2 + $0x508] sm:$0xff]
    %v1279 = vld [vmem:[#allocation2 + $0x510] sm:$0xff]
    %v1280 = vld [vmem:[#allocation2 + $0x518] sm:$0xff]
    %v1281 = vld [vmem:[#allocation2 + $0x520] sm:$0xff]
    %v1282 = vld [vmem:[#allocation2 + $0x528] sm:$0xff]
    %v1283 = vld [vmem:[#allocation2 + $0x530] sm:$0xff]
    %v1284 = vld [vmem:[#allocation2 + $0x538] sm:$0xff]
    %v1285 = vld [vmem:[#allocation2 + $0x540] sm:$0xff]
    %v1286 = vld [vmem:[#allocation2 + $0x548] sm:$0xff]
    %v1287 = vld [vmem:[#allocation2 + $0x550] sm:$0xff]
    %v1288 = vld [vmem:[#allocation2 + $0x558] sm:$0xff]
    %v1289 = vld [vmem:[#allocation2 + $0x560] sm:$0xff]
    %v1290 = vld [vmem:[#allocation2 + $0x568] sm:$0xff]
    %v1291 = vld [vmem:[#allocation2 + $0x570] sm:$0xff]
    %v1292 = vld [vmem:[#allocation2 + $0x578] sm:$0xff]
    %v1293 = vld [vmem:[#allocation2 + $0x580] sm:$0xff]
    %v1294 = vld [vmem:[#allocation2 + $0x588] sm:$0xff]
    %v1295 = vld [vmem:[#allocation2 + $0x590] sm:$0xff]
    %v1296 = vld [vmem:[#allocation2 + $0x598] sm:$0xff]
    %v1297 = vld [vmem:[#allocation2 + $0x5a0] sm:$0xff]
    %v1298 = vld [vmem:[#allocation2 + $0x5a8] sm:$0xff]
    %v1299 = vld [vmem:[#allocation2 + $0x5b0] sm:$0xff]
    %v1300 = vld [vmem:[#allocation2 + $0x5b8] sm:$0xff]
    %v1301 = vld [vmem:[#allocation2 + $0x5c0] sm:$0xff]
    %v1302 = vld [vmem:[#allocation2 + $0x5c8] sm:$0xff]
    %v1303 = vld [vmem:[#allocation2 + $0x5d0] sm:$0xff]
    %v1304 = vld [vmem:[#allocation2 + $0x5d8] sm:$0xff]
    %v1305 = vld [vmem:[#allocation2 + $0x5e0] sm:$0xff]
    %v1306 = vld [vmem:[#allocation2 + $0x5e8] sm:$0xff]
    %v1307 = vld [vmem:[#allocation2 + $0x5f0] sm:$0xff]
    %v1308 = vld [vmem:[#allocation2 + $0x5f8] sm:$0xff]
    %v1309 = vld [vmem:[#allocation2 + $0x600] sm:$0xff]
    %v1310 = vld [vmem:[#allocation2 + $0x608] sm:$0xff]
    %v1311 = vld [vmem:[#allocation2 + $0x610] sm:$0xff]
    %v1312 = vld [vmem:[#allocation2 + $0x618] sm:$0xff]
    %v1313 = vld [vmem:[#allocation2 + $0x620] sm:$0xff]
    %v1314 = vld [vmem:[#allocation2 + $0x628] sm:$0xff]
    %v1315 = vld [vmem:[#allocation2 + $0x630] sm:$0xff]
    %v1316 = vld [vmem:[#allocation2 + $0x638] sm:$0xff]
    %v1317 = vld [vmem:[#allocation2 + $0x640] sm:$0xff]
    %v1318 = vld [vmem:[#allocation2 + $0x648] sm:$0xff]
    %v1319 = vld [vmem:[#allocation2 + $0x650] sm:$0xff]
    %v1320 = vld [vmem:[#allocation2 + $0x658] sm:$0xff]
    %v1321 = vld [vmem:[#allocation2 + $0x660] sm:$0xff]
    %v1322 = vld [vmem:[#allocation2 + $0x668] sm:$0xff]
    %v1323 = vld [vmem:[#allocation2 + $0x670] sm:$0xff]
    %v1324 = vld [vmem:[#allocation2 + $0x678] sm:$0xff]
    %v1325 = vld [vmem:[#allocation2 + $0x680] sm:$0xff]
    %v1326 = vld [vmem:[#allocation2 + $0x688] sm:$0xff]
    %v1327 = vld [vmem:[#allocation2 + $0x690] sm:$0xff]
    %v1328 = vld [vmem:[#allocation2 + $0x698] sm:$0xff]
    %v1329 = vld [vmem:[#allocation2 + $0x6a0] sm:$0xff]
    %v1330 = vld [vmem:[#allocation2 + $0x6a8] sm:$0xff]
    %v1331 = vld [vmem:[#allocation2 + $0x6b0] sm:$0xff]
    %v1332 = vld [vmem:[#allocation2 + $0x6b8] sm:$0xff]
    %v1333 = vld [vmem:[#allocation2 + $0x6c0] sm:$0xff]
    %v1334 = vld [vmem:[#allocation2 + $0x6c8] sm:$0xff]
    %v1335 = vld [vmem:[#allocation2 + $0x6d0] sm:$0xff]
    %v1336 = vld [vmem:[#allocation2 + $0x6d8] sm:$0xff]
    %v1337 = vld [vmem:[#allocation2 + $0x6e0] sm:$0xff]
    %v1338 = vld [vmem:[#allocation2 + $0x6e8] sm:$0xff]
    %v1339 = vld [vmem:[#allocation2 + $0x6f0] sm:$0xff]
    %v1340 = vld [vmem:[#allocation2 + $0x6f8] sm:$0xff]
    %v1341 = vld [vmem:[#allocation2 + $0x700] sm:$0xff]
    %v1342 = vld [vmem:[#allocation2 + $0x708] sm:$0xff]
    %v1343 = vld [vmem:[#allocation2 + $0x710] sm:$0xff]
    %v1344 = vld [vmem:[#allocation2 + $0x718] sm:$0xff]
    %v1345 = vld [vmem:[#allocation2 + $0x720] sm:$0xff]
    %v1346 = vld [vmem:[#allocation2 + $0x728] sm:$0xff]
    %v1347 = vld [vmem:[#allocation2 + $0x730] sm:$0xff]
    %v1348 = vld [vmem:[#allocation2 + $0x738] sm:$0xff]
    %v1349 = vld [vmem:[#allocation2 + $0x740] sm:$0xff]
    %v1350 = vld [vmem:[#allocation2 + $0x748] sm:$0xff]
    %v1351 = vld [vmem:[#allocation2 + $0x750] sm:$0xff]
    %v1352 = vld [vmem:[#allocation2 + $0x758] sm:$0xff]
    %v1353 = vld [vmem:[#allocation2 + $0x760] sm:$0xff]
    %v1354 = vld [vmem:[#allocation2 + $0x768] sm:$0xff]
    %v1355 = vld [vmem:[#allocation2 + $0x770] sm:$0xff]
    %v1356 = vld [vmem:[#allocation2 + $0x778] sm:$0xff]
    %v1357 = vld [vmem:[#allocation2 + $0x780] sm:$0xff]
    %v1358 = vld [vmem:[#allocation2 + $0x788] sm:$0xff]
    %v1359 = vld [vmem:[#allocation2 + $0x790] sm:$0xff]
    %v1360 = vld [vmem:[#allocation2 + $0x798] sm:$0xff]
    %v1361 = vld [vmem:[#allocation2 + $0x7a0] sm:$0xff]
    %v1362 = vld [vmem:[#allocation2 + $0x7a8] sm:$0xff]
    %v1363 = vld [vmem:[#allocation2 + $0x7b0] sm:$0xff]
    %v1364 = vld [vmem:[#allocation2 + $0x7b8] sm:$0xff]
    %v1365 = vld [vmem:[#allocation2 + $0x7c0] sm:$0xff]
    %v1366 = vld [vmem:[#allocation2 + $0x7c8] sm:$0xff]
    %v1367 = vld [vmem:[#allocation2 + $0x7d0] sm:$0xff]
    %v1368 = vld [vmem:[#allocation2 + $0x7d8] sm:$0xff]
    %v1369 = vld [vmem:[#allocation2 + $0x7e0] sm:$0xff]
    %v1370 = vld [vmem:[#allocation2 + $0x7e8] sm:$0xff]
    %v1371 = vld [vmem:[#allocation2 + $0x7f0] sm:$0xff]
    %v1372 = vld [vmem:[#allocation2 + $0x7f8] sm:$0xff]
    %v1373 = vpack.c.bf16 %v1109, %v1109
    %v1374 = vpack.c.bf16 %v1110, %v1110
    %v1375 = vpack.c.bf16 %v1111, %v1111
    %v1376 = vpack.c.bf16 %v1112, %v1112
    %v1633 = vunpack.c.l.b16 %v1117
    %v1634 = vunpack.c.h.b16 %v1117
    %v1635 = vunpack.c.l.b16 %v1118
    %v1636 = vunpack.c.h.b16 %v1118
    %v1637 = vunpack.c.l.b16 %v1119
    %v1638 = vunpack.c.h.b16 %v1119
    %v1639 = vunpack.c.l.b16 %v1120
    %v1640 = vunpack.c.h.b16 %v1120
    %v1641 = vunpack.c.l.b16 %v1121
    %v1642 = vunpack.c.h.b16 %v1121
    %v1643 = vunpack.c.l.b16 %v1122
    %v1644 = vunpack.c.h.b16 %v1122
    %v1645 = vunpack.c.l.b16 %v1123
    %v1646 = vunpack.c.h.b16 %v1123
    %v1647 = vunpack.c.l.b16 %v1124
    %v1648 = vunpack.c.h.b16 %v1124
    %v1649 = vunpack.c.l.b16 %v1125
    %v1650 = vunpack.c.h.b16 %v1125
    %v1651 = vunpack.c.l.b16 %v1126
    %v1652 = vunpack.c.h.b16 %v1126
    %v1653 = vunpack.c.l.b16 %v1127
    %v1654 = vunpack.c.h.b16 %v1127
    %v1655 = vunpack.c.l.b16 %v1128
    %v1656 = vunpack.c.h.b16 %v1128
    %v1657 = vunpack.c.l.b16 %v1129
    %v1658 = vunpack.c.h.b16 %v1129
    %v1659 = vunpack.c.l.b16 %v1130
    %v1660 = vunpack.c.h.b16 %v1130
    %v1661 = vunpack.c.l.b16 %v1131
    %v1662 = vunpack.c.h.b16 %v1131
    %v1663 = vunpack.c.l.b16 %v1132
    %v1664 = vunpack.c.h.b16 %v1132
    %v1665 = vunpack.c.l.b16 %v1133
    %v1666 = vunpack.c.h.b16 %v1133
    %v1667 = vunpack.c.l.b16 %v1134
    %v1668 = vunpack.c.h.b16 %v1134
    %v1669 = vunpack.c.l.b16 %v1135
    %v1670 = vunpack.c.h.b16 %v1135
    %v1671 = vunpack.c.l.b16 %v1136
    %v1672 = vunpack.c.h.b16 %v1136
    %v1673 = vunpack.c.l.b16 %v1137
    %v1674 = vunpack.c.h.b16 %v1137
    %v1675 = vunpack.c.l.b16 %v1138
    %v1676 = vunpack.c.h.b16 %v1138
    %v1677 = vunpack.c.l.b16 %v1139
    %v1678 = vunpack.c.h.b16 %v1139
    %v1679 = vunpack.c.l.b16 %v1140
    %v1680 = vunpack.c.h.b16 %v1140
    %v1681 = vunpack.c.l.b16 %v1141
    %v1682 = vunpack.c.h.b16 %v1141
    %v1683 = vunpack.c.l.b16 %v1142
    %v1684 = vunpack.c.h.b16 %v1142
    %v1685 = vunpack.c.l.b16 %v1143
    %v1686 = vunpack.c.h.b16 %v1143
    %v1687 = vunpack.c.l.b16 %v1144
    %v1688 = vunpack.c.h.b16 %v1144
    %v1689 = vunpack.c.l.b16 %v1145
    %v1690 = vunpack.c.h.b16 %v1145
    %v1691 = vunpack.c.l.b16 %v1146
    %v1692 = vunpack.c.h.b16 %v1146
    %v1693 = vunpack.c.l.b16 %v1147
    %v1694 = vunpack.c.h.b16 %v1147
    %v1695 = vunpack.c.l.b16 %v1148
    %v1696 = vunpack.c.h.b16 %v1148
    %v1697 = vunpack.c.l.b16 %v1149
    %v1698 = vunpack.c.h.b16 %v1149
    %v1699 = vunpack.c.l.b16 %v1150
    %v1700 = vunpack.c.h.b16 %v1150
    %v1701 = vunpack.c.l.b16 %v1151
    %v1702 = vunpack.c.h.b16 %v1151
    %v1703 = vunpack.c.l.b16 %v1152
    %v1704 = vunpack.c.h.b16 %v1152
    %v1705 = vunpack.c.l.b16 %v1153
    %v1706 = vunpack.c.h.b16 %v1153
    %v1707 = vunpack.c.l.b16 %v1154
    %v1708 = vunpack.c.h.b16 %v1154
    %v1709 = vunpack.c.l.b16 %v1155
    %v1710 = vunpack.c.h.b16 %v1155
    %v1711 = vunpack.c.l.b16 %v1156
    %v1712 = vunpack.c.h.b16 %v1156
    %v1713 = vunpack.c.l.b16 %v1157
    %v1714 = vunpack.c.h.b16 %v1157
    %v1715 = vunpack.c.l.b16 %v1158
    %v1716 = vunpack.c.h.b16 %v1158
    %v1717 = vunpack.c.l.b16 %v1159
    %v1718 = vunpack.c.h.b16 %v1159
    %v1719 = vunpack.c.l.b16 %v1160
    %v1720 = vunpack.c.h.b16 %v1160
    %v1721 = vunpack.c.l.b16 %v1161
    %v1722 = vunpack.c.h.b16 %v1161
    %v1723 = vunpack.c.l.b16 %v1162
    %v1724 = vunpack.c.h.b16 %v1162
    %v1725 = vunpack.c.l.b16 %v1163
    %v1726 = vunpack.c.h.b16 %v1163
    %v1727 = vunpack.c.l.b16 %v1164
    %v1728 = vunpack.c.h.b16 %v1164
    %v1729 = vunpack.c.l.b16 %v1165
    %v1730 = vunpack.c.h.b16 %v1165
    %v1731 = vunpack.c.l.b16 %v1166
    %v1732 = vunpack.c.h.b16 %v1166
    %v1733 = vunpack.c.l.b16 %v1167
    %v1734 = vunpack.c.h.b16 %v1167
    %v1735 = vunpack.c.l.b16 %v1168
    %v1736 = vunpack.c.h.b16 %v1168
    %v1737 = vunpack.c.l.b16 %v1169
    %v1738 = vunpack.c.h.b16 %v1169
    %v1739 = vunpack.c.l.b16 %v1170
    %v1740 = vunpack.c.h.b16 %v1170
    %v1741 = vunpack.c.l.b16 %v1171
    %v1742 = vunpack.c.h.b16 %v1171
    %v1743 = vunpack.c.l.b16 %v1172
    %v1744 = vunpack.c.h.b16 %v1172
    %v1745 = vunpack.c.l.b16 %v1173
    %v1746 = vunpack.c.h.b16 %v1173
    %v1747 = vunpack.c.l.b16 %v1174
    %v1748 = vunpack.c.h.b16 %v1174
    %v1749 = vunpack.c.l.b16 %v1175
    %v1750 = vunpack.c.h.b16 %v1175
    %v1751 = vunpack.c.l.b16 %v1176
    %v1752 = vunpack.c.h.b16 %v1176
    %v1753 = vunpack.c.l.b16 %v1177
    %v1754 = vunpack.c.h.b16 %v1177
    %v1755 = vunpack.c.l.b16 %v1178
    %v1756 = vunpack.c.h.b16 %v1178
    %v1757 = vunpack.c.l.b16 %v1179
    %v1758 = vunpack.c.h.b16 %v1179
    %v1759 = vunpack.c.l.b16 %v1180
    %v1760 = vunpack.c.h.b16 %v1180
    %v1761 = vunpack.c.l.b16 %v1181
    %v1762 = vunpack.c.h.b16 %v1181
    %v1763 = vunpack.c.l.b16 %v1182
    %v1764 = vunpack.c.h.b16 %v1182
    %v1765 = vunpack.c.l.b16 %v1183
    %v1766 = vunpack.c.h.b16 %v1183
    %v1767 = vunpack.c.l.b16 %v1184
    %v1768 = vunpack.c.h.b16 %v1184
    %v1769 = vunpack.c.l.b16 %v1185
    %v1770 = vunpack.c.h.b16 %v1185
    %v1771 = vunpack.c.l.b16 %v1186
    %v1772 = vunpack.c.h.b16 %v1186
    %v1773 = vunpack.c.l.b16 %v1187
    %v1774 = vunpack.c.h.b16 %v1187
    %v1775 = vunpack.c.l.b16 %v1188
    %v1776 = vunpack.c.h.b16 %v1188
    %v1777 = vunpack.c.l.b16 %v1189
    %v1778 = vunpack.c.h.b16 %v1189
    %v1779 = vunpack.c.l.b16 %v1190
    %v1780 = vunpack.c.h.b16 %v1190
    %v1781 = vunpack.c.l.b16 %v1191
    %v1782 = vunpack.c.h.b16 %v1191
    %v1783 = vunpack.c.l.b16 %v1192
    %v1784 = vunpack.c.h.b16 %v1192
    %v1785 = vunpack.c.l.b16 %v1193
    %v1786 = vunpack.c.h.b16 %v1193
    %v1787 = vunpack.c.l.b16 %v1194
    %v1788 = vunpack.c.h.b16 %v1194
    %v1789 = vunpack.c.l.b16 %v1195
    %v1790 = vunpack.c.h.b16 %v1195
    %v1791 = vunpack.c.l.b16 %v1196
    %v1792 = vunpack.c.h.b16 %v1196
    %v1793 = vunpack.c.l.b16 %v1197
    %v1794 = vunpack.c.h.b16 %v1197
    %v1795 = vunpack.c.l.b16 %v1198
    %v1796 = vunpack.c.h.b16 %v1198
    %v1797 = vunpack.c.l.b16 %v1199
    %v1798 = vunpack.c.h.b16 %v1199
    %v1799 = vunpack.c.l.b16 %v1200
    %v1800 = vunpack.c.h.b16 %v1200
    %v1801 = vunpack.c.l.b16 %v1201
    %v1802 = vunpack.c.h.b16 %v1201
    %v1803 = vunpack.c.l.b16 %v1202
    %v1804 = vunpack.c.h.b16 %v1202
    %v1805 = vunpack.c.l.b16 %v1203
    %v1806 = vunpack.c.h.b16 %v1203
    %v1807 = vunpack.c.l.b16 %v1204
    %v1808 = vunpack.c.h.b16 %v1204
    %v1809 = vunpack.c.l.b16 %v1205
    %v1810 = vunpack.c.h.b16 %v1205
    %v1811 = vunpack.c.l.b16 %v1206
    %v1812 = vunpack.c.h.b16 %v1206
    %v1813 = vunpack.c.l.b16 %v1207
    %v1814 = vunpack.c.h.b16 %v1207
    %v1815 = vunpack.c.l.b16 %v1208
    %v1816 = vunpack.c.h.b16 %v1208
    %v1817 = vunpack.c.l.b16 %v1209
    %v1818 = vunpack.c.h.b16 %v1209
    %v1819 = vunpack.c.l.b16 %v1210
    %v1820 = vunpack.c.h.b16 %v1210
    %v1821 = vunpack.c.l.b16 %v1211
    %v1822 = vunpack.c.h.b16 %v1211
    %v1823 = vunpack.c.l.b16 %v1212
    %v1824 = vunpack.c.h.b16 %v1212
    %v1825 = vunpack.c.l.b16 %v1213
    %v1826 = vunpack.c.h.b16 %v1213
    %v1827 = vunpack.c.l.b16 %v1214
    %v1828 = vunpack.c.h.b16 %v1214
    %v1829 = vunpack.c.l.b16 %v1215
    %v1830 = vunpack.c.h.b16 %v1215
    %v1831 = vunpack.c.l.b16 %v1216
    %v1832 = vunpack.c.h.b16 %v1216
    %v1833 = vunpack.c.l.b16 %v1217
    %v1834 = vunpack.c.h.b16 %v1217
    %v1835 = vunpack.c.l.b16 %v1218
    %v1836 = vunpack.c.h.b16 %v1218
    %v1837 = vunpack.c.l.b16 %v1219
    %v1838 = vunpack.c.h.b16 %v1219
    %v1839 = vunpack.c.l.b16 %v1220
    %v1840 = vunpack.c.h.b16 %v1220
    %v1841 = vunpack.c.l.b16 %v1221
    %v1842 = vunpack.c.h.b16 %v1221
    %v1843 = vunpack.c.l.b16 %v1222
    %v1844 = vunpack.c.h.b16 %v1222
    %v1845 = vunpack.c.l.b16 %v1223
    %v1846 = vunpack.c.h.b16 %v1223
    %v1847 = vunpack.c.l.b16 %v1224
    %v1848 = vunpack.c.h.b16 %v1224
    %v1849 = vunpack.c.l.b16 %v1225
    %v1850 = vunpack.c.h.b16 %v1225
    %v1851 = vunpack.c.l.b16 %v1226
    %v1852 = vunpack.c.h.b16 %v1226
    %v1853 = vunpack.c.l.b16 %v1227
    %v1854 = vunpack.c.h.b16 %v1227
    %v1855 = vunpack.c.l.b16 %v1228
    %v1856 = vunpack.c.h.b16 %v1228
    %v1857 = vunpack.c.l.b16 %v1229
    %v1858 = vunpack.c.h.b16 %v1229
    %v1859 = vunpack.c.l.b16 %v1230
    %v1860 = vunpack.c.h.b16 %v1230
    %v1861 = vunpack.c.l.b16 %v1231
    %v1862 = vunpack.c.h.b16 %v1231
    %v1863 = vunpack.c.l.b16 %v1232
    %v1864 = vunpack.c.h.b16 %v1232
    %v1865 = vunpack.c.l.b16 %v1233
    %v1866 = vunpack.c.h.b16 %v1233
    %v1867 = vunpack.c.l.b16 %v1234
    %v1868 = vunpack.c.h.b16 %v1234
    %v1869 = vunpack.c.l.b16 %v1235
    %v1870 = vunpack.c.h.b16 %v1235
    %v1871 = vunpack.c.l.b16 %v1236
    %v1872 = vunpack.c.h.b16 %v1236
    %v1873 = vunpack.c.l.b16 %v1237
    %v1874 = vunpack.c.h.b16 %v1237
    %v1875 = vunpack.c.l.b16 %v1238
    %v1876 = vunpack.c.h.b16 %v1238
    %v1877 = vunpack.c.l.b16 %v1239
    %v1878 = vunpack.c.h.b16 %v1239
    %v1879 = vunpack.c.l.b16 %v1240
    %v1880 = vunpack.c.h.b16 %v1240
    %v1881 = vunpack.c.l.b16 %v1241
    %v1882 = vunpack.c.h.b16 %v1241
    %v1883 = vunpack.c.l.b16 %v1242
    %v1884 = vunpack.c.h.b16 %v1242
    %v1885 = vunpack.c.l.b16 %v1243
    %v1886 = vunpack.c.h.b16 %v1243
    %v1887 = vunpack.c.l.b16 %v1244
    %v1888 = vunpack.c.h.b16 %v1244
    %v1889 = vunpack.c.l.b16 %v1245
    %v1890 = vunpack.c.h.b16 %v1245
    %v1891 = vunpack.c.l.b16 %v1246
    %v1892 = vunpack.c.h.b16 %v1246
    %v1893 = vunpack.c.l.b16 %v1247
    %v1894 = vunpack.c.h.b16 %v1247
    %v1895 = vunpack.c.l.b16 %v1248
    %v1896 = vunpack.c.h.b16 %v1248
    %v1897 = vunpack.c.l.b16 %v1249
    %v1898 = vunpack.c.h.b16 %v1249
    %v1899 = vunpack.c.l.b16 %v1250
    %v1900 = vunpack.c.h.b16 %v1250
    %v1901 = vunpack.c.l.b16 %v1251
    %v1902 = vunpack.c.h.b16 %v1251
    %v1903 = vunpack.c.l.b16 %v1252
    %v1904 = vunpack.c.h.b16 %v1252
    %v1905 = vunpack.c.l.b16 %v1253
    %v1906 = vunpack.c.h.b16 %v1253
    %v1907 = vunpack.c.l.b16 %v1254
    %v1908 = vunpack.c.h.b16 %v1254
    %v1909 = vunpack.c.l.b16 %v1255
    %v1910 = vunpack.c.h.b16 %v1255
    %v1911 = vunpack.c.l.b16 %v1256
    %v1912 = vunpack.c.h.b16 %v1256
    %v1913 = vunpack.c.l.b16 %v1257
    %v1914 = vunpack.c.h.b16 %v1257
    %v1915 = vunpack.c.l.b16 %v1258
    %v1916 = vunpack.c.h.b16 %v1258
    %v1917 = vunpack.c.l.b16 %v1259
    %v1918 = vunpack.c.h.b16 %v1259
    %v1919 = vunpack.c.l.b16 %v1260
    %v1920 = vunpack.c.h.b16 %v1260
    %v1921 = vunpack.c.l.b16 %v1261
    %v1922 = vunpack.c.h.b16 %v1261
    %v1923 = vunpack.c.l.b16 %v1262
    %v1924 = vunpack.c.h.b16 %v1262
    %v1925 = vunpack.c.l.b16 %v1263
    %v1926 = vunpack.c.h.b16 %v1263
    %v1927 = vunpack.c.l.b16 %v1264
    %v1928 = vunpack.c.h.b16 %v1264
    %v1929 = vunpack.c.l.b16 %v1265
    %v1930 = vunpack.c.h.b16 %v1265
    %v1931 = vunpack.c.l.b16 %v1266
    %v1932 = vunpack.c.h.b16 %v1266
    %v1933 = vunpack.c.l.b16 %v1267
    %v1934 = vunpack.c.h.b16 %v1267
    %v1935 = vunpack.c.l.b16 %v1268
    %v1936 = vunpack.c.h.b16 %v1268
    %v1937 = vunpack.c.l.b16 %v1269
    %v1938 = vunpack.c.h.b16 %v1269
    %v1939 = vunpack.c.l.b16 %v1270
    %v1940 = vunpack.c.h.b16 %v1270
    %v1941 = vunpack.c.l.b16 %v1271
    %v1942 = vunpack.c.h.b16 %v1271
    %v1943 = vunpack.c.l.b16 %v1272
    %v1944 = vunpack.c.h.b16 %v1272
    %v1945 = vunpack.c.l.b16 %v1273
    %v1946 = vunpack.c.h.b16 %v1273
    %v1947 = vunpack.c.l.b16 %v1274
    %v1948 = vunpack.c.h.b16 %v1274
    %v1949 = vunpack.c.l.b16 %v1275
    %v1950 = vunpack.c.h.b16 %v1275
    %v1951 = vunpack.c.l.b16 %v1276
    %v1952 = vunpack.c.h.b16 %v1276
    %v1953 = vunpack.c.l.b16 %v1277
    %v1954 = vunpack.c.h.b16 %v1277
    %v1955 = vunpack.c.l.b16 %v1278
    %v1956 = vunpack.c.h.b16 %v1278
    %v1957 = vunpack.c.l.b16 %v1279
    %v1958 = vunpack.c.h.b16 %v1279
    %v1959 = vunpack.c.l.b16 %v1280
    %v1960 = vunpack.c.h.b16 %v1280
    %v1961 = vunpack.c.l.b16 %v1281
    %v1962 = vunpack.c.h.b16 %v1281
    %v1963 = vunpack.c.l.b16 %v1282
    %v1964 = vunpack.c.h.b16 %v1282
    %v1965 = vunpack.c.l.b16 %v1283
    %v1966 = vunpack.c.h.b16 %v1283
    %v1967 = vunpack.c.l.b16 %v1284
    %v1968 = vunpack.c.h.b16 %v1284
    %v1969 = vunpack.c.l.b16 %v1285
    %v1970 = vunpack.c.h.b16 %v1285
    %v1971 = vunpack.c.l.b16 %v1286
    %v1972 = vunpack.c.h.b16 %v1286
    %v1973 = vunpack.c.l.b16 %v1287
    %v1974 = vunpack.c.h.b16 %v1287
    %v1975 = vunpack.c.l.b16 %v1288
    %v1976 = vunpack.c.h.b16 %v1288
    %v1977 = vunpack.c.l.b16 %v1289
    %v1978 = vunpack.c.h.b16 %v1289
    %v1979 = vunpack.c.l.b16 %v1290
    %v1980 = vunpack.c.h.b16 %v1290
    %v1981 = vunpack.c.l.b16 %v1291
    %v1982 = vunpack.c.h.b16 %v1291
    %v1983 = vunpack.c.l.b16 %v1292
    %v1984 = vunpack.c.h.b16 %v1292
    %v1985 = vunpack.c.l.b16 %v1293
    %v1986 = vunpack.c.h.b16 %v1293
    %v1987 = vunpack.c.l.b16 %v1294
    %v1988 = vunpack.c.h.b16 %v1294
    %v1989 = vunpack.c.l.b16 %v1295
    %v1990 = vunpack.c.h.b16 %v1295
    %v1991 = vunpack.c.l.b16 %v1296
    %v1992 = vunpack.c.h.b16 %v1296
    %v1993 = vunpack.c.l.b16 %v1297
    %v1994 = vunpack.c.h.b16 %v1297
    %v1995 = vunpack.c.l.b16 %v1298
    %v1996 = vunpack.c.h.b16 %v1298
    %v1997 = vunpack.c.l.b16 %v1299
    %v1998 = vunpack.c.h.b16 %v1299
    %v1999 = vunpack.c.l.b16 %v1300
    %v2000 = vunpack.c.h.b16 %v1300
    %v2001 = vunpack.c.l.b16 %v1301
    %v2002 = vunpack.c.h.b16 %v1301
    %v2003 = vunpack.c.l.b16 %v1302
    %v2004 = vunpack.c.h.b16 %v1302
    %v2005 = vunpack.c.l.b16 %v1303
    %v2006 = vunpack.c.h.b16 %v1303
    %v2007 = vunpack.c.l.b16 %v1304
    %v2008 = vunpack.c.h.b16 %v1304
    %v2009 = vunpack.c.l.b16 %v1305
    %v2010 = vunpack.c.h.b16 %v1305
    %v2011 = vunpack.c.l.b16 %v1306
    %v2012 = vunpack.c.h.b16 %v1306
    %v2013 = vunpack.c.l.b16 %v1307
    %v2014 = vunpack.c.h.b16 %v1307
    %v2015 = vunpack.c.l.b16 %v1308
    %v2016 = vunpack.c.h.b16 %v1308
    %v2017 = vunpack.c.l.b16 %v1309
    %v2018 = vunpack.c.h.b16 %v1309
    %v2019 = vunpack.c.l.b16 %v1310
    %v2020 = vunpack.c.h.b16 %v1310
    %v2021 = vunpack.c.l.b16 %v1311
    %v2022 = vunpack.c.h.b16 %v1311
    %v2023 = vunpack.c.l.b16 %v1312
    %v2024 = vunpack.c.h.b16 %v1312
    %v2025 = vunpack.c.l.b16 %v1313
    %v2026 = vunpack.c.h.b16 %v1313
    %v2027 = vunpack.c.l.b16 %v1314
    %v2028 = vunpack.c.h.b16 %v1314
    %v2029 = vunpack.c.l.b16 %v1315
    %v2030 = vunpack.c.h.b16 %v1315
    %v2031 = vunpack.c.l.b16 %v1316
    %v2032 = vunpack.c.h.b16 %v1316
    %v2033 = vunpack.c.l.b16 %v1317
    %v2034 = vunpack.c.h.b16 %v1317
    %v2035 = vunpack.c.l.b16 %v1318
    %v2036 = vunpack.c.h.b16 %v1318
    %v2037 = vunpack.c.l.b16 %v1319
    %v2038 = vunpack.c.h.b16 %v1319
    %v2039 = vunpack.c.l.b16 %v1320
    %v2040 = vunpack.c.h.b16 %v1320
    %v2041 = vunpack.c.l.b16 %v1321
    %v2042 = vunpack.c.h.b16 %v1321
    %v2043 = vunpack.c.l.b16 %v1322
    %v2044 = vunpack.c.h.b16 %v1322
    %v2045 = vunpack.c.l.b16 %v1323
    %v2046 = vunpack.c.h.b16 %v1323
    %v2047 = vunpack.c.l.b16 %v1324
    %v2048 = vunpack.c.h.b16 %v1324
    %v2049 = vunpack.c.l.b16 %v1325
    %v2050 = vunpack.c.h.b16 %v1325
    %v2051 = vunpack.c.l.b16 %v1326
    %v2052 = vunpack.c.h.b16 %v1326
    %v2053 = vunpack.c.l.b16 %v1327
    %v2054 = vunpack.c.h.b16 %v1327
    %v2055 = vunpack.c.l.b16 %v1328
    %v2056 = vunpack.c.h.b16 %v1328
    %v2057 = vunpack.c.l.b16 %v1329
    %v2058 = vunpack.c.h.b16 %v1329
    %v2059 = vunpack.c.l.b16 %v1330
    %v2060 = vunpack.c.h.b16 %v1330
    %v2061 = vunpack.c.l.b16 %v1331
    %v2062 = vunpack.c.h.b16 %v1331
    %v2063 = vunpack.c.l.b16 %v1332
    %v2064 = vunpack.c.h.b16 %v1332
    %v2065 = vunpack.c.l.b16 %v1333
    %v2066 = vunpack.c.h.b16 %v1333
    %v2067 = vunpack.c.l.b16 %v1334
    %v2068 = vunpack.c.h.b16 %v1334
    %v2069 = vunpack.c.l.b16 %v1335
    %v2070 = vunpack.c.h.b16 %v1335
    %v2071 = vunpack.c.l.b16 %v1336
    %v2072 = vunpack.c.h.b16 %v1336
    %v2073 = vunpack.c.l.b16 %v1337
    %v2074 = vunpack.c.h.b16 %v1337
    %v2075 = vunpack.c.l.b16 %v1338
    %v2076 = vunpack.c.h.b16 %v1338
    %v2077 = vunpack.c.l.b16 %v1339
    %v2078 = vunpack.c.h.b16 %v1339
    %v2079 = vunpack.c.l.b16 %v1340
    %v2080 = vunpack.c.h.b16 %v1340
    %v2081 = vunpack.c.l.b16 %v1341
    %v2082 = vunpack.c.h.b16 %v1341
    %v2083 = vunpack.c.l.b16 %v1342
    %v2084 = vunpack.c.h.b16 %v1342
    %v2085 = vunpack.c.l.b16 %v1343
    %v2086 = vunpack.c.h.b16 %v1343
    %v2087 = vunpack.c.l.b16 %v1344
    %v2088 = vunpack.c.h.b16 %v1344
    %v2089 = vunpack.c.l.b16 %v1345
    %v2090 = vunpack.c.h.b16 %v1345
    %v2091 = vunpack.c.l.b16 %v1346
    %v2092 = vunpack.c.h.b16 %v1346
    %v2093 = vunpack.c.l.b16 %v1347
    %v2094 = vunpack.c.h.b16 %v1347
    %v2095 = vunpack.c.l.b16 %v1348
    %v2096 = vunpack.c.h.b16 %v1348
    %v2097 = vunpack.c.l.b16 %v1349
    %v2098 = vunpack.c.h.b16 %v1349
    %v2099 = vunpack.c.l.b16 %v1350
    %v2100 = vunpack.c.h.b16 %v1350
    %v2101 = vunpack.c.l.b16 %v1351
    %v2102 = vunpack.c.h.b16 %v1351
    %v2103 = vunpack.c.l.b16 %v1352
    %v2104 = vunpack.c.h.b16 %v1352
    %v2105 = vunpack.c.l.b16 %v1353
    %v2106 = vunpack.c.h.b16 %v1353
    %v2107 = vunpack.c.l.b16 %v1354
    %v2108 = vunpack.c.h.b16 %v1354
    %v2109 = vunpack.c.l.b16 %v1355
    %v2110 = vunpack.c.h.b16 %v1355
    %v2111 = vunpack.c.l.b16 %v1356
    %v2112 = vunpack.c.h.b16 %v1356
    %v2113 = vunpack.c.l.b16 %v1357
    %v2114 = vunpack.c.h.b16 %v1357
    %v2115 = vunpack.c.l.b16 %v1358
    %v2116 = vunpack.c.h.b16 %v1358
    %v2117 = vunpack.c.l.b16 %v1359
    %v2118 = vunpack.c.h.b16 %v1359
    %v2119 = vunpack.c.l.b16 %v1360
    %v2120 = vunpack.c.h.b16 %v1360
    %v2121 = vunpack.c.l.b16 %v1361
    %v2122 = vunpack.c.h.b16 %v1361
    %v2123 = vunpack.c.l.b16 %v1362
    %v2124 = vunpack.c.h.b16 %v1362
    %v2125 = vunpack.c.l.b16 %v1363
    %v2126 = vunpack.c.h.b16 %v1363
    %v2127 = vunpack.c.l.b16 %v1364
    %v2128 = vunpack.c.h.b16 %v1364
    %v2129 = vunpack.c.l.b16 %v1365
    %v2130 = vunpack.c.h.b16 %v1365
    %v2131 = vunpack.c.l.b16 %v1366
    %v2132 = vunpack.c.h.b16 %v1366
    %v2133 = vunpack.c.l.b16 %v1367
    %v2134 = vunpack.c.h.b16 %v1367
    %v2135 = vunpack.c.l.b16 %v1368
    %v2136 = vunpack.c.h.b16 %v1368
    %v2137 = vunpack.c.l.b16 %v1369
    %v2138 = vunpack.c.h.b16 %v1369
    %v2139 = vunpack.c.l.b16 %v1370
    %v2140 = vunpack.c.h.b16 %v1370
    %v2141 = vunpack.c.l.b16 %v1371
    %v2142 = vunpack.c.h.b16 %v1371
    %v2143 = vunpack.c.l.b16 %v1372
    %v2144 = vunpack.c.h.b16 %v1372
    %v2145 = vpack.c.b16 %v1641, %v1633
    %v2146 = vpack.c.b16 %v1642, %v1634
    %v2147 = vpack.c.b16 %v1643, %v1635
    %v2148 = vpack.c.b16 %v1644, %v1636
    %v2149 = vpack.c.b16 %v1645, %v1637
    %v2150 = vpack.c.b16 %v1646, %v1638
    %v2151 = vpack.c.b16 %v1647, %v1639
    %v2152 = vpack.c.b16 %v1648, %v1640
    %v2153 = vpack.c.b16 %v1657, %v1649
    %v2154 = vpack.c.b16 %v1658, %v1650
    %v2155 = vpack.c.b16 %v1659, %v1651
    %v2156 = vpack.c.b16 %v1660, %v1652
    %v2157 = vpack.c.b16 %v1661, %v1653
    %v2158 = vpack.c.b16 %v1662, %v1654
    %v2159 = vpack.c.b16 %v1663, %v1655
    %v2160 = vpack.c.b16 %v1664, %v1656
    %v2161 = vpack.c.b16 %v1673, %v1665
    %v2162 = vpack.c.b16 %v1674, %v1666
    %v2163 = vpack.c.b16 %v1675, %v1667
    %v2164 = vpack.c.b16 %v1676, %v1668
    %v2165 = vpack.c.b16 %v1677, %v1669
    %v2166 = vpack.c.b16 %v1678, %v1670
    %v2167 = vpack.c.b16 %v1679, %v1671
    %v2168 = vpack.c.b16 %v1680, %v1672
    %v2169 = vpack.c.b16 %v1689, %v1681
    %v2170 = vpack.c.b16 %v1690, %v1682
    %v2171 = vpack.c.b16 %v1691, %v1683
    %v2172 = vpack.c.b16 %v1692, %v1684
    %v2173 = vpack.c.b16 %v1693, %v1685
    %v2174 = vpack.c.b16 %v1694, %v1686
    %v2175 = vpack.c.b16 %v1695, %v1687
    %v2176 = vpack.c.b16 %v1696, %v1688
    %v2177 = vpack.c.b16 %v1705, %v1697
    %v2178 = vpack.c.b16 %v1706, %v1698
    %v2179 = vpack.c.b16 %v1707, %v1699
    %v2180 = vpack.c.b16 %v1708, %v1700
    %v2181 = vpack.c.b16 %v1709, %v1701
    %v2182 = vpack.c.b16 %v1710, %v1702
    %v2183 = vpack.c.b16 %v1711, %v1703
    %v2184 = vpack.c.b16 %v1712, %v1704
    %v2185 = vpack.c.b16 %v1721, %v1713
    %v2186 = vpack.c.b16 %v1722, %v1714
    %v2187 = vpack.c.b16 %v1723, %v1715
    %v2188 = vpack.c.b16 %v1724, %v1716
    %v2189 = vpack.c.b16 %v1725, %v1717
    %v2190 = vpack.c.b16 %v1726, %v1718
    %v2191 = vpack.c.b16 %v1727, %v1719
    %v2192 = vpack.c.b16 %v1728, %v1720
    %v2193 = vpack.c.b16 %v1737, %v1729
    %v2194 = vpack.c.b16 %v1738, %v1730
    %v2195 = vpack.c.b16 %v1739, %v1731
    %v2196 = vpack.c.b16 %v1740, %v1732
    %v2197 = vpack.c.b16 %v1741, %v1733
    %v2198 = vpack.c.b16 %v1742, %v1734
    %v2199 = vpack.c.b16 %v1743, %v1735
    %v2200 = vpack.c.b16 %v1744, %v1736
    %v2201 = vpack.c.b16 %v1753, %v1745
    %v2202 = vpack.c.b16 %v1754, %v1746
    %v2203 = vpack.c.b16 %v1755, %v1747
    %v2204 = vpack.c.b16 %v1756, %v1748
    %v2205 = vpack.c.b16 %v1757, %v1749
    %v2206 = vpack.c.b16 %v1758, %v1750
    %v2207 = vpack.c.b16 %v1759, %v1751
    %v2208 = vpack.c.b16 %v1760, %v1752
    %v2209 = vpack.c.b16 %v1769, %v1761
    %v2210 = vpack.c.b16 %v1770, %v1762
    %v2211 = vpack.c.b16 %v1771, %v1763
    %v2212 = vpack.c.b16 %v1772, %v1764
    %v2213 = vpack.c.b16 %v1773, %v1765
    %v2214 = vpack.c.b16 %v1774, %v1766
    %v2215 = vpack.c.b16 %v1775, %v1767
    %v2216 = vpack.c.b16 %v1776, %v1768
    %v2217 = vpack.c.b16 %v1785, %v1777
    %v2218 = vpack.c.b16 %v1786, %v1778
    %v2219 = vpack.c.b16 %v1787, %v1779
    %v2220 = vpack.c.b16 %v1788, %v1780
    %v2221 = vpack.c.b16 %v1789, %v1781
    %v2222 = vpack.c.b16 %v1790, %v1782
    %v2223 = vpack.c.b16 %v1791, %v1783
    %v2224 = vpack.c.b16 %v1792, %v1784
    %v2225 = vpack.c.b16 %v1801, %v1793
    %v2226 = vpack.c.b16 %v1802, %v1794
    %v2227 = vpack.c.b16 %v1803, %v1795
    %v2228 = vpack.c.b16 %v1804, %v1796
    %v2229 = vpack.c.b16 %v1805, %v1797
    %v2230 = vpack.c.b16 %v1806, %v1798
    %v2231 = vpack.c.b16 %v1807, %v1799
    %v2232 = vpack.c.b16 %v1808, %v1800
    %v2233 = vpack.c.b16 %v1817, %v1809
    %v2234 = vpack.c.b16 %v1818, %v1810
    %v2235 = vpack.c.b16 %v1819, %v1811
    %v2236 = vpack.c.b16 %v1820, %v1812
    %v2237 = vpack.c.b16 %v1821, %v1813
    %v2238 = vpack.c.b16 %v1822, %v1814
    %v2239 = vpack.c.b16 %v1823, %v1815
    %v2240 = vpack.c.b16 %v1824, %v1816
    %v2241 = vpack.c.b16 %v1833, %v1825
    %v2242 = vpack.c.b16 %v1834, %v1826
    %v2243 = vpack.c.b16 %v1835, %v1827
    %v2244 = vpack.c.b16 %v1836, %v1828
    %v2245 = vpack.c.b16 %v1837, %v1829
    %v2246 = vpack.c.b16 %v1838, %v1830
    %v2247 = vpack.c.b16 %v1839, %v1831
    %v2248 = vpack.c.b16 %v1840, %v1832
    %v2249 = vpack.c.b16 %v1849, %v1841
    %v2250 = vpack.c.b16 %v1850, %v1842
    %v2251 = vpack.c.b16 %v1851, %v1843
    %v2252 = vpack.c.b16 %v1852, %v1844
    %v2253 = vpack.c.b16 %v1853, %v1845
    %v2254 = vpack.c.b16 %v1854, %v1846
    %v2255 = vpack.c.b16 %v1855, %v1847
    %v2256 = vpack.c.b16 %v1856, %v1848
    %v2257 = vpack.c.b16 %v1865, %v1857
    %v2258 = vpack.c.b16 %v1866, %v1858
    %v2259 = vpack.c.b16 %v1867, %v1859
    %v2260 = vpack.c.b16 %v1868, %v1860
    %v2261 = vpack.c.b16 %v1869, %v1861
    %v2262 = vpack.c.b16 %v1870, %v1862
    %v2263 = vpack.c.b16 %v1871, %v1863
    %v2264 = vpack.c.b16 %v1872, %v1864
    %v2265 = vpack.c.b16 %v1881, %v1873
    %v2266 = vpack.c.b16 %v1882, %v1874
    %v2267 = vpack.c.b16 %v1883, %v1875
    %v2268 = vpack.c.b16 %v1884, %v1876
    %v2269 = vpack.c.b16 %v1885, %v1877
    %v2270 = vpack.c.b16 %v1886, %v1878
    %v2271 = vpack.c.b16 %v1887, %v1879
    %v2272 = vpack.c.b16 %v1888, %v1880
    %v2273 = vpack.c.b16 %v1897, %v1889
    %v2274 = vpack.c.b16 %v1898, %v1890
    %v2275 = vpack.c.b16 %v1899, %v1891
    %v2276 = vpack.c.b16 %v1900, %v1892
    %v2277 = vpack.c.b16 %v1901, %v1893
    %v2278 = vpack.c.b16 %v1902, %v1894
    %v2279 = vpack.c.b16 %v1903, %v1895
    %v2280 = vpack.c.b16 %v1904, %v1896
    %v2281 = vpack.c.b16 %v1913, %v1905
    %v2282 = vpack.c.b16 %v1914, %v1906
    %v2283 = vpack.c.b16 %v1915, %v1907
    %v2284 = vpack.c.b16 %v1916, %v1908
    %v2285 = vpack.c.b16 %v1917, %v1909
    %v2286 = vpack.c.b16 %v1918, %v1910
    %v2287 = vpack.c.b16 %v1919, %v1911
    %v2288 = vpack.c.b16 %v1920, %v1912
    %v2289 = vpack.c.b16 %v1929, %v1921
    %v2290 = vpack.c.b16 %v1930, %v1922
    %v2291 = vpack.c.b16 %v1931, %v1923
    %v2292 = vpack.c.b16 %v1932, %v1924
    %v2293 = vpack.c.b16 %v1933, %v1925
    %v2294 = vpack.c.b16 %v1934, %v1926
    %v2295 = vpack.c.b16 %v1935, %v1927
    %v2296 = vpack.c.b16 %v1936, %v1928
    %v2297 = vpack.c.b16 %v1945, %v1937
    %v2298 = vpack.c.b16 %v1946, %v1938
    %v2299 = vpack.c.b16 %v1947, %v1939
    %v2300 = vpack.c.b16 %v1948, %v1940
    %v2301 = vpack.c.b16 %v1949, %v1941
    %v2302 = vpack.c.b16 %v1950, %v1942
    %v2303 = vpack.c.b16 %v1951, %v1943
    %v2304 = vpack.c.b16 %v1952, %v1944
    %v2305 = vpack.c.b16 %v1961, %v1953
    %v2306 = vpack.c.b16 %v1962, %v1954
    %v2307 = vpack.c.b16 %v1963, %v1955
    %v2308 = vpack.c.b16 %v1964, %v1956
    %v2309 = vpack.c.b16 %v1965, %v1957
    %v2310 = vpack.c.b16 %v1966, %v1958
    %v2311 = vpack.c.b16 %v1967, %v1959
    %v2312 = vpack.c.b16 %v1968, %v1960
    %v2313 = vpack.c.b16 %v1977, %v1969
    %v2314 = vpack.c.b16 %v1978, %v1970
    %v2315 = vpack.c.b16 %v1979, %v1971
    %v2316 = vpack.c.b16 %v1980, %v1972
    %v2317 = vpack.c.b16 %v1981, %v1973
    %v2318 = vpack.c.b16 %v1982, %v1974
    %v2319 = vpack.c.b16 %v1983, %v1975
    %v2320 = vpack.c.b16 %v1984, %v1976
    %v2321 = vpack.c.b16 %v1993, %v1985
    %v2322 = vpack.c.b16 %v1994, %v1986
    %v2323 = vpack.c.b16 %v1995, %v1987
    %v2324 = vpack.c.b16 %v1996, %v1988
    %v2325 = vpack.c.b16 %v1997, %v1989
    %v2326 = vpack.c.b16 %v1998, %v1990
    %v2327 = vpack.c.b16 %v1999, %v1991
    %v2328 = vpack.c.b16 %v2000, %v1992
    %v2329 = vpack.c.b16 %v2009, %v2001
    %v2330 = vpack.c.b16 %v2010, %v2002
    %v2331 = vpack.c.b16 %v2011, %v2003
    %v2332 = vpack.c.b16 %v2012, %v2004
    %v2333 = vpack.c.b16 %v2013, %v2005
    %v2334 = vpack.c.b16 %v2014, %v2006
    %v2335 = vpack.c.b16 %v2015, %v2007
    %v2336 = vpack.c.b16 %v2016, %v2008
    %v2337 = vpack.c.b16 %v2025, %v2017
    %v2338 = vpack.c.b16 %v2026, %v2018
    %v2339 = vpack.c.b16 %v2027, %v2019
    %v2340 = vpack.c.b16 %v2028, %v2020
    %v2341 = vpack.c.b16 %v2029, %v2021
    %v2342 = vpack.c.b16 %v2030, %v2022
    %v2343 = vpack.c.b16 %v2031, %v2023
    %v2344 = vpack.c.b16 %v2032, %v2024
    %v2345 = vpack.c.b16 %v2041, %v2033
    %v2346 = vpack.c.b16 %v2042, %v2034
    %v2347 = vpack.c.b16 %v2043, %v2035
    %v2348 = vpack.c.b16 %v2044, %v2036
    %v2349 = vpack.c.b16 %v2045, %v2037
    %v2350 = vpack.c.b16 %v2046, %v2038
    %v2351 = vpack.c.b16 %v2047, %v2039
    %v2352 = vpack.c.b16 %v2048, %v2040
    %v2353 = vpack.c.b16 %v2057, %v2049
    %v2354 = vpack.c.b16 %v2058, %v2050
    %v2355 = vpack.c.b16 %v2059, %v2051
    %v2356 = vpack.c.b16 %v2060, %v2052
    %v2357 = vpack.c.b16 %v2061, %v2053
    %v2358 = vpack.c.b16 %v2062, %v2054
    %v2359 = vpack.c.b16 %v2063, %v2055
    %v2360 = vpack.c.b16 %v2064, %v2056
    %v2361 = vpack.c.b16 %v2073, %v2065
    %v2362 = vpack.c.b16 %v2074, %v2066
    %v2363 = vpack.c.b16 %v2075, %v2067
    %v2364 = vpack.c.b16 %v2076, %v2068
    %v2365 = vpack.c.b16 %v2077, %v2069
    %v2366 = vpack.c.b16 %v2078, %v2070
    %v2367 = vpack.c.b16 %v2079, %v2071
    %v2368 = vpack.c.b16 %v2080, %v2072
    %v2369 = vpack.c.b16 %v2089, %v2081
    %v2370 = vpack.c.b16 %v2090, %v2082
    %v2371 = vpack.c.b16 %v2091, %v2083
    %v2372 = vpack.c.b16 %v2092, %v2084
    %v2373 = vpack.c.b16 %v2093, %v2085
    %v2374 = vpack.c.b16 %v2094, %v2086
    %v2375 = vpack.c.b16 %v2095, %v2087
    %v2376 = vpack.c.b16 %v2096, %v2088
    %v2377 = vpack.c.b16 %v2105, %v2097
    %v2378 = vpack.c.b16 %v2106, %v2098
    %v2379 = vpack.c.b16 %v2107, %v2099
    %v2380 = vpack.c.b16 %v2108, %v2100
    %v2381 = vpack.c.b16 %v2109, %v2101
    %v2382 = vpack.c.b16 %v2110, %v2102
    %v2383 = vpack.c.b16 %v2111, %v2103
    %v2384 = vpack.c.b16 %v2112, %v2104
    %v2385 = vpack.c.b16 %v2121, %v2113
    %v2386 = vpack.c.b16 %v2122, %v2114
    %v2387 = vpack.c.b16 %v2123, %v2115
    %v2388 = vpack.c.b16 %v2124, %v2116
    %v2389 = vpack.c.b16 %v2125, %v2117
    %v2390 = vpack.c.b16 %v2126, %v2118
    %v2391 = vpack.c.b16 %v2127, %v2119
    %v2392 = vpack.c.b16 %v2128, %v2120
    %v2393 = vpack.c.b16 %v2137, %v2129
    %v2394 = vpack.c.b16 %v2138, %v2130
    %v2395 = vpack.c.b16 %v2139, %v2131
    %v2396 = vpack.c.b16 %v2140, %v2132
    %v2397 = vpack.c.b16 %v2141, %v2133
    %v2398 = vpack.c.b16 %v2142, %v2134
    %v2399 = vpack.c.b16 %v2143, %v2135
    %v2400 = vpack.c.b16 %v2144, %v2136
    %2657 = vmatpush.bf16.msra.mxu0 %v2201
    %2658 = vmatpush.bf16.msra.mxu0 %v2193
    %2659 = vmatpush.bf16.msra.mxu0 %v2185
    %2660 = vmatpush.bf16.msra.mxu0 %v2177
    %2661 = vmatpush.bf16.msra.mxu0 %v2169
    %2662 = vmatpush.bf16.msra.mxu0 %v2161
    %2663 = vmatpush.bf16.msra.mxu0 %v2153
    %2664 = vmatpush.bf16.msra.mxu0 %v2145
    %2665 = vmatmul.bf16.gmra.mxu0 %v1373
    %v2666 = vpop.f32.mrf.mxu0
    %v2667 = vadd.f32 0.0, %v2666
    %v2668 = vpop.f32.mrf.mxu0
    %2669 = vdwg.mxu0
    %2670 = vmatpush.bf16.msra.mxu0 %v2265
    %2671 = vmatpush.bf16.msra.mxu0 %v2257
    %2672 = vmatpush.bf16.msra.mxu0 %v2249
    %2673 = vmatpush.bf16.msra.mxu0 %v2241
    %2674 = vmatpush.bf16.msra.mxu0 %v2233
    %2675 = vmatpush.bf16.msra.mxu0 %v2225
    %2676 = vmatpush.bf16.msra.mxu0 %v2217
    %2677 = vmatpush.bf16.msra.mxu0 %v2209
    %2678 = vmatmul.bf16.gmra.mxu0 %v1374
    %v2679 = vpop.f32.mrf.mxu0
    %v2680 = vadd.f32 %v2667, %v2679
    %v2681 = vpop.f32.mrf.mxu0
    %2682 = vdwg.mxu0
    %2683 = vmatpush.bf16.msra.mxu0 %v2329
    %2684 = vmatpush.bf16.msra.mxu0 %v2321
    %2685 = vmatpush.bf16.msra.mxu0 %v2313
    %2686 = vmatpush.bf16.msra.mxu0 %v2305
    %2687 = vmatpush.bf16.msra.mxu0 %v2297
    %2688 = vmatpush.bf16.msra.mxu0 %v2289
    %2689 = vmatpush.bf16.msra.mxu0 %v2281
    %2690 = vmatpush.bf16.msra.mxu0 %v2273
    %2691 = vmatmul.bf16.gmra.mxu0 %v1375
    %v2692 = vpop.f32.mrf.mxu0
    %v2693 = vadd.f32 %v2680, %v2692
    %v2694 = vpop.f32.mrf.mxu0
    %2695 = vdwg.mxu0
    %2696 = vmatpush.bf16.msra.mxu0 %v2393
    %2697 = vmatpush.bf16.msra.mxu0 %v2385
    %2698 = vmatpush.bf16.msra.mxu0 %v2377
    %2699 = vmatpush.bf16.msra.mxu0 %v2369
    %2700 = vmatpush.bf16.msra.mxu0 %v2361
    %2701 = vmatpush.bf16.msra.mxu0 %v2353
    %2702 = vmatpush.bf16.msra.mxu0 %v2345
    %2703 = vmatpush.bf16.msra.mxu0 %v2337
    %2704 = vmatmul.bf16.gmra.mxu0 %v1376
    %v2705 = vpop.f32.mrf.mxu0
    %v2706 = vadd.f32 %v2693, %v2705
    %v2707 = vpop.f32.mrf.mxu0
    %2708 = vdwg.mxu0
    %2709 = vmatpush.bf16.msra.mxu0 %v2202
    %2710 = vmatpush.bf16.msra.mxu0 %v2194
    %2711 = vmatpush.bf16.msra.mxu0 %v2186
    %2712 = vmatpush.bf16.msra.mxu0 %v2178
    %2713 = vmatpush.bf16.msra.mxu0 %v2170
    %2714 = vmatpush.bf16.msra.mxu0 %v2162
    %2715 = vmatpush.bf16.msra.mxu0 %v2154
    %2716 = vmatpush.bf16.msra.mxu0 %v2146
    %2717 = vmatmul.bf16.gmra.mxu0 %v1373
    %v2718 = vpop.f32.mrf.mxu0
    %v2719 = vadd.f32 0.0, %v2718
    %v2720 = vpop.f32.mrf.mxu0
    %2721 = vdwg.mxu0
    %2722 = vmatpush.bf16.msra.mxu0 %v2266
    %2723 = vmatpush.bf16.msra.mxu0 %v2258
    %2724 = vmatpush.bf16.msra.mxu0 %v2250
    %2725 = vmatpush.bf16.msra.mxu0 %v2242
    %2726 = vmatpush.bf16.msra.mxu0 %v2234
    %2727 = vmatpush.bf16.msra.mxu0 %v2226
    %2728 = vmatpush.bf16.msra.mxu0 %v2218
    %2729 = vmatpush.bf16.msra.mxu0 %v2210
    %2730 = vmatmul.bf16.gmra.mxu0 %v1374
    %v2731 = vpop.f32.mrf.mxu0
    %v2732 = vadd.f32 %v2719, %v2731
    %v2733 = vpop.f32.mrf.mxu0
    %2734 = vdwg.mxu0
    %2735 = vmatpush.bf16.msra.mxu0 %v2330
    %2736 = vmatpush.bf16.msra.mxu0 %v2322
    %2737 = vmatpush.bf16.msra.mxu0 %v2314
    %2738 = vmatpush.bf16.msra.mxu0 %v2306
    %2739 = vmatpush.bf16.msra.mxu0 %v2298
    %2740 = vmatpush.bf16.msra.mxu0 %v2290
    %2741 = vmatpush.bf16.msra.mxu0 %v2282
    %2742 = vmatpush.bf16.msra.mxu0 %v2274
    %2743 = vmatmul.bf16.gmra.mxu0 %v1375
    %v2744 = vpop.f32.mrf.mxu0
    %v2745 = vadd.f32 %v2732, %v2744
    %v2746 = vpop.f32.mrf.mxu0
    %2747 = vdwg.mxu0
    %2748 = vmatpush.bf16.msra.mxu0 %v2394
    %2749 = vmatpush.bf16.msra.mxu0 %v2386
    %2750 = vmatpush.bf16.msra.mxu0 %v2378
    %2751 = vmatpush.bf16.msra.mxu0 %v2370
    %2752 = vmatpush.bf16.msra.mxu0 %v2362
    %2753 = vmatpush.bf16.msra.mxu0 %v2354
    %2754 = vmatpush.bf16.msra.mxu0 %v2346
    %2755 = vmatpush.bf16.msra.mxu0 %v2338
    %2756 = vmatmul.bf16.gmra.mxu0 %v1376
    %v2757 = vpop.f32.mrf.mxu0
    %v2758 = vadd.f32 %v2745, %v2757
    %v2759 = vpop.f32.mrf.mxu0
    %2760 = vdwg.mxu0
    %2761 = vmatpush.bf16.msra.mxu0 %v2203
    %2762 = vmatpush.bf16.msra.mxu0 %v2195
    %2763 = vmatpush.bf16.msra.mxu0 %v2187
    %2764 = vmatpush.bf16.msra.mxu0 %v2179
    %2765 = vmatpush.bf16.msra.mxu0 %v2171
    %2766 = vmatpush.bf16.msra.mxu0 %v2163
    %2767 = vmatpush.bf16.msra.mxu0 %v2155
    %2768 = vmatpush.bf16.msra.mxu0 %v2147
    %2769 = vmatmul.bf16.gmra.mxu0 %v1373
    %v2770 = vpop.f32.mrf.mxu0
    %v2771 = vadd.f32 0.0, %v2770
    %v2772 = vpop.f32.mrf.mxu0
    %2773 = vdwg.mxu0
    %2774 = vmatpush.bf16.msra.mxu0 %v2267
    %2775 = vmatpush.bf16.msra.mxu0 %v2259
    %2776 = vmatpush.bf16.msra.mxu0 %v2251
    %2777 = vmatpush.bf16.msra.mxu0 %v2243
    %2778 = vmatpush.bf16.msra.mxu0 %v2235
    %2779 = vmatpush.bf16.msra.mxu0 %v2227
    %2780 = vmatpush.bf16.msra.mxu0 %v2219
    %2781 = vmatpush.bf16.msra.mxu0 %v2211
    %2782 = vmatmul.bf16.gmra.mxu0 %v1374
    %v2783 = vpop.f32.mrf.mxu0
    %v2784 = vadd.f32 %v2771, %v2783
    %v2785 = vpop.f32.mrf.mxu0
    %2786 = vdwg.mxu0
    %2787 = vmatpush.bf16.msra.mxu0 %v2331
    %2788 = vmatpush.bf16.msra.mxu0 %v2323
    %2789 = vmatpush.bf16.msra.mxu0 %v2315
    %2790 = vmatpush.bf16.msra.mxu0 %v2307
    %2791 = vmatpush.bf16.msra.mxu0 %v2299
    %2792 = vmatpush.bf16.msra.mxu0 %v2291
    %2793 = vmatpush.bf16.msra.mxu0 %v2283
    %2794 = vmatpush.bf16.msra.mxu0 %v2275
    %2795 = vmatmul.bf16.gmra.mxu0 %v1375
    %v2796 = vpop.f32.mrf.mxu0
    %v2797 = vadd.f32 %v2784, %v2796
    %v2798 = vpop.f32.mrf.mxu0
    %2799 = vdwg.mxu0
    %2800 = vmatpush.bf16.msra.mxu0 %v2395
    %2801 = vmatpush.bf16.msra.mxu0 %v2387
    %2802 = vmatpush.bf16.msra.mxu0 %v2379
    %2803 = vmatpush.bf16.msra.mxu0 %v2371
    %2804 = vmatpush.bf16.msra.mxu0 %v2363
    %2805 = vmatpush.bf16.msra.mxu0 %v2355
    %2806 = vmatpush.bf16.msra.mxu0 %v2347
    %2807 = vmatpush.bf16.msra.mxu0 %v2339
    %2808 = vmatmul.bf16.gmra.mxu0 %v1376
    %v2809 = vpop.f32.mrf.mxu0
    %v2810 = vadd.f32 %v2797, %v2809
    %v2811 = vpop.f32.mrf.mxu0
    %2812 = vdwg.mxu0
    %2813 = vmatpush.bf16.msra.mxu0 %v2204
    %2814 = vmatpush.bf16.msra.mxu0 %v2196
    %2815 = vmatpush.bf16.msra.mxu0 %v2188
    %2816 = vmatpush.bf16.msra.mxu0 %v2180
    %2817 = vmatpush.bf16.msra.mxu0 %v2172
    %2818 = vmatpush.bf16.msra.mxu0 %v2164
    %2819 = vmatpush.bf16.msra.mxu0 %v2156
    %2820 = vmatpush.bf16.msra.mxu0 %v2148
    %2821 = vmatmul.bf16.gmra.mxu0 %v1373
    %v2822 = vpop.f32.mrf.mxu0
    %v2823 = vadd.f32 0.0, %v2822
    %v2824 = vpop.f32.mrf.mxu0
    %2825 = vdwg.mxu0
    %2826 = vmatpush.bf16.msra.mxu0 %v2268
    %2827 = vmatpush.bf16.msra.mxu0 %v2260
    %2828 = vmatpush.bf16.msra.mxu0 %v2252
    %2829 = vmatpush.bf16.msra.mxu0 %v2244
    %2830 = vmatpush.bf16.msra.mxu0 %v2236
    %2831 = vmatpush.bf16.msra.mxu0 %v2228
    %2832 = vmatpush.bf16.msra.mxu0 %v2220
    %2833 = vmatpush.bf16.msra.mxu0 %v2212
    %2834 = vmatmul.bf16.gmra.mxu0 %v1374
    %v2835 = vpop.f32.mrf.mxu0
    %v2836 = vadd.f32 %v2823, %v2835
    %v2837 = vpop.f32.mrf.mxu0
    %2838 = vdwg.mxu0
    %2839 = vmatpush.bf16.msra.mxu0 %v2332
    %2840 = vmatpush.bf16.msra.mxu0 %v2324
    %2841 = vmatpush.bf16.msra.mxu0 %v2316
    %2842 = vmatpush.bf16.msra.mxu0 %v2308
    %2843 = vmatpush.bf16.msra.mxu0 %v2300
    %2844 = vmatpush.bf16.msra.mxu0 %v2292
    %2845 = vmatpush.bf16.msra.mxu0 %v2284
    %2846 = vmatpush.bf16.msra.mxu0 %v2276
    %2847 = vmatmul.bf16.gmra.mxu0 %v1375
    %v2848 = vpop.f32.mrf.mxu0
    %v2849 = vadd.f32 %v2836, %v2848
    %v2850 = vpop.f32.mrf.mxu0
    %2851 = vdwg.mxu0
    %2852 = vmatpush.bf16.msra.mxu0 %v2396
    %2853 = vmatpush.bf16.msra.mxu0 %v2388
    %2854 = vmatpush.bf16.msra.mxu0 %v2380
    %2855 = vmatpush.bf16.msra.mxu0 %v2372
    %2856 = vmatpush.bf16.msra.mxu0 %v2364
    %2857 = vmatpush.bf16.msra.mxu0 %v2356
    %2858 = vmatpush.bf16.msra.mxu0 %v2348
    %2859 = vmatpush.bf16.msra.mxu0 %v2340
    %2860 = vmatmul.bf16.gmra.mxu0 %v1376
    %v2861 = vpop.f32.mrf.mxu0
    %v2862 = vadd.f32 %v2849, %v2861
    %v2863 = vpop.f32.mrf.mxu0
    %2864 = vdwg.mxu0
    %2865 = vmatpush.bf16.msra.mxu0 %v2205
    %2866 = vmatpush.bf16.msra.mxu0 %v2197
    %2867 = vmatpush.bf16.msra.mxu0 %v2189
    %2868 = vmatpush.bf16.msra.mxu0 %v2181
    %2869 = vmatpush.bf16.msra.mxu0 %v2173
    %2870 = vmatpush.bf16.msra.mxu0 %v2165
    %2871 = vmatpush.bf16.msra.mxu0 %v2157
    %2872 = vmatpush.bf16.msra.mxu0 %v2149
    %2873 = vmatmul.bf16.gmra.mxu0 %v1373
    %v2874 = vpop.f32.mrf.mxu0
    %v2875 = vadd.f32 0.0, %v2874
    %v2876 = vpop.f32.mrf.mxu0
    %2877 = vdwg.mxu0
    %2878 = vmatpush.bf16.msra.mxu0 %v2269
    %2879 = vmatpush.bf16.msra.mxu0 %v2261
    %2880 = vmatpush.bf16.msra.mxu0 %v2253
    %2881 = vmatpush.bf16.msra.mxu0 %v2245
    %2882 = vmatpush.bf16.msra.mxu0 %v2237
    %2883 = vmatpush.bf16.msra.mxu0 %v2229
    %2884 = vmatpush.bf16.msra.mxu0 %v2221
    %2885 = vmatpush.bf16.msra.mxu0 %v2213
    %2886 = vmatmul.bf16.gmra.mxu0 %v1374
    %v2887 = vpop.f32.mrf.mxu0
    %v2888 = vadd.f32 %v2875, %v2887
    %v2889 = vpop.f32.mrf.mxu0
    %2890 = vdwg.mxu0
    %2891 = vmatpush.bf16.msra.mxu0 %v2333
    %2892 = vmatpush.bf16.msra.mxu0 %v2325
    %2893 = vmatpush.bf16.msra.mxu0 %v2317
    %2894 = vmatpush.bf16.msra.mxu0 %v2309
    %2895 = vmatpush.bf16.msra.mxu0 %v2301
    %2896 = vmatpush.bf16.msra.mxu0 %v2293
    %2897 = vmatpush.bf16.msra.mxu0 %v2285
    %2898 = vmatpush.bf16.msra.mxu0 %v2277
    %2899 = vmatmul.bf16.gmra.mxu0 %v1375
    %v2900 = vpop.f32.mrf.mxu0
    %v2901 = vadd.f32 %v2888, %v2900
    %v2902 = vpop.f32.mrf.mxu0
    %2903 = vdwg.mxu0
    %2904 = vmatpush.bf16.msra.mxu0 %v2397
    %2905 = vmatpush.bf16.msra.mxu0 %v2389
    %2906 = vmatpush.bf16.msra.mxu0 %v2381
    %2907 = vmatpush.bf16.msra.mxu0 %v2373
    %2908 = vmatpush.bf16.msra.mxu0 %v2365
    %2909 = vmatpush.bf16.msra.mxu0 %v2357
    %2910 = vmatpush.bf16.msra.mxu0 %v2349
    %2911 = vmatpush.bf16.msra.mxu0 %v2341
    %2912 = vmatmul.bf16.gmra.mxu0 %v1376
    %v2913 = vpop.f32.mrf.mxu0
    %v2914 = vadd.f32 %v2901, %v2913
    %v2915 = vpop.f32.mrf.mxu0
    %2916 = vdwg.mxu0
    %2917 = vmatpush.bf16.msra.mxu0 %v2206
    %2918 = vmatpush.bf16.msra.mxu0 %v2198
    %2919 = vmatpush.bf16.msra.mxu0 %v2190
    %2920 = vmatpush.bf16.msra.mxu0 %v2182
    %2921 = vmatpush.bf16.msra.mxu0 %v2174
    %2922 = vmatpush.bf16.msra.mxu0 %v2166
    %2923 = vmatpush.bf16.msra.mxu0 %v2158
    %2924 = vmatpush.bf16.msra.mxu0 %v2150
    %2925 = vmatmul.bf16.gmra.mxu0 %v1373
    %v2926 = vpop.f32.mrf.mxu0
    %v2927 = vadd.f32 0.0, %v2926
    %v2928 = vpop.f32.mrf.mxu0
    %2929 = vdwg.mxu0
    %2930 = vmatpush.bf16.msra.mxu0 %v2270
    %2931 = vmatpush.bf16.msra.mxu0 %v2262
    %2932 = vmatpush.bf16.msra.mxu0 %v2254
    %2933 = vmatpush.bf16.msra.mxu0 %v2246
    %2934 = vmatpush.bf16.msra.mxu0 %v2238
    %2935 = vmatpush.bf16.msra.mxu0 %v2230
    %2936 = vmatpush.bf16.msra.mxu0 %v2222
    %2937 = vmatpush.bf16.msra.mxu0 %v2214
    %2938 = vmatmul.bf16.gmra.mxu0 %v1374
    %v2939 = vpop.f32.mrf.mxu0
    %v2940 = vadd.f32 %v2927, %v2939
    %v2941 = vpop.f32.mrf.mxu0
    %2942 = vdwg.mxu0
    %2943 = vmatpush.bf16.msra.mxu0 %v2334
    %2944 = vmatpush.bf16.msra.mxu0 %v2326
    %2945 = vmatpush.bf16.msra.mxu0 %v2318
    %2946 = vmatpush.bf16.msra.mxu0 %v2310
    %2947 = vmatpush.bf16.msra.mxu0 %v2302
    %2948 = vmatpush.bf16.msra.mxu0 %v2294
    %2949 = vmatpush.bf16.msra.mxu0 %v2286
    %2950 = vmatpush.bf16.msra.mxu0 %v2278
    %2951 = vmatmul.bf16.gmra.mxu0 %v1375
    %v2952 = vpop.f32.mrf.mxu0
    %v2953 = vadd.f32 %v2940, %v2952
    %v2954 = vpop.f32.mrf.mxu0
    %2955 = vdwg.mxu0
    %2956 = vmatpush.bf16.msra.mxu0 %v2398
    %2957 = vmatpush.bf16.msra.mxu0 %v2390
    %2958 = vmatpush.bf16.msra.mxu0 %v2382
    %2959 = vmatpush.bf16.msra.mxu0 %v2374
    %2960 = vmatpush.bf16.msra.mxu0 %v2366
    %2961 = vmatpush.bf16.msra.mxu0 %v2358
    %2962 = vmatpush.bf16.msra.mxu0 %v2350
    %2963 = vmatpush.bf16.msra.mxu0 %v2342
    %2964 = vmatmul.bf16.gmra.mxu0 %v1376
    %v2965 = vpop.f32.mrf.mxu0
    %v2966 = vadd.f32 %v2953, %v2965
    %v2967 = vpop.f32.mrf.mxu0
    %2968 = vdwg.mxu0
    %2969 = vmatpush.bf16.msra.mxu0 %v2207
    %2970 = vmatpush.bf16.msra.mxu0 %v2199
    %2971 = vmatpush.bf16.msra.mxu0 %v2191
    %2972 = vmatpush.bf16.msra.mxu0 %v2183
    %2973 = vmatpush.bf16.msra.mxu0 %v2175
    %2974 = vmatpush.bf16.msra.mxu0 %v2167
    %2975 = vmatpush.bf16.msra.mxu0 %v2159
    %2976 = vmatpush.bf16.msra.mxu0 %v2151
    %2977 = vmatmul.bf16.gmra.mxu0 %v1373
    %v2978 = vpop.f32.mrf.mxu0
    %v2979 = vadd.f32 0.0, %v2978
    %v2980 = vpop.f32.mrf.mxu0
    %2981 = vdwg.mxu0
    %2982 = vmatpush.bf16.msra.mxu0 %v2271
    %2983 = vmatpush.bf16.msra.mxu0 %v2263
    %2984 = vmatpush.bf16.msra.mxu0 %v2255
    %2985 = vmatpush.bf16.msra.mxu0 %v2247
    %2986 = vmatpush.bf16.msra.mxu0 %v2239
    %2987 = vmatpush.bf16.msra.mxu0 %v2231
    %2988 = vmatpush.bf16.msra.mxu0 %v2223
    %2989 = vmatpush.bf16.msra.mxu0 %v2215
    %2990 = vmatmul.bf16.gmra.mxu0 %v1374
    %v2991 = vpop.f32.mrf.mxu0
    %v2992 = vadd.f32 %v2979, %v2991
    %v2993 = vpop.f32.mrf.mxu0
    %2994 = vdwg.mxu0
    %2995 = vmatpush.bf16.msra.mxu0 %v2335
    %2996 = vmatpush.bf16.msra.mxu0 %v2327
    %2997 = vmatpush.bf16.msra.mxu0 %v2319
    %2998 = vmatpush.bf16.msra.mxu0 %v2311
    %2999 = vmatpush.bf16.msra.mxu0 %v2303
    %3000 = vmatpush.bf16.msra.mxu0 %v2295
    %3001 = vmatpush.bf16.msra.mxu0 %v2287
    %3002 = vmatpush.bf16.msra.mxu0 %v2279
    %3003 = vmatmul.bf16.gmra.mxu0 %v1375
    %v3004 = vpop.f32.mrf.mxu0
    %v3005 = vadd.f32 %v2992, %v3004
    %v3006 = vpop.f32.mrf.mxu0
    %3007 = vdwg.mxu0
    %3008 = vmatpush.bf16.msra.mxu0 %v2399
    %3009 = vmatpush.bf16.msra.mxu0 %v2391
    %3010 = vmatpush.bf16.msra.mxu0 %v2383
    %3011 = vmatpush.bf16.msra.mxu0 %v2375
    %3012 = vmatpush.bf16.msra.mxu0 %v2367
    %3013 = vmatpush.bf16.msra.mxu0 %v2359
    %3014 = vmatpush.bf16.msra.mxu0 %v2351
    %3015 = vmatpush.bf16.msra.mxu0 %v2343
    %3016 = vmatmul.bf16.gmra.mxu0 %v1376
    %v3017 = vpop.f32.mrf.mxu0
    %v3018 = vadd.f32 %v3005, %v3017
    %v3019 = vpop.f32.mrf.mxu0
    %3020 = vdwg.mxu0
    %3021 = vmatpush.bf16.msra.mxu0 %v2208
    %3022 = vmatpush.bf16.msra.mxu0 %v2200
    %3023 = vmatpush.bf16.msra.mxu0 %v2192
    %3024 = vmatpush.bf16.msra.mxu0 %v2184
    %3025 = vmatpush.bf16.msra.mxu0 %v2176
    %3026 = vmatpush.bf16.msra.mxu0 %v2168
    %3027 = vmatpush.bf16.msra.mxu0 %v2160
    %3028 = vmatpush.bf16.msra.mxu0 %v2152
    %3029 = vmatmul.bf16.gmra.mxu0 %v1373
    %v3030 = vpop.f32.mrf.mxu0
    %v3031 = vadd.f32 0.0, %v3030
    %v3032 = vpop.f32.mrf.mxu0
    %3033 = vdwg.mxu0
    %3034 = vmatpush.bf16.msra.mxu0 %v2272
    %3035 = vmatpush.bf16.msra.mxu0 %v2264
    %3036 = vmatpush.bf16.msra.mxu0 %v2256
    %3037 = vmatpush.bf16.msra.mxu0 %v2248
    %3038 = vmatpush.bf16.msra.mxu0 %v2240
    %3039 = vmatpush.bf16.msra.mxu0 %v2232
    %3040 = vmatpush.bf16.msra.mxu0 %v2224
    %3041 = vmatpush.bf16.msra.mxu0 %v2216
    %3042 = vmatmul.bf16.gmra.mxu0 %v1374
    %v3043 = vpop.f32.mrf.mxu0
    %v3044 = vadd.f32 %v3031, %v3043
    %v3045 = vpop.f32.mrf.mxu0
    %3046 = vdwg.mxu0
    %3047 = vmatpush.bf16.msra.mxu0 %v2336
    %3048 = vmatpush.bf16.msra.mxu0 %v2328
    %3049 = vmatpush.bf16.msra.mxu0 %v2320
    %3050 = vmatpush.bf16.msra.mxu0 %v2312
    %3051 = vmatpush.bf16.msra.mxu0 %v2304
    %3052 = vmatpush.bf16.msra.mxu0 %v2296
    %3053 = vmatpush.bf16.msra.mxu0 %v2288
    %3054 = vmatpush.bf16.msra.mxu0 %v2280
    %3055 = vmatmul.bf16.gmra.mxu0 %v1375
    %v3056 = vpop.f32.mrf.mxu0
    %v3057 = vadd.f32 %v3044, %v3056
    %v3058 = vpop.f32.mrf.mxu0
    %3059 = vdwg.mxu0
    %3060 = vmatpush.bf16.msra.mxu0 %v2400
    %3061 = vmatpush.bf16.msra.mxu0 %v2392
    %3062 = vmatpush.bf16.msra.mxu0 %v2384
    %3063 = vmatpush.bf16.msra.mxu0 %v2376
    %3064 = vmatpush.bf16.msra.mxu0 %v2368
    %3065 = vmatpush.bf16.msra.mxu0 %v2360
    %3066 = vmatpush.bf16.msra.mxu0 %v2352
    %3067 = vmatpush.bf16.msra.mxu0 %v2344
    %3068 = vmatmul.bf16.gmra.mxu0 %v1376
    %v3069 = vpop.f32.mrf.mxu0
    %v3070 = vadd.f32 %v3057, %v3069
    %v3071 = vpop.f32.mrf.mxu0
    %3072 = vdwg.mxu0
    %v3073 = vrot.slane %v2706, 4
    %v3074 = vadd.f32 %v2706, %v3073
    %v3075 = vrot.slane %v3074, 2
    %v3076 = vadd.f32 %v3074, %v3075
    %v3077 = vrot.slane %v3076, 1
    %v3078 = vadd.f32 %v3076, %v3077
    %v3079 = vrot.slane %v2758, 4
    %v3080 = vadd.f32 %v2758, %v3079
    %v3081 = vrot.slane %v3080, 2
    %v3082 = vadd.f32 %v3080, %v3081
    %v3083 = vrot.slane %v3082, 1
    %v3084 = vadd.f32 %v3082, %v3083
    %v3085 = vrot.slane %v2810, 4
    %v3086 = vadd.f32 %v2810, %v3085
    %v3087 = vrot.slane %v3086, 2
    %v3088 = vadd.f32 %v3086, %v3087
    %v3089 = vrot.slane %v3088, 1
    %v3090 = vadd.f32 %v3088, %v3089
    %v3091 = vrot.slane %v2862, 4
    %v3092 = vadd.f32 %v2862, %v3091
    %v3093 = vrot.slane %v3092, 2
    %v3094 = vadd.f32 %v3092, %v3093
    %v3095 = vrot.slane %v3094, 1
    %v3096 = vadd.f32 %v3094, %v3095
    %v3097 = vrot.slane %v2914, 4
    %v3098 = vadd.f32 %v2914, %v3097
    %v3099 = vrot.slane %v3098, 2
    %v3100 = vadd.f32 %v3098, %v3099
    %v3101 = vrot.slane %v3100, 1
    %v3102 = vadd.f32 %v3100, %v3101
    %v3103 = vrot.slane %v2966, 4
    %v3104 = vadd.f32 %v2966, %v3103
    %v3105 = vrot.slane %v3104, 2
    %v3106 = vadd.f32 %v3104, %v3105
    %v3107 = vrot.slane %v3106, 1
    %v3108 = vadd.f32 %v3106, %v3107
    %v3109 = vrot.slane %v3018, 4
    %v3110 = vadd.f32 %v3018, %v3109
    %v3111 = vrot.slane %v3110, 2
    %v3112 = vadd.f32 %v3110, %v3111
    %v3113 = vrot.slane %v3112, 1
    %v3114 = vadd.f32 %v3112, %v3113
    %v3115 = vrot.slane %v3070, 4
    %v3116 = vadd.f32 %v3070, %v3115
    %v3117 = vrot.slane %v3116, 2
    %v3118 = vadd.f32 %v3116, %v3117
    %v3119 = vrot.slane %v3118, 1
    %v3120 = vadd.f32 %v3118, %v3119
    %v3121 = vmul.f32 %v3078, %v203
    %v3122 = vmul.f32 %v3084, %v203
    %v3123 = vmul.f32 %v3090, %v203
    %v3124 = vmul.f32 %v3096, %v203
    %v3125 = vmul.f32 %v3102, %v203
    %v3126 = vmul.f32 %v3108, %v203
    %v3127 = vmul.f32 %v3114, %v203
    %v3128 = vmul.f32 %v3120, %v203
    %v3129 = vsub.f32 %v2706, %v3121
    %v3130 = vsub.f32 %v2758, %v3122
    %v3131 = vsub.f32 %v2810, %v3123
    %v3132 = vsub.f32 %v2862, %v3124
    %v3133 = vsub.f32 %v2914, %v3125
    %v3134 = vsub.f32 %v2966, %v3126
    %v3135 = vsub.f32 %v3018, %v3127
    %v3136 = vsub.f32 %v3070, %v3128
    %v3137 = vmul.f32 %v3129, %v3129
    %v3138 = vmul.f32 %v3130, %v3130
    %v3139 = vmul.f32 %v3131, %v3131
    %v3140 = vmul.f32 %v3132, %v3132
    %v3141 = vmul.f32 %v3133, %v3133
    %v3142 = vmul.f32 %v3134, %v3134
    %v3143 = vmul.f32 %v3135, %v3135
    %v3144 = vmul.f32 %v3136, %v3136
    %v3145 = vrot.slane %v3137, 4
    %v3146 = vadd.f32 %v3137, %v3145
    %v3147 = vrot.slane %v3146, 2
    %v3148 = vadd.f32 %v3146, %v3147
    %v3149 = vrot.slane %v3148, 1
    %v3150 = vadd.f32 %v3148, %v3149
    %v3151 = vrot.slane %v3138, 4
    %v3152 = vadd.f32 %v3138, %v3151
    %v3153 = vrot.slane %v3152, 2
    %v3154 = vadd.f32 %v3152, %v3153
    %v3155 = vrot.slane %v3154, 1
    %v3156 = vadd.f32 %v3154, %v3155
    %v3157 = vrot.slane %v3139, 4
    %v3158 = vadd.f32 %v3139, %v3157
    %v3159 = vrot.slane %v3158, 2
    %v3160 = vadd.f32 %v3158, %v3159
    %v3161 = vrot.slane %v3160, 1
    %v3162 = vadd.f32 %v3160, %v3161
    %v3163 = vrot.slane %v3140, 4
    %v3164 = vadd.f32 %v3140, %v3163
    %v3165 = vrot.slane %v3164, 2
    %v3166 = vadd.f32 %v3164, %v3165
    %v3167 = vrot.slane %v3166, 1
    %v3168 = vadd.f32 %v3166, %v3167
    %v3169 = vrot.slane %v3141, 4
    %v3170 = vadd.f32 %v3141, %v3169
    %v3171 = vrot.slane %v3170, 2
    %v3172 = vadd.f32 %v3170, %v3171
    %v3173 = vrot.slane %v3172, 1
    %v3174 = vadd.f32 %v3172, %v3173
    %v3175 = vrot.slane %v3142, 4
    %v3176 = vadd.f32 %v3142, %v3175
    %v3177 = vrot.slane %v3176, 2
    %v3178 = vadd.f32 %v3176, %v3177
    %v3179 = vrot.slane %v3178, 1
    %v3180 = vadd.f32 %v3178, %v3179
    %v3181 = vrot.slane %v3143, 4
    %v3182 = vadd.f32 %v3143, %v3181
    %v3183 = vrot.slane %v3182, 2
    %v3184 = vadd.f32 %v3182, %v3183
    %v3185 = vrot.slane %v3184, 1
    %v3186 = vadd.f32 %v3184, %v3185
    %v3187 = vrot.slane %v3144, 4
    %v3188 = vadd.f32 %v3144, %v3187
    %v3189 = vrot.slane %v3188, 2
    %v3190 = vadd.f32 %v3188, %v3189
    %v3191 = vrot.slane %v3190, 1
    %v3192 = vadd.f32 %v3190, %v3191
    %v3193 = vmul.f32 %v3150, %v203
    %v3194 = vmul.f32 %v3156, %v203
    %v3195 = vmul.f32 %v3162, %v203
    %v3196 = vmul.f32 %v3168, %v203
    %v3197 = vmul.f32 %v3174, %v203
    %v3198 = vmul.f32 %v3180, %v203
    %v3199 = vmul.f32 %v3186, %v203
    %v3200 = vmul.f32 %v3192, %v203
    %v3201 = vadd.f32 %v3193, 1e-05
    %v3202 = vadd.f32 %v3194, 1e-05
    %v3203 = vadd.f32 %v3195, 1e-05
    %v3204 = vadd.f32 %v3196, 1e-05
    %v3205 = vadd.f32 %v3197, 1e-05
    %v3206 = vadd.f32 %v3198, 1e-05
    %v3207 = vadd.f32 %v3199, 1e-05
    %v3208 = vadd.f32 %v3200, 1e-05
    %v3209 = vrsqrt.pop %v3201
    %v3210 = vmul.f32 %v3209, %v3201
    %v3211 = vmul.f32 %v3210, %v3209
    %v3212 = vmul.f32 0.5, %v3211
    %v3213 = vsub.f32 1.5, %v3212
    %v3214 = vmul.f32 %v3209, %v3213
    %vm3215 = vweird.f32 %v3201
    %vm3216 = vweird.f32 %v3209
    %vm3217 = vmor %vm3215, %vm3216
    %v3218 = vsel %vm3217, %v3209, %v3214
    %v3219 = vrsqrt.pop %v3202
    %v3220 = vmul.f32 %v3219, %v3202
    %v3221 = vmul.f32 %v3220, %v3219
    %v3222 = vmul.f32 0.5, %v3221
    %v3223 = vsub.f32 1.5, %v3222
    %v3224 = vmul.f32 %v3219, %v3223
    %vm3225 = vweird.f32 %v3202
    %vm3226 = vweird.f32 %v3219
    %vm3227 = vmor %vm3225, %vm3226
    %v3228 = vsel %vm3227, %v3219, %v3224
    %v3229 = vrsqrt.pop %v3203
    %v3230 = vmul.f32 %v3229, %v3203
    %v3231 = vmul.f32 %v3230, %v3229
    %v3232 = vmul.f32 0.5, %v3231
    %v3233 = vsub.f32 1.5, %v3232
    %v3234 = vmul.f32 %v3229, %v3233
    %vm3235 = vweird.f32 %v3203
    %vm3236 = vweird.f32 %v3229
    %vm3237 = vmor %vm3235, %vm3236
    %v3238 = vsel %vm3237, %v3229, %v3234
    %v3239 = vrsqrt.pop %v3204
    %v3240 = vmul.f32 %v3239, %v3204
    %v3241 = vmul.f32 %v3240, %v3239
    %v3242 = vmul.f32 0.5, %v3241
    %v3243 = vsub.f32 1.5, %v3242
    %v3244 = vmul.f32 %v3239, %v3243
    %vm3245 = vweird.f32 %v3204
    %vm3246 = vweird.f32 %v3239
    %vm3247 = vmor %vm3245, %vm3246
    %v3248 = vsel %vm3247, %v3239, %v3244
    %v3249 = vrsqrt.pop %v3205
    %v3250 = vmul.f32 %v3249, %v3205
    %v3251 = vmul.f32 %v3250, %v3249
    %v3252 = vmul.f32 0.5, %v3251
    %v3253 = vsub.f32 1.5, %v3252
    %v3254 = vmul.f32 %v3249, %v3253
    %vm3255 = vweird.f32 %v3205
    %vm3256 = vweird.f32 %v3249
    %vm3257 = vmor %vm3255, %vm3256
    %v3258 = vsel %vm3257, %v3249, %v3254
    %v3259 = vrsqrt.pop %v3206
    %v3260 = vmul.f32 %v3259, %v3206
    %v3261 = vmul.f32 %v3260, %v3259
    %v3262 = vmul.f32 0.5, %v3261
    %v3263 = vsub.f32 1.5, %v3262
    %v3264 = vmul.f32 %v3259, %v3263
    %vm3265 = vweird.f32 %v3206
    %vm3266 = vweird.f32 %v3259
    %vm3267 = vmor %vm3265, %vm3266
    %v3268 = vsel %vm3267, %v3259, %v3264
    %v3269 = vrsqrt.pop %v3207
    %v3270 = vmul.f32 %v3269, %v3207
    %v3271 = vmul.f32 %v3270, %v3269
    %v3272 = vmul.f32 0.5, %v3271
    %v3273 = vsub.f32 1.5, %v3272
    %v3274 = vmul.f32 %v3269, %v3273
    %vm3275 = vweird.f32 %v3207
    %vm3276 = vweird.f32 %v3269
    %vm3277 = vmor %vm3275, %vm3276
    %v3278 = vsel %vm3277, %v3269, %v3274
    %v3279 = vrsqrt.pop %v3208
    %v3280 = vmul.f32 %v3279, %v3208
    %v3281 = vmul.f32 %v3280, %v3279
    %v3282 = vmul.f32 0.5, %v3281
    %v3283 = vsub.f32 1.5, %v3282
    %v3284 = vmul.f32 %v3279, %v3283
    %vm3285 = vweird.f32 %v3208
    %vm3286 = vweird.f32 %v3279
    %vm3287 = vmor %vm3285, %vm3286
    %v3288 = vsel %vm3287, %v3279, %v3284
    %v3290 = vrot.slane %v157, 7
    %v3291 = vrot.slane %v158, 7
    %v3292 = vsel %vm420, %v3290, %v3291
    %v3302 = vrot.slane %v3228, 7
    %v3303 = vrot.slane %v3238, 6
    %v3304 = vrot.slane %v3248, 5
    %v3305 = vrot.slane %v3258, 4
    %v3306 = vrot.slane %v3268, 3
    %v3307 = vrot.slane %v3278, 2
    %v3308 = vrot.slane %v3288, 1
    %v3309 = vsel %vm420, %v3218, %v3302
    %v3310 = vsel %vm1059, %v3303, %v3304
    %v3311 = vsel %vm1061, %v3309, %v3310
    %vm3312 = vcmask 1044484
    %v3313 = vsel %vm3312, %v3305, %v3306
    %vm3314 = vcmask 1046534
    %v3315 = vsel %vm3314, %v3307, %v3308
    %vm3316 = vcmask 1045508
    %v3317 = vsel %vm3316, %v3313, %v3315
    %vm3318 = vcmask 1043456
    %v3319 = vsel %vm3318, %v3311, %v3317
    %v3321 = vmul.f32 %v3292, %v3319
    %v3323 = vperm.slane %v3321, 0
    %v3324 = vperm.slane %v3321, 1
    %v3325 = vperm.slane %v3321, 2
    %v3326 = vperm.slane %v3321, 3
    %v3327 = vperm.slane %v3321, 4
    %v3328 = vperm.slane %v3321, 5
    %v3329 = vperm.slane %v3321, 6
    %v3330 = vperm.slane %v3321, 7
    %v3339 = vmul.f32 %v3121, %v3323
    %v3340 = vmul.f32 %v3122, %v3324
    %v3341 = vmul.f32 %v3123, %v3325
    %v3342 = vmul.f32 %v3124, %v3326
    %v3343 = vmul.f32 %v3125, %v3327
    %v3344 = vmul.f32 %v3126, %v3328
    %v3345 = vmul.f32 %v3127, %v3329
    %v3346 = vmul.f32 %v3128, %v3330
    %v3348 = vrot.slane %v159, 7
    %v3349 = vrot.slane %v160, 7
    %v3350 = vsel %vm420, %v3348, %v3349
    %v3360 = vrot.slane %v3340, 7
    %v3361 = vrot.slane %v3341, 6
    %v3362 = vrot.slane %v3342, 5
    %v3363 = vrot.slane %v3343, 4
    %v3364 = vrot.slane %v3344, 3
    %v3365 = vrot.slane %v3345, 2
    %v3366 = vrot.slane %v3346, 1
    %v3367 = vsel %vm420, %v3339, %v3360
    %v3368 = vsel %vm1059, %v3361, %v3362
    %v3369 = vsel %vm1061, %v3367, %v3368
    %v3370 = vsel %vm3312, %v3363, %v3364
    %v3371 = vsel %vm3314, %v3365, %v3366
    %v3372 = vsel %vm3316, %v3370, %v3371
    %v3373 = vsel %vm3318, %v3369, %v3372
    %v3375 = vsub.f32 %v3350, %v3373
    %v3376 = vmul.f32 %v2706, %v3323
    %v3377 = vmul.f32 %v2758, %v3324
    %v3378 = vmul.f32 %v2810, %v3325
    %v3379 = vmul.f32 %v2862, %v3326
    %v3380 = vmul.f32 %v2914, %v3327
    %v3381 = vmul.f32 %v2966, %v3328
    %v3382 = vmul.f32 %v3018, %v3329
    %v3383 = vmul.f32 %v3070, %v3330
    %v3385 = vperm.slane %v3375, 0
    %v3386 = vperm.slane %v3375, 1
    %v3387 = vperm.slane %v3375, 2
    %v3388 = vperm.slane %v3375, 3
    %v3389 = vperm.slane %v3375, 4
    %v3390 = vperm.slane %v3375, 5
    %v3391 = vperm.slane %v3375, 6
    %v3392 = vperm.slane %v3375, 7
    %v3401 = vadd.f32 %v3376, %v3385
    %v3402 = vadd.f32 %v3377, %v3386
    %v3403 = vadd.f32 %v3378, %v3387
    %v3404 = vadd.f32 %v3379, %v3388
    %v3405 = vadd.f32 %v3380, %v3389
    %v3406 = vadd.f32 %v3381, %v3390
    %v3407 = vadd.f32 %v3382, %v3391
    %v3408 = vadd.f32 %v3383, %v3392
    %v3409 = vmax.f32 %v3401, 0.0
    %v3410 = vmax.f32 %v3402, 0.0
    %v3411 = vmax.f32 %v3403, 0.0
    %v3412 = vmax.f32 %v3404, 0.0
    %v3413 = vmax.f32 %v3405, 0.0
    %v3414 = vmax.f32 %v3406, 0.0
    %v3415 = vmax.f32 %v3407, 0.0
    %v3416 = vmax.f32 %v3408, 0.0
    %s3417 = smul.u32 4, 128
    %s3418 = smul.u32 %s3417, 7
    %s3419 = sshll.u32 %s3418, 4
    %3420 = dma.done [#allocation5], %s3419
    %v3421 = vpack.c.bf16 %v3409, %v3409
    %v3422 = vpack.c.bf16 %v3410, %v3410
    %v3423 = vpack.c.bf16 %v3411, %v3411
    %v3424 = vpack.c.bf16 %v3412, %v3412
    %v3425 = vpack.c.bf16 %v3413, %v3413
    %v3426 = vpack.c.bf16 %v3414, %v3414
    %v3427 = vpack.c.bf16 %v3415, %v3415
    %v3428 = vpack.c.bf16 %v3416, %v3416
    %v3429 = vld [vmem:[#allocation3] sm:$0xff]
    %v3430 = vld [vmem:[#allocation3 + $0x8] sm:$0xff]
    %v3431 = vld [vmem:[#allocation3 + $0x10] sm:$0xff]
    %v3432 = vld [vmem:[#allocation3 + $0x18] sm:$0xf]
    %v3433 = vld [vmem:[#allocation3 + $0x1c] sm:$0xff]
    %v3434 = vld [vmem:[#allocation3 + $0x24] sm:$0xff]
    %v3435 = vld [vmem:[#allocation3 + $0x2c] sm:$0xff]
    %v3436 = vld [vmem:[#allocation3 + $0x34] sm:$0xf]
    %v3437 = vld [vmem:[#allocation3 + $0x38] sm:$0xff]
    %v3438 = vld [vmem:[#allocation3 + $0x40] sm:$0xff]
    %v3439 = vld [vmem:[#allocation3 + $0x48] sm:$0xff]
    %v3440 = vld [vmem:[#allocation3 + $0x50] sm:$0xf]
    %v3441 = vld [vmem:[#allocation3 + $0x54] sm:$0xff]
    %v3442 = vld [vmem:[#allocation3 + $0x5c] sm:$0xff]
    %v3443 = vld [vmem:[#allocation3 + $0x64] sm:$0xff]
    %v3444 = vld [vmem:[#allocation3 + $0x6c] sm:$0xf]
    %v3445 = vld [vmem:[#allocation3 + $0x70] sm:$0xff]
    %v3446 = vld [vmem:[#allocation3 + $0x78] sm:$0xff]
    %v3447 = vld [vmem:[#allocation3 + $0x80] sm:$0xff]
    %v3448 = vld [vmem:[#allocation3 + $0x88] sm:$0xf]
    %v3449 = vld [vmem:[#allocation3 + $0x8c] sm:$0xff]
    %v3450 = vld [vmem:[#allocation3 + $0x94] sm:$0xff]
    %v3451 = vld [vmem:[#allocation3 + $0x9c] sm:$0xff]
    %v3452 = vld [vmem:[#allocation3 + $0xa4] sm:$0xf]
    %v3453 = vld [vmem:[#allocation3 + $0xa8] sm:$0xff]
    %v3454 = vld [vmem:[#allocation3 + $0xb0] sm:$0xff]
    %v3455 = vld [vmem:[#allocation3 + $0xb8] sm:$0xff]
    %v3456 = vld [vmem:[#allocation3 + $0xc0] sm:$0xf]
    %v3457 = vld [vmem:[#allocation3 + $0xc4] sm:$0xff]
    %v3458 = vld [vmem:[#allocation3 + $0xcc] sm:$0xff]
    %v3459 = vld [vmem:[#allocation3 + $0xd4] sm:$0xff]
    %v3460 = vld [vmem:[#allocation3 + $0xdc] sm:$0xf]
    %v3461 = vld [vmem:[#allocation3 + $0xe0] sm:$0xff]
    %v3462 = vld [vmem:[#allocation3 + $0xe8] sm:$0xff]
    %v3463 = vld [vmem:[#allocation3 + $0xf0] sm:$0xff]
    %v3464 = vld [vmem:[#allocation3 + $0xf8] sm:$0xf]
    %v3465 = vld [vmem:[#allocation3 + $0xfc] sm:$0xff]
    %v3466 = vld [vmem:[#allocation3 + $0x104] sm:$0xff]
    %v3467 = vld [vmem:[#allocation3 + $0x10c] sm:$0xff]
    %v3468 = vld [vmem:[#allocation3 + $0x114] sm:$0xf]
    %v3469 = vld [vmem:[#allocation3 + $0x118] sm:$0xff]
    %v3470 = vld [vmem:[#allocation3 + $0x120] sm:$0xff]
    %v3471 = vld [vmem:[#allocation3 + $0x128] sm:$0xff]
    %v3472 = vld [vmem:[#allocation3 + $0x130] sm:$0xf]
    %v3473 = vld [vmem:[#allocation3 + $0x134] sm:$0xff]
    %v3474 = vld [vmem:[#allocation3 + $0x13c] sm:$0xff]
    %v3475 = vld [vmem:[#allocation3 + $0x144] sm:$0xff]
    %v3476 = vld [vmem:[#allocation3 + $0x14c] sm:$0xf]
    %v3477 = vld [vmem:[#allocation3 + $0x150] sm:$0xff]
    %v3478 = vld [vmem:[#allocation3 + $0x158] sm:$0xff]
    %v3479 = vld [vmem:[#allocation3 + $0x160] sm:$0xff]
    %v3480 = vld [vmem:[#allocation3 + $0x168] sm:$0xf]
    %v3481 = vld [vmem:[#allocation3 + $0x16c] sm:$0xff]
    %v3482 = vld [vmem:[#allocation3 + $0x174] sm:$0xff]
    %v3483 = vld [vmem:[#allocation3 + $0x17c] sm:$0xff]
    %v3484 = vld [vmem:[#allocation3 + $0x184] sm:$0xf]
    %v3485 = vld [vmem:[#allocation3 + $0x188] sm:$0xff]
    %v3486 = vld [vmem:[#allocation3 + $0x190] sm:$0xff]
    %v3487 = vld [vmem:[#allocation3 + $0x198] sm:$0xff]
    %v3488 = vld [vmem:[#allocation3 + $0x1a0] sm:$0xf]
    %v3489 = vld [vmem:[#allocation3 + $0x1a4] sm:$0xff]
    %v3490 = vld [vmem:[#allocation3 + $0x1ac] sm:$0xff]
    %v3491 = vld [vmem:[#allocation3 + $0x1b4] sm:$0xff]
    %v3492 = vld [vmem:[#allocation3 + $0x1bc] sm:$0xf]
    %v3493 = vld [vmem:[#allocation3 + $0x1c0] sm:$0xff]
    %v3494 = vld [vmem:[#allocation3 + $0x1c8] sm:$0xff]
    %v3495 = vld [vmem:[#allocation3 + $0x1d0] sm:$0xff]
    %v3496 = vld [vmem:[#allocation3 + $0x1d8] sm:$0xf]
    %v3497 = vld [vmem:[#allocation3 + $0x1dc] sm:$0xff]
    %v3498 = vld [vmem:[#allocation3 + $0x1e4] sm:$0xff]
    %v3499 = vld [vmem:[#allocation3 + $0x1ec] sm:$0xff]
    %v3500 = vld [vmem:[#allocation3 + $0x1f4] sm:$0xf]
    %v3501 = vld [vmem:[#allocation3 + $0x1f8] sm:$0xff]
    %v3502 = vld [vmem:[#allocation3 + $0x200] sm:$0xff]
    %v3503 = vld [vmem:[#allocation3 + $0x208] sm:$0xff]
    %v3504 = vld [vmem:[#allocation3 + $0x210] sm:$0xf]
    %v3505 = vld [vmem:[#allocation3 + $0x214] sm:$0xff]
    %v3506 = vld [vmem:[#allocation3 + $0x21c] sm:$0xff]
    %v3507 = vld [vmem:[#allocation3 + $0x224] sm:$0xff]
    %v3508 = vld [vmem:[#allocation3 + $0x22c] sm:$0xf]
    %v3509 = vld [vmem:[#allocation3 + $0x230] sm:$0xff]
    %v3510 = vld [vmem:[#allocation3 + $0x238] sm:$0xff]
    %v3511 = vld [vmem:[#allocation3 + $0x240] sm:$0xff]
    %v3512 = vld [vmem:[#allocation3 + $0x248] sm:$0xf]
    %v3513 = vld [vmem:[#allocation3 + $0x24c] sm:$0xff]
    %v3514 = vld [vmem:[#allocation3 + $0x254] sm:$0xff]
    %v3515 = vld [vmem:[#allocation3 + $0x25c] sm:$0xff]
    %v3516 = vld [vmem:[#allocation3 + $0x264] sm:$0xf]
    %v3517 = vld [vmem:[#allocation3 + $0x268] sm:$0xff]
    %v3518 = vld [vmem:[#allocation3 + $0x270] sm:$0xff]
    %v3519 = vld [vmem:[#allocation3 + $0x278] sm:$0xff]
    %v3520 = vld [vmem:[#allocation3 + $0x280] sm:$0xf]
    %v3521 = vld [vmem:[#allocation3 + $0x284] sm:$0xff]
    %v3522 = vld [vmem:[#allocation3 + $0x28c] sm:$0xff]
    %v3523 = vld [vmem:[#allocation3 + $0x294] sm:$0xff]
    %v3524 = vld [vmem:[#allocation3 + $0x29c] sm:$0xf]
    %v3525 = vld [vmem:[#allocation3 + $0x2a0] sm:$0xff]
    %v3526 = vld [vmem:[#allocation3 + $0x2a8] sm:$0xff]
    %v3527 = vld [vmem:[#allocation3 + $0x2b0] sm:$0xff]
    %v3528 = vld [vmem:[#allocation3 + $0x2b8] sm:$0xf]
    %v3529 = vld [vmem:[#allocation3 + $0x2bc] sm:$0xff]
    %v3530 = vld [vmem:[#allocation3 + $0x2c4] sm:$0xff]
    %v3531 = vld [vmem:[#allocation3 + $0x2cc] sm:$0xff]
    %v3532 = vld [vmem:[#allocation3 + $0x2d4] sm:$0xf]
    %v3533 = vld [vmem:[#allocation3 + $0x2d8] sm:$0xff]
    %v3534 = vld [vmem:[#allocation3 + $0x2e0] sm:$0xff]
    %v3535 = vld [vmem:[#allocation3 + $0x2e8] sm:$0xff]
    %v3536 = vld [vmem:[#allocation3 + $0x2f0] sm:$0xf]
    %v3537 = vld [vmem:[#allocation3 + $0x2f4] sm:$0xff]
    %v3538 = vld [vmem:[#allocation3 + $0x2fc] sm:$0xff]
    %v3539 = vld [vmem:[#allocation3 + $0x304] sm:$0xff]
    %v3540 = vld [vmem:[#allocation3 + $0x30c] sm:$0xf]
    %v3541 = vld [vmem:[#allocation3 + $0x310] sm:$0xff]
    %v3542 = vld [vmem:[#allocation3 + $0x318] sm:$0xff]
    %v3543 = vld [vmem:[#allocation3 + $0x320] sm:$0xff]
    %v3544 = vld [vmem:[#allocation3 + $0x328] sm:$0xf]
    %v3545 = vld [vmem:[#allocation3 + $0x32c] sm:$0xff]
    %v3546 = vld [vmem:[#allocation3 + $0x334] sm:$0xff]
    %v3547 = vld [vmem:[#allocation3 + $0x33c] sm:$0xff]
    %v3548 = vld [vmem:[#allocation3 + $0x344] sm:$0xf]
    %v3549 = vld [vmem:[#allocation3 + $0x348] sm:$0xff]
    %v3550 = vld [vmem:[#allocation3 + $0x350] sm:$0xff]
    %v3551 = vld [vmem:[#allocation3 + $0x358] sm:$0xff]
    %v3552 = vld [vmem:[#allocation3 + $0x360] sm:$0xf]
    %v3553 = vld [vmem:[#allocation3 + $0x364] sm:$0xff]
    %v3554 = vld [vmem:[#allocation3 + $0x36c] sm:$0xff]
    %v3555 = vld [vmem:[#allocation3 + $0x374] sm:$0xff]
    %v3556 = vld [vmem:[#allocation3 + $0x37c] sm:$0xf]
    %v3557 = vld [vmem:[#allocation3 + $0x380] sm:$0xff]
    %v3558 = vld [vmem:[#allocation3 + $0x388] sm:$0xff]
    %v3559 = vld [vmem:[#allocation3 + $0x390] sm:$0xff]
    %v3560 = vld [vmem:[#allocation3 + $0x398] sm:$0xf]
    %v3561 = vld [vmem:[#allocation3 + $0x39c] sm:$0xff]
    %v3562 = vld [vmem:[#allocation3 + $0x3a4] sm:$0xff]
    %v3563 = vld [vmem:[#allocation3 + $0x3ac] sm:$0xff]
    %v3564 = vld [vmem:[#allocation3 + $0x3b4] sm:$0xf]
    %v3565 = vld [vmem:[#allocation3 + $0x3b8] sm:$0xff]
    %v3566 = vld [vmem:[#allocation3 + $0x3c0] sm:$0xff]
    %v3567 = vld [vmem:[#allocation3 + $0x3c8] sm:$0xff]
    %v3568 = vld [vmem:[#allocation3 + $0x3d0] sm:$0xf]
    %v3569 = vld [vmem:[#allocation3 + $0x3d4] sm:$0xff]
    %v3570 = vld [vmem:[#allocation3 + $0x3dc] sm:$0xff]
    %v3571 = vld [vmem:[#allocation3 + $0x3e4] sm:$0xff]
    %v3572 = vld [vmem:[#allocation3 + $0x3ec] sm:$0xf]
    %v3573 = vld [vmem:[#allocation3 + $0x3f0] sm:$0xff]
    %v3574 = vld [vmem:[#allocation3 + $0x3f8] sm:$0xff]
    %v3575 = vld [vmem:[#allocation3 + $0x400] sm:$0xff]
    %v3576 = vld [vmem:[#allocation3 + $0x408] sm:$0xf]
    %v3577 = vld [vmem:[#allocation3 + $0x40c] sm:$0xff]
    %v3578 = vld [vmem:[#allocation3 + $0x414] sm:$0xff]
    %v3579 = vld [vmem:[#allocation3 + $0x41c] sm:$0xff]
    %v3580 = vld [vmem:[#allocation3 + $0x424] sm:$0xf]
    %v3581 = vld [vmem:[#allocation3 + $0x428] sm:$0xff]
    %v3582 = vld [vmem:[#allocation3 + $0x430] sm:$0xff]
    %v3583 = vld [vmem:[#allocation3 + $0x438] sm:$0xff]
    %v3584 = vld [vmem:[#allocation3 + $0x440] sm:$0xf]
    %v3585 = vld [vmem:[#allocation3 + $0x444] sm:$0xff]
    %v3586 = vld [vmem:[#allocation3 + $0x44c] sm:$0xff]
    %v3587 = vld [vmem:[#allocation3 + $0x454] sm:$0xff]
    %v3588 = vld [vmem:[#allocation3 + $0x45c] sm:$0xf]
    %v3589 = vld [vmem:[#allocation3 + $0x460] sm:$0xff]
    %v3590 = vld [vmem:[#allocation3 + $0x468] sm:$0xff]
    %v3591 = vld [vmem:[#allocation3 + $0x470] sm:$0xff]
    %v3592 = vld [vmem:[#allocation3 + $0x478] sm:$0xf]
    %v3593 = vld [vmem:[#allocation3 + $0x47c] sm:$0xff]
    %v3594 = vld [vmem:[#allocation3 + $0x484] sm:$0xff]
    %v3595 = vld [vmem:[#allocation3 + $0x48c] sm:$0xff]
    %v3596 = vld [vmem:[#allocation3 + $0x494] sm:$0xf]
    %v3597 = vld [vmem:[#allocation3 + $0x498] sm:$0xff]
    %v3598 = vld [vmem:[#allocation3 + $0x4a0] sm:$0xff]
    %v3599 = vld [vmem:[#allocation3 + $0x4a8] sm:$0xff]
    %v3600 = vld [vmem:[#allocation3 + $0x4b0] sm:$0xf]
    %v3601 = vld [vmem:[#allocation3 + $0x4b4] sm:$0xff]
    %v3602 = vld [vmem:[#allocation3 + $0x4bc] sm:$0xff]
    %v3603 = vld [vmem:[#allocation3 + $0x4c4] sm:$0xff]
    %v3604 = vld [vmem:[#allocation3 + $0x4cc] sm:$0xf]
    %v3605 = vld [vmem:[#allocation3 + $0x4d0] sm:$0xff]
    %v3606 = vld [vmem:[#allocation3 + $0x4d8] sm:$0xff]
    %v3607 = vld [vmem:[#allocation3 + $0x4e0] sm:$0xff]
    %v3608 = vld [vmem:[#allocation3 + $0x4e8] sm:$0xf]
    %v3609 = vld [vmem:[#allocation3 + $0x4ec] sm:$0xff]
    %v3610 = vld [vmem:[#allocation3 + $0x4f4] sm:$0xff]
    %v3611 = vld [vmem:[#allocation3 + $0x4fc] sm:$0xff]
    %v3612 = vld [vmem:[#allocation3 + $0x504] sm:$0xf]
    %v3613 = vld [vmem:[#allocation3 + $0x508] sm:$0xff]
    %v3614 = vld [vmem:[#allocation3 + $0x510] sm:$0xff]
    %v3615 = vld [vmem:[#allocation3 + $0x518] sm:$0xff]
    %v3616 = vld [vmem:[#allocation3 + $0x520] sm:$0xf]
    %v3617 = vld [vmem:[#allocation3 + $0x524] sm:$0xff]
    %v3618 = vld [vmem:[#allocation3 + $0x52c] sm:$0xff]
    %v3619 = vld [vmem:[#allocation3 + $0x534] sm:$0xff]
    %v3620 = vld [vmem:[#allocation3 + $0x53c] sm:$0xf]
    %v3621 = vld [vmem:[#allocation3 + $0x540] sm:$0xff]
    %v3622 = vld [vmem:[#allocation3 + $0x548] sm:$0xff]
    %v3623 = vld [vmem:[#allocation3 + $0x550] sm:$0xff]
    %v3624 = vld [vmem:[#allocation3 + $0x558] sm:$0xf]
    %v3625 = vld [vmem:[#allocation3 + $0x55c] sm:$0xff]
    %v3626 = vld [vmem:[#allocation3 + $0x564] sm:$0xff]
    %v3627 = vld [vmem:[#allocation3 + $0x56c] sm:$0xff]
    %v3628 = vld [vmem:[#allocation3 + $0x574] sm:$0xf]
    %v3629 = vld [vmem:[#allocation3 + $0x578] sm:$0xff]
    %v3630 = vld [vmem:[#allocation3 + $0x580] sm:$0xff]
    %v3631 = vld [vmem:[#allocation3 + $0x588] sm:$0xff]
    %v3632 = vld [vmem:[#allocation3 + $0x590] sm:$0xf]
    %v3633 = vld [vmem:[#allocation3 + $0x594] sm:$0xff]
    %v3634 = vld [vmem:[#allocation3 + $0x59c] sm:$0xff]
    %v3635 = vld [vmem:[#allocation3 + $0x5a4] sm:$0xff]
    %v3636 = vld [vmem:[#allocation3 + $0x5ac] sm:$0xf]
    %v3637 = vld [vmem:[#allocation3 + $0x5b0] sm:$0xff]
    %v3638 = vld [vmem:[#allocation3 + $0x5b8] sm:$0xff]
    %v3639 = vld [vmem:[#allocation3 + $0x5c0] sm:$0xff]
    %v3640 = vld [vmem:[#allocation3 + $0x5c8] sm:$0xf]
    %v3641 = vld [vmem:[#allocation3 + $0x5cc] sm:$0xff]
    %v3642 = vld [vmem:[#allocation3 + $0x5d4] sm:$0xff]
    %v3643 = vld [vmem:[#allocation3 + $0x5dc] sm:$0xff]
    %v3644 = vld [vmem:[#allocation3 + $0x5e4] sm:$0xf]
    %v3645 = vld [vmem:[#allocation3 + $0x5e8] sm:$0xff]
    %v3646 = vld [vmem:[#allocation3 + $0x5f0] sm:$0xff]
    %v3647 = vld [vmem:[#allocation3 + $0x5f8] sm:$0xff]
    %v3648 = vld [vmem:[#allocation3 + $0x600] sm:$0xf]
    %v3649 = vld [vmem:[#allocation3 + $0x604] sm:$0xff]
    %v3650 = vld [vmem:[#allocation3 + $0x60c] sm:$0xff]
    %v3651 = vld [vmem:[#allocation3 + $0x614] sm:$0xff]
    %v3652 = vld [vmem:[#allocation3 + $0x61c] sm:$0xf]
    %v3653 = vld [vmem:[#allocation3 + $0x620] sm:$0xff]
    %v3654 = vld [vmem:[#allocation3 + $0x628] sm:$0xff]
    %v3655 = vld [vmem:[#allocation3 + $0x630] sm:$0xff]
    %v3656 = vld [vmem:[#allocation3 + $0x638] sm:$0xf]
    %v3657 = vld [vmem:[#allocation3 + $0x63c] sm:$0xff]
    %v3658 = vld [vmem:[#allocation3 + $0x644] sm:$0xff]
    %v3659 = vld [vmem:[#allocation3 + $0x64c] sm:$0xff]
    %v3660 = vld [vmem:[#allocation3 + $0x654] sm:$0xf]
    %v3661 = vld [vmem:[#allocation3 + $0x658] sm:$0xff]
    %v3662 = vld [vmem:[#allocation3 + $0x660] sm:$0xff]
    %v3663 = vld [vmem:[#allocation3 + $0x668] sm:$0xff]
    %v3664 = vld [vmem:[#allocation3 + $0x670] sm:$0xf]
    %v3665 = vld [vmem:[#allocation3 + $0x674] sm:$0xff]
    %v3666 = vld [vmem:[#allocation3 + $0x67c] sm:$0xff]
    %v3667 = vld [vmem:[#allocation3 + $0x684] sm:$0xff]
    %v3668 = vld [vmem:[#allocation3 + $0x68c] sm:$0xf]
    %v3669 = vld [vmem:[#allocation3 + $0x690] sm:$0xff]
    %v3670 = vld [vmem:[#allocation3 + $0x698] sm:$0xff]
    %v3671 = vld [vmem:[#allocation3 + $0x6a0] sm:$0xff]
    %v3672 = vld [vmem:[#allocation3 + $0x6a8] sm:$0xf]
    %v3673 = vld [vmem:[#allocation3 + $0x6ac] sm:$0xff]
    %v3674 = vld [vmem:[#allocation3 + $0x6b4] sm:$0xff]
    %v3675 = vld [vmem:[#allocation3 + $0x6bc] sm:$0xff]
    %v3676 = vld [vmem:[#allocation3 + $0x6c4] sm:$0xf]
    %v3677 = vld [vmem:[#allocation3 + $0x6c8] sm:$0xff]
    %v3678 = vld [vmem:[#allocation3 + $0x6d0] sm:$0xff]
    %v3679 = vld [vmem:[#allocation3 + $0x6d8] sm:$0xff]
    %v3680 = vld [vmem:[#allocation3 + $0x6e0] sm:$0xf]
    %v3681 = vld [vmem:[#allocation3 + $0x6e4] sm:$0xff]
    %v3682 = vld [vmem:[#allocation3 + $0x6ec] sm:$0xff]
    %v3683 = vld [vmem:[#allocation3 + $0x6f4] sm:$0xff]
    %v3684 = vld [vmem:[#allocation3 + $0x6fc] sm:$0xf]
    %v3685 = vld [vmem:[#allocation3 + $0x700] sm:$0xff]
    %v3686 = vld [vmem:[#allocation3 + $0x708] sm:$0xff]
    %v3687 = vld [vmem:[#allocation3 + $0x710] sm:$0xff]
    %v3688 = vld [vmem:[#allocation3 + $0x718] sm:$0xf]
    %v3689 = vld [vmem:[#allocation3 + $0x71c] sm:$0xff]
    %v3690 = vld [vmem:[#allocation3 + $0x724] sm:$0xff]
    %v3691 = vld [vmem:[#allocation3 + $0x72c] sm:$0xff]
    %v3692 = vld [vmem:[#allocation3 + $0x734] sm:$0xf]
    %v3693 = vld [vmem:[#allocation3 + $0x738] sm:$0xff]
    %v3694 = vld [vmem:[#allocation3 + $0x740] sm:$0xff]
    %v3695 = vld [vmem:[#allocation3 + $0x748] sm:$0xff]
    %v3696 = vld [vmem:[#allocation3 + $0x750] sm:$0xf]
    %v3697 = vld [vmem:[#allocation3 + $0x754] sm:$0xff]
    %v3698 = vld [vmem:[#allocation3 + $0x75c] sm:$0xff]
    %v3699 = vld [vmem:[#allocation3 + $0x764] sm:$0xff]
    %v3700 = vld [vmem:[#allocation3 + $0x76c] sm:$0xf]
    %v3701 = vld [vmem:[#allocation3 + $0x770] sm:$0xff]
    %v3702 = vld [vmem:[#allocation3 + $0x778] sm:$0xff]
    %v3703 = vld [vmem:[#allocation3 + $0x780] sm:$0xff]
    %v3704 = vld [vmem:[#allocation3 + $0x788] sm:$0xf]
    %v3705 = vld [vmem:[#allocation3 + $0x78c] sm:$0xff]
    %v3706 = vld [vmem:[#allocation3 + $0x794] sm:$0xff]
    %v3707 = vld [vmem:[#allocation3 + $0x79c] sm:$0xff]
    %v3708 = vld [vmem:[#allocation3 + $0x7a4] sm:$0xf]
    %v3709 = vld [vmem:[#allocation3 + $0x7a8] sm:$0xff]
    %v3710 = vld [vmem:[#allocation3 + $0x7b0] sm:$0xff]
    %v3711 = vld [vmem:[#allocation3 + $0x7b8] sm:$0xff]
    %v3712 = vld [vmem:[#allocation3 + $0x7c0] sm:$0xf]
    %v3713 = vld [vmem:[#allocation3 + $0x7c4] sm:$0xff]
    %v3714 = vld [vmem:[#allocation3 + $0x7cc] sm:$0xff]
    %v3715 = vld [vmem:[#allocation3 + $0x7d4] sm:$0xff]
    %v3716 = vld [vmem:[#allocation3 + $0x7dc] sm:$0xf]
    %v3717 = vld [vmem:[#allocation3 + $0x7e0] sm:$0xff]
    %v3718 = vld [vmem:[#allocation3 + $0x7e8] sm:$0xff]
    %v3719 = vld [vmem:[#allocation3 + $0x7f0] sm:$0xff]
    %v3720 = vld [vmem:[#allocation3 + $0x7f8] sm:$0xf]
    %v3721 = vld [vmem:[#allocation3 + $0x7fc] sm:$0xff]
    %v3722 = vld [vmem:[#allocation3 + $0x804] sm:$0xff]
    %v3723 = vld [vmem:[#allocation3 + $0x80c] sm:$0xff]
    %v3724 = vld [vmem:[#allocation3 + $0x814] sm:$0xf]
    %v3725 = vld [vmem:[#allocation3 + $0x818] sm:$0xff]
    %v3726 = vld [vmem:[#allocation3 + $0x820] sm:$0xff]
    %v3727 = vld [vmem:[#allocation3 + $0x828] sm:$0xff]
    %v3728 = vld [vmem:[#allocation3 + $0x830] sm:$0xf]
    %v3729 = vld [vmem:[#allocation3 + $0x834] sm:$0xff]
    %v3730 = vld [vmem:[#allocation3 + $0x83c] sm:$0xff]
    %v3731 = vld [vmem:[#allocation3 + $0x844] sm:$0xff]
    %v3732 = vld [vmem:[#allocation3 + $0x84c] sm:$0xf]
    %v3733 = vld [vmem:[#allocation3 + $0x850] sm:$0xff]
    %v3734 = vld [vmem:[#allocation3 + $0x858] sm:$0xff]
    %v3735 = vld [vmem:[#allocation3 + $0x860] sm:$0xff]
    %v3736 = vld [vmem:[#allocation3 + $0x868] sm:$0xf]
    %v3737 = vld [vmem:[#allocation3 + $0x86c] sm:$0xff]
    %v3738 = vld [vmem:[#allocation3 + $0x874] sm:$0xff]
    %v3739 = vld [vmem:[#allocation3 + $0x87c] sm:$0xff]
    %v3740 = vld [vmem:[#allocation3 + $0x884] sm:$0xf]
    %v3741 = vld [vmem:[#allocation3 + $0x888] sm:$0xff]
    %v3742 = vld [vmem:[#allocation3 + $0x890] sm:$0xff]
    %v3743 = vld [vmem:[#allocation3 + $0x898] sm:$0xff]
    %v3744 = vld [vmem:[#allocation3 + $0x8a0] sm:$0xf]
    %v3745 = vld [vmem:[#allocation3 + $0x8a4] sm:$0xff]
    %v3746 = vld [vmem:[#allocation3 + $0x8ac] sm:$0xff]
    %v3747 = vld [vmem:[#allocation3 + $0x8b4] sm:$0xff]
    %v3748 = vld [vmem:[#allocation3 + $0x8bc] sm:$0xf]
    %v3749 = vld [vmem:[#allocation3 + $0x8c0] sm:$0xff]
    %v3750 = vld [vmem:[#allocation3 + $0x8c8] sm:$0xff]
    %v3751 = vld [vmem:[#allocation3 + $0x8d0] sm:$0xff]
    %v3752 = vld [vmem:[#allocation3 + $0x8d8] sm:$0xf]
    %v3753 = vld [vmem:[#allocation3 + $0x8dc] sm:$0xff]
    %v3754 = vld [vmem:[#allocation3 + $0x8e4] sm:$0xff]
    %v3755 = vld [vmem:[#allocation3 + $0x8ec] sm:$0xff]
    %v3756 = vld [vmem:[#allocation3 + $0x8f4] sm:$0xf]
    %v3757 = vld [vmem:[#allocation3 + $0x8f8] sm:$0xff]
    %v3758 = vld [vmem:[#allocation3 + $0x900] sm:$0xff]
    %v3759 = vld [vmem:[#allocation3 + $0x908] sm:$0xff]
    %v3760 = vld [vmem:[#allocation3 + $0x910] sm:$0xf]
    %v3761 = vld [vmem:[#allocation3 + $0x914] sm:$0xff]
    %v3762 = vld [vmem:[#allocation3 + $0x91c] sm:$0xff]
    %v3763 = vld [vmem:[#allocation3 + $0x924] sm:$0xff]
    %v3764 = vld [vmem:[#allocation3 + $0x92c] sm:$0xf]
    %v3765 = vld [vmem:[#allocation3 + $0x930] sm:$0xff]
    %v3766 = vld [vmem:[#allocation3 + $0x938] sm:$0xff]
    %v3767 = vld [vmem:[#allocation3 + $0x940] sm:$0xff]
    %v3768 = vld [vmem:[#allocation3 + $0x948] sm:$0xf]
    %v3769 = vld [vmem:[#allocation3 + $0x94c] sm:$0xff]
    %v3770 = vld [vmem:[#allocation3 + $0x954] sm:$0xff]
    %v3771 = vld [vmem:[#allocation3 + $0x95c] sm:$0xff]
    %v3772 = vld [vmem:[#allocation3 + $0x964] sm:$0xf]
    %v3773 = vld [vmem:[#allocation3 + $0x968] sm:$0xff]
    %v3774 = vld [vmem:[#allocation3 + $0x970] sm:$0xff]
    %v3775 = vld [vmem:[#allocation3 + $0x978] sm:$0xff]
    %v3776 = vld [vmem:[#allocation3 + $0x980] sm:$0xf]
    %v3777 = vld [vmem:[#allocation3 + $0x984] sm:$0xff]
    %v3778 = vld [vmem:[#allocation3 + $0x98c] sm:$0xff]
    %v3779 = vld [vmem:[#allocation3 + $0x994] sm:$0xff]
    %v3780 = vld [vmem:[#allocation3 + $0x99c] sm:$0xf]
    %v3781 = vld [vmem:[#allocation3 + $0x9a0] sm:$0xff]
    %v3782 = vld [vmem:[#allocation3 + $0x9a8] sm:$0xff]
    %v3783 = vld [vmem:[#allocation3 + $0x9b0] sm:$0xff]
    %v3784 = vld [vmem:[#allocation3 + $0x9b8] sm:$0xf]
    %v3785 = vld [vmem:[#allocation3 + $0x9bc] sm:$0xff]
    %v3786 = vld [vmem:[#allocation3 + $0x9c4] sm:$0xff]
    %v3787 = vld [vmem:[#allocation3 + $0x9cc] sm:$0xff]
    %v3788 = vld [vmem:[#allocation3 + $0x9d4] sm:$0xf]
    %v3789 = vld [vmem:[#allocation3 + $0x9d8] sm:$0xff]
    %v3790 = vld [vmem:[#allocation3 + $0x9e0] sm:$0xff]
    %v3791 = vld [vmem:[#allocation3 + $0x9e8] sm:$0xff]
    %v3792 = vld [vmem:[#allocation3 + $0x9f0] sm:$0xf]
    %v3793 = vld [vmem:[#allocation3 + $0x9f4] sm:$0xff]
    %v3794 = vld [vmem:[#allocation3 + $0x9fc] sm:$0xff]
    %v3795 = vld [vmem:[#allocation3 + $0xa04] sm:$0xff]
    %v3796 = vld [vmem:[#allocation3 + $0xa0c] sm:$0xf]
    %v3797 = vld [vmem:[#allocation3 + $0xa10] sm:$0xff]
    %v3798 = vld [vmem:[#allocation3 + $0xa18] sm:$0xff]
    %v3799 = vld [vmem:[#allocation3 + $0xa20] sm:$0xff]
    %v3800 = vld [vmem:[#allocation3 + $0xa28] sm:$0xf]
    %v3801 = vld [vmem:[#allocation3 + $0xa2c] sm:$0xff]
    %v3802 = vld [vmem:[#allocation3 + $0xa34] sm:$0xff]
    %v3803 = vld [vmem:[#allocation3 + $0xa3c] sm:$0xff]
    %v3804 = vld [vmem:[#allocation3 + $0xa44] sm:$0xf]
    %v3805 = vld [vmem:[#allocation3 + $0xa48] sm:$0xff]
    %v3806 = vld [vmem:[#allocation3 + $0xa50] sm:$0xff]
    %v3807 = vld [vmem:[#allocation3 + $0xa58] sm:$0xff]
    %v3808 = vld [vmem:[#allocation3 + $0xa60] sm:$0xf]
    %v3809 = vld [vmem:[#allocation3 + $0xa64] sm:$0xff]
    %v3810 = vld [vmem:[#allocation3 + $0xa6c] sm:$0xff]
    %v3811 = vld [vmem:[#allocation3 + $0xa74] sm:$0xff]
    %v3812 = vld [vmem:[#allocation3 + $0xa7c] sm:$0xf]
    %v3813 = vld [vmem:[#allocation3 + $0xa80] sm:$0xff]
    %v3814 = vld [vmem:[#allocation3 + $0xa88] sm:$0xff]
    %v3815 = vld [vmem:[#allocation3 + $0xa90] sm:$0xff]
    %v3816 = vld [vmem:[#allocation3 + $0xa98] sm:$0xf]
    %v3817 = vld [vmem:[#allocation3 + $0xa9c] sm:$0xff]
    %v3818 = vld [vmem:[#allocation3 + $0xaa4] sm:$0xff]
    %v3819 = vld [vmem:[#allocation3 + $0xaac] sm:$0xff]
    %v3820 = vld [vmem:[#allocation3 + $0xab4] sm:$0xf]
    %v3821 = vld [vmem:[#allocation3 + $0xab8] sm:$0xff]
    %v3822 = vld [vmem:[#allocation3 + $0xac0] sm:$0xff]
    %v3823 = vld [vmem:[#allocation3 + $0xac8] sm:$0xff]
    %v3824 = vld [vmem:[#allocation3 + $0xad0] sm:$0xf]
    %v3825 = vld [vmem:[#allocation3 + $0xad4] sm:$0xff]
    %v3826 = vld [vmem:[#allocation3 + $0xadc] sm:$0xff]
    %v3827 = vld [vmem:[#allocation3 + $0xae4] sm:$0xff]
    %v3828 = vld [vmem:[#allocation3 + $0xaec] sm:$0xf]
    %v3829 = vld [vmem:[#allocation3 + $0xaf0] sm:$0xff]
    %v3830 = vld [vmem:[#allocation3 + $0xaf8] sm:$0xff]
    %v3831 = vld [vmem:[#allocation3 + $0xb00] sm:$0xff]
    %v3832 = vld [vmem:[#allocation3 + $0xb08] sm:$0xf]
    %v3833 = vld [vmem:[#allocation3 + $0xb0c] sm:$0xff]
    %v3834 = vld [vmem:[#allocation3 + $0xb14] sm:$0xff]
    %v3835 = vld [vmem:[#allocation3 + $0xb1c] sm:$0xff]
    %v3836 = vld [vmem:[#allocation3 + $0xb24] sm:$0xf]
    %v3837 = vld [vmem:[#allocation3 + $0xb28] sm:$0xff]
    %v3838 = vld [vmem:[#allocation3 + $0xb30] sm:$0xff]
    %v3839 = vld [vmem:[#allocation3 + $0xb38] sm:$0xff]
    %v3840 = vld [vmem:[#allocation3 + $0xb40] sm:$0xf]
    %v3841 = vld [vmem:[#allocation3 + $0xb44] sm:$0xff]
    %v3842 = vld [vmem:[#allocation3 + $0xb4c] sm:$0xff]
    %v3843 = vld [vmem:[#allocation3 + $0xb54] sm:$0xff]
    %v3844 = vld [vmem:[#allocation3 + $0xb5c] sm:$0xf]
    %v3845 = vld [vmem:[#allocation3 + $0xb60] sm:$0xff]
    %v3846 = vld [vmem:[#allocation3 + $0xb68] sm:$0xff]
    %v3847 = vld [vmem:[#allocation3 + $0xb70] sm:$0xff]
    %v3848 = vld [vmem:[#allocation3 + $0xb78] sm:$0xf]
    %v3849 = vld [vmem:[#allocation3 + $0xb7c] sm:$0xff]
    %v3850 = vld [vmem:[#allocation3 + $0xb84] sm:$0xff]
    %v3851 = vld [vmem:[#allocation3 + $0xb8c] sm:$0xff]
    %v3852 = vld [vmem:[#allocation3 + $0xb94] sm:$0xf]
    %v3853 = vld [vmem:[#allocation3 + $0xb98] sm:$0xff]
    %v3854 = vld [vmem:[#allocation3 + $0xba0] sm:$0xff]
    %v3855 = vld [vmem:[#allocation3 + $0xba8] sm:$0xff]
    %v3856 = vld [vmem:[#allocation3 + $0xbb0] sm:$0xf]
    %v3857 = vld [vmem:[#allocation3 + $0xbb4] sm:$0xff]
    %v3858 = vld [vmem:[#allocation3 + $0xbbc] sm:$0xff]
    %v3859 = vld [vmem:[#allocation3 + $0xbc4] sm:$0xff]
    %v3860 = vld [vmem:[#allocation3 + $0xbcc] sm:$0xf]
    %v3861 = vld [vmem:[#allocation3 + $0xbd0] sm:$0xff]
    %v3862 = vld [vmem:[#allocation3 + $0xbd8] sm:$0xff]
    %v3863 = vld [vmem:[#allocation3 + $0xbe0] sm:$0xff]
    %v3864 = vld [vmem:[#allocation3 + $0xbe8] sm:$0xf]
    %v3865 = vld [vmem:[#allocation3 + $0xbec] sm:$0xff]
    %v3866 = vld [vmem:[#allocation3 + $0xbf4] sm:$0xff]
    %v3867 = vld [vmem:[#allocation3 + $0xbfc] sm:$0xff]
    %v3868 = vld [vmem:[#allocation3 + $0xc04] sm:$0xf]
    %v3869 = vld [vmem:[#allocation3 + $0xc08] sm:$0xff]
    %v3870 = vld [vmem:[#allocation3 + $0xc10] sm:$0xff]
    %v3871 = vld [vmem:[#allocation3 + $0xc18] sm:$0xff]
    %v3872 = vld [vmem:[#allocation3 + $0xc20] sm:$0xf]
    %v3873 = vld [vmem:[#allocation3 + $0xc24] sm:$0xff]
    %v3874 = vld [vmem:[#allocation3 + $0xc2c] sm:$0xff]
    %v3875 = vld [vmem:[#allocation3 + $0xc34] sm:$0xff]
    %v3876 = vld [vmem:[#allocation3 + $0xc3c] sm:$0xf]
    %v3877 = vld [vmem:[#allocation3 + $0xc40] sm:$0xff]
    %v3878 = vld [vmem:[#allocation3 + $0xc48] sm:$0xff]
    %v3879 = vld [vmem:[#allocation3 + $0xc50] sm:$0xff]
    %v3880 = vld [vmem:[#allocation3 + $0xc58] sm:$0xf]
    %v3881 = vld [vmem:[#allocation3 + $0xc5c] sm:$0xff]
    %v3882 = vld [vmem:[#allocation3 + $0xc64] sm:$0xff]
    %v3883 = vld [vmem:[#allocation3 + $0xc6c] sm:$0xff]
    %v3884 = vld [vmem:[#allocation3 + $0xc74] sm:$0xf]
    %v3885 = vld [vmem:[#allocation3 + $0xc78] sm:$0xff]
    %v3886 = vld [vmem:[#allocation3 + $0xc80] sm:$0xff]
    %v3887 = vld [vmem:[#allocation3 + $0xc88] sm:$0xff]
    %v3888 = vld [vmem:[#allocation3 + $0xc90] sm:$0xf]
    %v3889 = vld [vmem:[#allocation3 + $0xc94] sm:$0xff]
    %v3890 = vld [vmem:[#allocation3 + $0xc9c] sm:$0xff]
    %v3891 = vld [vmem:[#allocation3 + $0xca4] sm:$0xff]
    %v3892 = vld [vmem:[#allocation3 + $0xcac] sm:$0xf]
    %v3893 = vld [vmem:[#allocation3 + $0xcb0] sm:$0xff]
    %v3894 = vld [vmem:[#allocation3 + $0xcb8] sm:$0xff]
    %v3895 = vld [vmem:[#allocation3 + $0xcc0] sm:$0xff]
    %v3896 = vld [vmem:[#allocation3 + $0xcc8] sm:$0xf]
    %v3897 = vld [vmem:[#allocation3 + $0xccc] sm:$0xff]
    %v3898 = vld [vmem:[#allocation3 + $0xcd4] sm:$0xff]
    %v3899 = vld [vmem:[#allocation3 + $0xcdc] sm:$0xff]
    %v3900 = vld [vmem:[#allocation3 + $0xce4] sm:$0xf]
    %v3901 = vld [vmem:[#allocation3 + $0xce8] sm:$0xff]
    %v3902 = vld [vmem:[#allocation3 + $0xcf0] sm:$0xff]
    %v3903 = vld [vmem:[#allocation3 + $0xcf8] sm:$0xff]
    %v3904 = vld [vmem:[#allocation3 + $0xd00] sm:$0xf]
    %v3905 = vld [vmem:[#allocation3 + $0xd04] sm:$0xff]
    %v3906 = vld [vmem:[#allocation3 + $0xd0c] sm:$0xff]
    %v3907 = vld [vmem:[#allocation3 + $0xd14] sm:$0xff]
    %v3908 = vld [vmem:[#allocation3 + $0xd1c] sm:$0xf]
    %v3909 = vld [vmem:[#allocation3 + $0xd20] sm:$0xff]
    %v3910 = vld [vmem:[#allocation3 + $0xd28] sm:$0xff]
    %v3911 = vld [vmem:[#allocation3 + $0xd30] sm:$0xff]
    %v3912 = vld [vmem:[#allocation3 + $0xd38] sm:$0xf]
    %v3913 = vld [vmem:[#allocation3 + $0xd3c] sm:$0xff]
    %v3914 = vld [vmem:[#allocation3 + $0xd44] sm:$0xff]
    %v3915 = vld [vmem:[#allocation3 + $0xd4c] sm:$0xff]
    %v3916 = vld [vmem:[#allocation3 + $0xd54] sm:$0xf]
    %v3917 = vld [vmem:[#allocation3 + $0xd58] sm:$0xff]
    %v3918 = vld [vmem:[#allocation3 + $0xd60] sm:$0xff]
    %v3919 = vld [vmem:[#allocation3 + $0xd68] sm:$0xff]
    %v3920 = vld [vmem:[#allocation3 + $0xd70] sm:$0xf]
    %v3921 = vld [vmem:[#allocation3 + $0xd74] sm:$0xff]
    %v3922 = vld [vmem:[#allocation3 + $0xd7c] sm:$0xff]
    %v3923 = vld [vmem:[#allocation3 + $0xd84] sm:$0xff]
    %v3924 = vld [vmem:[#allocation3 + $0xd8c] sm:$0xf]
    %v3925 = vld [vmem:[#allocation3 + $0xd90] sm:$0xff]
    %v3926 = vld [vmem:[#allocation3 + $0xd98] sm:$0xff]
    %v3927 = vld [vmem:[#allocation3 + $0xda0] sm:$0xff]
    %v3928 = vld [vmem:[#allocation3 + $0xda8] sm:$0xf]
    %v3929 = vld [vmem:[#allocation3 + $0xdac] sm:$0xff]
    %v3930 = vld [vmem:[#allocation3 + $0xdb4] sm:$0xff]
    %v3931 = vld [vmem:[#allocation3 + $0xdbc] sm:$0xff]
    %v3932 = vld [vmem:[#allocation3 + $0xdc4] sm:$0xf]
    %v3933 = vld [vmem:[#allocation3 + $0xdc8] sm:$0xff]
    %v3934 = vld [vmem:[#allocation3 + $0xdd0] sm:$0xff]
    %v3935 = vld [vmem:[#allocation3 + $0xdd8] sm:$0xff]
    %v3936 = vld [vmem:[#allocation3 + $0xde0] sm:$0xf]
    %v3937 = vld [vmem:[#allocation3 + $0xde4] sm:$0xff]
    %v3938 = vld [vmem:[#allocation3 + $0xdec] sm:$0xff]
    %v3939 = vld [vmem:[#allocation3 + $0xdf4] sm:$0xff]
    %v3940 = vld [vmem:[#allocation3 + $0xdfc] sm:$0xf]
    %v3941 = vld [vmem:[#allocation17] sm:$0xff]
    %v3943 = vperm.slane %v3941, 0
    %v3944 = vperm.slane %v3941, 1
    %v3945 = vperm.slane %v3941, 2
    %v3946 = vperm.slane %v3941, 3
    %v3947 = vperm.slane %v3941, 4
    %v3948 = vperm.slane %v3941, 5
    %v3949 = vperm.slane %v3941, 6
    %v4469 = vunpack.c.l.b16 %v3429
    %v4470 = vunpack.c.h.b16 %v3429
    %v4471 = vunpack.c.l.b16 %v3430
    %v4472 = vunpack.c.h.b16 %v3430
    %v4473 = vunpack.c.l.b16 %v3431
    %v4474 = vunpack.c.h.b16 %v3431
    %v4475 = vunpack.c.l.b16 %v3432
    %v4476 = vunpack.c.l.b16 %v3433
    %v4477 = vunpack.c.h.b16 %v3433
    %v4478 = vunpack.c.l.b16 %v3434
    %v4479 = vunpack.c.h.b16 %v3434
    %v4480 = vunpack.c.l.b16 %v3435
    %v4481 = vunpack.c.h.b16 %v3435
    %v4482 = vunpack.c.l.b16 %v3436
    %v4483 = vunpack.c.l.b16 %v3437
    %v4484 = vunpack.c.h.b16 %v3437
    %v4485 = vunpack.c.l.b16 %v3438
    %v4486 = vunpack.c.h.b16 %v3438
    %v4487 = vunpack.c.l.b16 %v3439
    %v4488 = vunpack.c.h.b16 %v3439
    %v4489 = vunpack.c.l.b16 %v3440
    %v4490 = vunpack.c.l.b16 %v3441
    %v4491 = vunpack.c.h.b16 %v3441
    %v4492 = vunpack.c.l.b16 %v3442
    %v4493 = vunpack.c.h.b16 %v3442
    %v4494 = vunpack.c.l.b16 %v3443
    %v4495 = vunpack.c.h.b16 %v3443
    %v4496 = vunpack.c.l.b16 %v3444
    %v4497 = vunpack.c.l.b16 %v3445
    %v4498 = vunpack.c.h.b16 %v3445
    %v4499 = vunpack.c.l.b16 %v3446
    %v4500 = vunpack.c.h.b16 %v3446
    %v4501 = vunpack.c.l.b16 %v3447
    %v4502 = vunpack.c.h.b16 %v3447
    %v4503 = vunpack.c.l.b16 %v3448
    %v4504 = vunpack.c.l.b16 %v3449
    %v4505 = vunpack.c.h.b16 %v3449
    %v4506 = vunpack.c.l.b16 %v3450
    %v4507 = vunpack.c.h.b16 %v3450
    %v4508 = vunpack.c.l.b16 %v3451
    %v4509 = vunpack.c.h.b16 %v3451
    %v4510 = vunpack.c.l.b16 %v3452
    %v4511 = vunpack.c.l.b16 %v3453
    %v4512 = vunpack.c.h.b16 %v3453
    %v4513 = vunpack.c.l.b16 %v3454
    %v4514 = vunpack.c.h.b16 %v3454
    %v4515 = vunpack.c.l.b16 %v3455
    %v4516 = vunpack.c.h.b16 %v3455
    %v4517 = vunpack.c.l.b16 %v3456
    %v4518 = vunpack.c.l.b16 %v3457
    %v4519 = vunpack.c.h.b16 %v3457
    %v4520 = vunpack.c.l.b16 %v3458
    %v4521 = vunpack.c.h.b16 %v3458
    %v4522 = vunpack.c.l.b16 %v3459
    %v4523 = vunpack.c.h.b16 %v3459
    %v4524 = vunpack.c.l.b16 %v3460
    %v4525 = vunpack.c.l.b16 %v3461
    %v4526 = vunpack.c.h.b16 %v3461
    %v4527 = vunpack.c.l.b16 %v3462
    %v4528 = vunpack.c.h.b16 %v3462
    %v4529 = vunpack.c.l.b16 %v3463
    %v4530 = vunpack.c.h.b16 %v3463
    %v4531 = vunpack.c.l.b16 %v3464
    %v4532 = vunpack.c.l.b16 %v3465
    %v4533 = vunpack.c.h.b16 %v3465
    %v4534 = vunpack.c.l.b16 %v3466
    %v4535 = vunpack.c.h.b16 %v3466
    %v4536 = vunpack.c.l.b16 %v3467
    %v4537 = vunpack.c.h.b16 %v3467
    %v4538 = vunpack.c.l.b16 %v3468
    %v4539 = vunpack.c.l.b16 %v3469
    %v4540 = vunpack.c.h.b16 %v3469
    %v4541 = vunpack.c.l.b16 %v3470
    %v4542 = vunpack.c.h.b16 %v3470
    %v4543 = vunpack.c.l.b16 %v3471
    %v4544 = vunpack.c.h.b16 %v3471
    %v4545 = vunpack.c.l.b16 %v3472
    %v4546 = vunpack.c.l.b16 %v3473
    %v4547 = vunpack.c.h.b16 %v3473
    %v4548 = vunpack.c.l.b16 %v3474
    %v4549 = vunpack.c.h.b16 %v3474
    %v4550 = vunpack.c.l.b16 %v3475
    %v4551 = vunpack.c.h.b16 %v3475
    %v4552 = vunpack.c.l.b16 %v3476
    %v4553 = vunpack.c.l.b16 %v3477
    %v4554 = vunpack.c.h.b16 %v3477
    %v4555 = vunpack.c.l.b16 %v3478
    %v4556 = vunpack.c.h.b16 %v3478
    %v4557 = vunpack.c.l.b16 %v3479
    %v4558 = vunpack.c.h.b16 %v3479
    %v4559 = vunpack.c.l.b16 %v3480
    %v4560 = vunpack.c.l.b16 %v3481
    %v4561 = vunpack.c.h.b16 %v3481
    %v4562 = vunpack.c.l.b16 %v3482
    %v4563 = vunpack.c.h.b16 %v3482
    %v4564 = vunpack.c.l.b16 %v3483
    %v4565 = vunpack.c.h.b16 %v3483
    %v4566 = vunpack.c.l.b16 %v3484
    %v4567 = vunpack.c.l.b16 %v3485
    %v4568 = vunpack.c.h.b16 %v3485
    %v4569 = vunpack.c.l.b16 %v3486
    %v4570 = vunpack.c.h.b16 %v3486
    %v4571 = vunpack.c.l.b16 %v3487
    %v4572 = vunpack.c.h.b16 %v3487
    %v4573 = vunpack.c.l.b16 %v3488
    %v4574 = vunpack.c.l.b16 %v3489
    %v4575 = vunpack.c.h.b16 %v3489
    %v4576 = vunpack.c.l.b16 %v3490
    %v4577 = vunpack.c.h.b16 %v3490
    %v4578 = vunpack.c.l.b16 %v3491
    %v4579 = vunpack.c.h.b16 %v3491
    %v4580 = vunpack.c.l.b16 %v3492
    %v4581 = vunpack.c.l.b16 %v3493
    %v4582 = vunpack.c.h.b16 %v3493
    %v4583 = vunpack.c.l.b16 %v3494
    %v4584 = vunpack.c.h.b16 %v3494
    %v4585 = vunpack.c.l.b16 %v3495
    %v4586 = vunpack.c.h.b16 %v3495
    %v4587 = vunpack.c.l.b16 %v3496
    %v4588 = vunpack.c.l.b16 %v3497
    %v4589 = vunpack.c.h.b16 %v3497
    %v4590 = vunpack.c.l.b16 %v3498
    %v4591 = vunpack.c.h.b16 %v3498
    %v4592 = vunpack.c.l.b16 %v3499
    %v4593 = vunpack.c.h.b16 %v3499
    %v4594 = vunpack.c.l.b16 %v3500
    %v4595 = vunpack.c.l.b16 %v3501
    %v4596 = vunpack.c.h.b16 %v3501
    %v4597 = vunpack.c.l.b16 %v3502
    %v4598 = vunpack.c.h.b16 %v3502
    %v4599 = vunpack.c.l.b16 %v3503
    %v4600 = vunpack.c.h.b16 %v3503
    %v4601 = vunpack.c.l.b16 %v3504
    %v4602 = vunpack.c.l.b16 %v3505
    %v4603 = vunpack.c.h.b16 %v3505
    %v4604 = vunpack.c.l.b16 %v3506
    %v4605 = vunpack.c.h.b16 %v3506
    %v4606 = vunpack.c.l.b16 %v3507
    %v4607 = vunpack.c.h.b16 %v3507
    %v4608 = vunpack.c.l.b16 %v3508
    %v4609 = vunpack.c.l.b16 %v3509
    %v4610 = vunpack.c.h.b16 %v3509
    %v4611 = vunpack.c.l.b16 %v3510
    %v4612 = vunpack.c.h.b16 %v3510
    %v4613 = vunpack.c.l.b16 %v3511
    %v4614 = vunpack.c.h.b16 %v3511
    %v4615 = vunpack.c.l.b16 %v3512
    %v4616 = vunpack.c.l.b16 %v3513
    %v4617 = vunpack.c.h.b16 %v3513
    %v4618 = vunpack.c.l.b16 %v3514
    %v4619 = vunpack.c.h.b16 %v3514
    %v4620 = vunpack.c.l.b16 %v3515
    %v4621 = vunpack.c.h.b16 %v3515
    %v4622 = vunpack.c.l.b16 %v3516
    %v4623 = vunpack.c.l.b16 %v3517
    %v4624 = vunpack.c.h.b16 %v3517
    %v4625 = vunpack.c.l.b16 %v3518
    %v4626 = vunpack.c.h.b16 %v3518
    %v4627 = vunpack.c.l.b16 %v3519
    %v4628 = vunpack.c.h.b16 %v3519
    %v4629 = vunpack.c.l.b16 %v3520
    %v4630 = vunpack.c.l.b16 %v3521
    %v4631 = vunpack.c.h.b16 %v3521
    %v4632 = vunpack.c.l.b16 %v3522
    %v4633 = vunpack.c.h.b16 %v3522
    %v4634 = vunpack.c.l.b16 %v3523
    %v4635 = vunpack.c.h.b16 %v3523
    %v4636 = vunpack.c.l.b16 %v3524
    %v4637 = vunpack.c.l.b16 %v3525
    %v4638 = vunpack.c.h.b16 %v3525
    %v4639 = vunpack.c.l.b16 %v3526
    %v4640 = vunpack.c.h.b16 %v3526
    %v4641 = vunpack.c.l.b16 %v3527
    %v4642 = vunpack.c.h.b16 %v3527
    %v4643 = vunpack.c.l.b16 %v3528
    %v4644 = vunpack.c.l.b16 %v3529
    %v4645 = vunpack.c.h.b16 %v3529
    %v4646 = vunpack.c.l.b16 %v3530
    %v4647 = vunpack.c.h.b16 %v3530
    %v4648 = vunpack.c.l.b16 %v3531
    %v4649 = vunpack.c.h.b16 %v3531
    %v4650 = vunpack.c.l.b16 %v3532
    %v4651 = vunpack.c.l.b16 %v3533
    %v4652 = vunpack.c.h.b16 %v3533
    %v4653 = vunpack.c.l.b16 %v3534
    %v4654 = vunpack.c.h.b16 %v3534
    %v4655 = vunpack.c.l.b16 %v3535
    %v4656 = vunpack.c.h.b16 %v3535
    %v4657 = vunpack.c.l.b16 %v3536
    %v4658 = vunpack.c.l.b16 %v3537
    %v4659 = vunpack.c.h.b16 %v3537
    %v4660 = vunpack.c.l.b16 %v3538
    %v4661 = vunpack.c.h.b16 %v3538
    %v4662 = vunpack.c.l.b16 %v3539
    %v4663 = vunpack.c.h.b16 %v3539
    %v4664 = vunpack.c.l.b16 %v3540
    %v4665 = vunpack.c.l.b16 %v3541
    %v4666 = vunpack.c.h.b16 %v3541
    %v4667 = vunpack.c.l.b16 %v3542
    %v4668 = vunpack.c.h.b16 %v3542
    %v4669 = vunpack.c.l.b16 %v3543
    %v4670 = vunpack.c.h.b16 %v3543
    %v4671 = vunpack.c.l.b16 %v3544
    %v4672 = vunpack.c.l.b16 %v3545
    %v4673 = vunpack.c.h.b16 %v3545
    %v4674 = vunpack.c.l.b16 %v3546
    %v4675 = vunpack.c.h.b16 %v3546
    %v4676 = vunpack.c.l.b16 %v3547
    %v4677 = vunpack.c.h.b16 %v3547
    %v4678 = vunpack.c.l.b16 %v3548
    %v4679 = vunpack.c.l.b16 %v3549
    %v4680 = vunpack.c.h.b16 %v3549
    %v4681 = vunpack.c.l.b16 %v3550
    %v4682 = vunpack.c.h.b16 %v3550
    %v4683 = vunpack.c.l.b16 %v3551
    %v4684 = vunpack.c.h.b16 %v3551
    %v4685 = vunpack.c.l.b16 %v3552
    %v4686 = vunpack.c.l.b16 %v3553
    %v4687 = vunpack.c.h.b16 %v3553
    %v4688 = vunpack.c.l.b16 %v3554
    %v4689 = vunpack.c.h.b16 %v3554
    %v4690 = vunpack.c.l.b16 %v3555
    %v4691 = vunpack.c.h.b16 %v3555
    %v4692 = vunpack.c.l.b16 %v3556
    %v4693 = vunpack.c.l.b16 %v3557
    %v4694 = vunpack.c.h.b16 %v3557
    %v4695 = vunpack.c.l.b16 %v3558
    %v4696 = vunpack.c.h.b16 %v3558
    %v4697 = vunpack.c.l.b16 %v3559
    %v4698 = vunpack.c.h.b16 %v3559
    %v4699 = vunpack.c.l.b16 %v3560
    %v4700 = vunpack.c.l.b16 %v3561
    %v4701 = vunpack.c.h.b16 %v3561
    %v4702 = vunpack.c.l.b16 %v3562
    %v4703 = vunpack.c.h.b16 %v3562
    %v4704 = vunpack.c.l.b16 %v3563
    %v4705 = vunpack.c.h.b16 %v3563
    %v4706 = vunpack.c.l.b16 %v3564
    %v4707 = vunpack.c.l.b16 %v3565
    %v4708 = vunpack.c.h.b16 %v3565
    %v4709 = vunpack.c.l.b16 %v3566
    %v4710 = vunpack.c.h.b16 %v3566
    %v4711 = vunpack.c.l.b16 %v3567
    %v4712 = vunpack.c.h.b16 %v3567
    %v4713 = vunpack.c.l.b16 %v3568
    %v4714 = vunpack.c.l.b16 %v3569
    %v4715 = vunpack.c.h.b16 %v3569
    %v4716 = vunpack.c.l.b16 %v3570
    %v4717 = vunpack.c.h.b16 %v3570
    %v4718 = vunpack.c.l.b16 %v3571
    %v4719 = vunpack.c.h.b16 %v3571
    %v4720 = vunpack.c.l.b16 %v3572
    %v4721 = vunpack.c.l.b16 %v3573
    %v4722 = vunpack.c.h.b16 %v3573
    %v4723 = vunpack.c.l.b16 %v3574
    %v4724 = vunpack.c.h.b16 %v3574
    %v4725 = vunpack.c.l.b16 %v3575
    %v4726 = vunpack.c.h.b16 %v3575
    %v4727 = vunpack.c.l.b16 %v3576
    %v4728 = vunpack.c.l.b16 %v3577
    %v4729 = vunpack.c.h.b16 %v3577
    %v4730 = vunpack.c.l.b16 %v3578
    %v4731 = vunpack.c.h.b16 %v3578
    %v4732 = vunpack.c.l.b16 %v3579
    %v4733 = vunpack.c.h.b16 %v3579
    %v4734 = vunpack.c.l.b16 %v3580
    %v4735 = vunpack.c.l.b16 %v3581
    %v4736 = vunpack.c.h.b16 %v3581
    %v4737 = vunpack.c.l.b16 %v3582
    %v4738 = vunpack.c.h.b16 %v3582
    %v4739 = vunpack.c.l.b16 %v3583
    %v4740 = vunpack.c.h.b16 %v3583
    %v4741 = vunpack.c.l.b16 %v3584
    %v4742 = vunpack.c.l.b16 %v3585
    %v4743 = vunpack.c.h.b16 %v3585
    %v4744 = vunpack.c.l.b16 %v3586
    %v4745 = vunpack.c.h.b16 %v3586
    %v4746 = vunpack.c.l.b16 %v3587
    %v4747 = vunpack.c.h.b16 %v3587
    %v4748 = vunpack.c.l.b16 %v3588
    %v4749 = vunpack.c.l.b16 %v3589
    %v4750 = vunpack.c.h.b16 %v3589
    %v4751 = vunpack.c.l.b16 %v3590
    %v4752 = vunpack.c.h.b16 %v3590
    %v4753 = vunpack.c.l.b16 %v3591
    %v4754 = vunpack.c.h.b16 %v3591
    %v4755 = vunpack.c.l.b16 %v3592
    %v4756 = vunpack.c.l.b16 %v3593
    %v4757 = vunpack.c.h.b16 %v3593
    %v4758 = vunpack.c.l.b16 %v3594
    %v4759 = vunpack.c.h.b16 %v3594
    %v4760 = vunpack.c.l.b16 %v3595
    %v4761 = vunpack.c.h.b16 %v3595
    %v4762 = vunpack.c.l.b16 %v3596
    %v4763 = vunpack.c.l.b16 %v3597
    %v4764 = vunpack.c.h.b16 %v3597
    %v4765 = vunpack.c.l.b16 %v3598
    %v4766 = vunpack.c.h.b16 %v3598
    %v4767 = vunpack.c.l.b16 %v3599
    %v4768 = vunpack.c.h.b16 %v3599
    %v4769 = vunpack.c.l.b16 %v3600
    %v4770 = vunpack.c.l.b16 %v3601
    %v4771 = vunpack.c.h.b16 %v3601
    %v4772 = vunpack.c.l.b16 %v3602
    %v4773 = vunpack.c.h.b16 %v3602
    %v4774 = vunpack.c.l.b16 %v3603
    %v4775 = vunpack.c.h.b16 %v3603
    %v4776 = vunpack.c.l.b16 %v3604
    %v4777 = vunpack.c.l.b16 %v3605
    %v4778 = vunpack.c.h.b16 %v3605
    %v4779 = vunpack.c.l.b16 %v3606
    %v4780 = vunpack.c.h.b16 %v3606
    %v4781 = vunpack.c.l.b16 %v3607
    %v4782 = vunpack.c.h.b16 %v3607
    %v4783 = vunpack.c.l.b16 %v3608
    %v4784 = vunpack.c.l.b16 %v3609
    %v4785 = vunpack.c.h.b16 %v3609
    %v4786 = vunpack.c.l.b16 %v3610
    %v4787 = vunpack.c.h.b16 %v3610
    %v4788 = vunpack.c.l.b16 %v3611
    %v4789 = vunpack.c.h.b16 %v3611
    %v4790 = vunpack.c.l.b16 %v3612
    %v4791 = vunpack.c.l.b16 %v3613
    %v4792 = vunpack.c.h.b16 %v3613
    %v4793 = vunpack.c.l.b16 %v3614
    %v4794 = vunpack.c.h.b16 %v3614
    %v4795 = vunpack.c.l.b16 %v3615
    %v4796 = vunpack.c.h.b16 %v3615
    %v4797 = vunpack.c.l.b16 %v3616
    %v4798 = vunpack.c.l.b16 %v3617
    %v4799 = vunpack.c.h.b16 %v3617
    %v4800 = vunpack.c.l.b16 %v3618
    %v4801 = vunpack.c.h.b16 %v3618
    %v4802 = vunpack.c.l.b16 %v3619
    %v4803 = vunpack.c.h.b16 %v3619
    %v4804 = vunpack.c.l.b16 %v3620
    %v4805 = vunpack.c.l.b16 %v3621
    %v4806 = vunpack.c.h.b16 %v3621
    %v4807 = vunpack.c.l.b16 %v3622
    %v4808 = vunpack.c.h.b16 %v3622
    %v4809 = vunpack.c.l.b16 %v3623
    %v4810 = vunpack.c.h.b16 %v3623
    %v4811 = vunpack.c.l.b16 %v3624
    %v4812 = vunpack.c.l.b16 %v3625
    %v4813 = vunpack.c.h.b16 %v3625
    %v4814 = vunpack.c.l.b16 %v3626
    %v4815 = vunpack.c.h.b16 %v3626
    %v4816 = vunpack.c.l.b16 %v3627
    %v4817 = vunpack.c.h.b16 %v3627
    %v4818 = vunpack.c.l.b16 %v3628
    %v4819 = vunpack.c.l.b16 %v3629
    %v4820 = vunpack.c.h.b16 %v3629
    %v4821 = vunpack.c.l.b16 %v3630
    %v4822 = vunpack.c.h.b16 %v3630
    %v4823 = vunpack.c.l.b16 %v3631
    %v4824 = vunpack.c.h.b16 %v3631
    %v4825 = vunpack.c.l.b16 %v3632
    %v4826 = vunpack.c.l.b16 %v3633
    %v4827 = vunpack.c.h.b16 %v3633
    %v4828 = vunpack.c.l.b16 %v3634
    %v4829 = vunpack.c.h.b16 %v3634
    %v4830 = vunpack.c.l.b16 %v3635
    %v4831 = vunpack.c.h.b16 %v3635
    %v4832 = vunpack.c.l.b16 %v3636
    %v4833 = vunpack.c.l.b16 %v3637
    %v4834 = vunpack.c.h.b16 %v3637
    %v4835 = vunpack.c.l.b16 %v3638
    %v4836 = vunpack.c.h.b16 %v3638
    %v4837 = vunpack.c.l.b16 %v3639
    %v4838 = vunpack.c.h.b16 %v3639
    %v4839 = vunpack.c.l.b16 %v3640
    %v4840 = vunpack.c.l.b16 %v3641
    %v4841 = vunpack.c.h.b16 %v3641
    %v4842 = vunpack.c.l.b16 %v3642
    %v4843 = vunpack.c.h.b16 %v3642
    %v4844 = vunpack.c.l.b16 %v3643
    %v4845 = vunpack.c.h.b16 %v3643
    %v4846 = vunpack.c.l.b16 %v3644
    %v4847 = vunpack.c.l.b16 %v3645
    %v4848 = vunpack.c.h.b16 %v3645
    %v4849 = vunpack.c.l.b16 %v3646
    %v4850 = vunpack.c.h.b16 %v3646
    %v4851 = vunpack.c.l.b16 %v3647
    %v4852 = vunpack.c.h.b16 %v3647
    %v4853 = vunpack.c.l.b16 %v3648
    %v4854 = vunpack.c.l.b16 %v3649
    %v4855 = vunpack.c.h.b16 %v3649
    %v4856 = vunpack.c.l.b16 %v3650
    %v4857 = vunpack.c.h.b16 %v3650
    %v4858 = vunpack.c.l.b16 %v3651
    %v4859 = vunpack.c.h.b16 %v3651
    %v4860 = vunpack.c.l.b16 %v3652
    %v4861 = vunpack.c.l.b16 %v3653
    %v4862 = vunpack.c.h.b16 %v3653
    %v4863 = vunpack.c.l.b16 %v3654
    %v4864 = vunpack.c.h.b16 %v3654
    %v4865 = vunpack.c.l.b16 %v3655
    %v4866 = vunpack.c.h.b16 %v3655
    %v4867 = vunpack.c.l.b16 %v3656
    %v4868 = vunpack.c.l.b16 %v3657
    %v4869 = vunpack.c.h.b16 %v3657
    %v4870 = vunpack.c.l.b16 %v3658
    %v4871 = vunpack.c.h.b16 %v3658
    %v4872 = vunpack.c.l.b16 %v3659
    %v4873 = vunpack.c.h.b16 %v3659
    %v4874 = vunpack.c.l.b16 %v3660
    %v4875 = vunpack.c.l.b16 %v3661
    %v4876 = vunpack.c.h.b16 %v3661
    %v4877 = vunpack.c.l.b16 %v3662
    %v4878 = vunpack.c.h.b16 %v3662
    %v4879 = vunpack.c.l.b16 %v3663
    %v4880 = vunpack.c.h.b16 %v3663
    %v4881 = vunpack.c.l.b16 %v3664
    %v4882 = vunpack.c.l.b16 %v3665
    %v4883 = vunpack.c.h.b16 %v3665
    %v4884 = vunpack.c.l.b16 %v3666
    %v4885 = vunpack.c.h.b16 %v3666
    %v4886 = vunpack.c.l.b16 %v3667
    %v4887 = vunpack.c.h.b16 %v3667
    %v4888 = vunpack.c.l.b16 %v3668
    %v4889 = vunpack.c.l.b16 %v3669
    %v4890 = vunpack.c.h.b16 %v3669
    %v4891 = vunpack.c.l.b16 %v3670
    %v4892 = vunpack.c.h.b16 %v3670
    %v4893 = vunpack.c.l.b16 %v3671
    %v4894 = vunpack.c.h.b16 %v3671
    %v4895 = vunpack.c.l.b16 %v3672
    %v4896 = vunpack.c.l.b16 %v3673
    %v4897 = vunpack.c.h.b16 %v3673
    %v4898 = vunpack.c.l.b16 %v3674
    %v4899 = vunpack.c.h.b16 %v3674
    %v4900 = vunpack.c.l.b16 %v3675
    %v4901 = vunpack.c.h.b16 %v3675
    %v4902 = vunpack.c.l.b16 %v3676
    %v4903 = vunpack.c.l.b16 %v3677
    %v4904 = vunpack.c.h.b16 %v3677
    %v4905 = vunpack.c.l.b16 %v3678
    %v4906 = vunpack.c.h.b16 %v3678
    %v4907 = vunpack.c.l.b16 %v3679
    %v4908 = vunpack.c.h.b16 %v3679
    %v4909 = vunpack.c.l.b16 %v3680
    %v4910 = vunpack.c.l.b16 %v3681
    %v4911 = vunpack.c.h.b16 %v3681
    %v4912 = vunpack.c.l.b16 %v3682
    %v4913 = vunpack.c.h.b16 %v3682
    %v4914 = vunpack.c.l.b16 %v3683
    %v4915 = vunpack.c.h.b16 %v3683
    %v4916 = vunpack.c.l.b16 %v3684
    %v4917 = vunpack.c.l.b16 %v3685
    %v4918 = vunpack.c.h.b16 %v3685
    %v4919 = vunpack.c.l.b16 %v3686
    %v4920 = vunpack.c.h.b16 %v3686
    %v4921 = vunpack.c.l.b16 %v3687
    %v4922 = vunpack.c.h.b16 %v3687
    %v4923 = vunpack.c.l.b16 %v3688
    %v4924 = vunpack.c.l.b16 %v3689
    %v4925 = vunpack.c.h.b16 %v3689
    %v4926 = vunpack.c.l.b16 %v3690
    %v4927 = vunpack.c.h.b16 %v3690
    %v4928 = vunpack.c.l.b16 %v3691
    %v4929 = vunpack.c.h.b16 %v3691
    %v4930 = vunpack.c.l.b16 %v3692
    %v4931 = vunpack.c.l.b16 %v3693
    %v4932 = vunpack.c.h.b16 %v3693
    %v4933 = vunpack.c.l.b16 %v3694
    %v4934 = vunpack.c.h.b16 %v3694
    %v4935 = vunpack.c.l.b16 %v3695
    %v4936 = vunpack.c.h.b16 %v3695
    %v4937 = vunpack.c.l.b16 %v3696
    %v4938 = vunpack.c.l.b16 %v3697
    %v4939 = vunpack.c.h.b16 %v3697
    %v4940 = vunpack.c.l.b16 %v3698
    %v4941 = vunpack.c.h.b16 %v3698
    %v4942 = vunpack.c.l.b16 %v3699
    %v4943 = vunpack.c.h.b16 %v3699
    %v4944 = vunpack.c.l.b16 %v3700
    %v4945 = vunpack.c.l.b16 %v3701
    %v4946 = vunpack.c.h.b16 %v3701
    %v4947 = vunpack.c.l.b16 %v3702
    %v4948 = vunpack.c.h.b16 %v3702
    %v4949 = vunpack.c.l.b16 %v3703
    %v4950 = vunpack.c.h.b16 %v3703
    %v4951 = vunpack.c.l.b16 %v3704
    %v4952 = vunpack.c.l.b16 %v3705
    %v4953 = vunpack.c.h.b16 %v3705
    %v4954 = vunpack.c.l.b16 %v3706
    %v4955 = vunpack.c.h.b16 %v3706
    %v4956 = vunpack.c.l.b16 %v3707
    %v4957 = vunpack.c.h.b16 %v3707
    %v4958 = vunpack.c.l.b16 %v3708
    %v4959 = vunpack.c.l.b16 %v3709
    %v4960 = vunpack.c.h.b16 %v3709
    %v4961 = vunpack.c.l.b16 %v3710
    %v4962 = vunpack.c.h.b16 %v3710
    %v4963 = vunpack.c.l.b16 %v3711
    %v4964 = vunpack.c.h.b16 %v3711
    %v4965 = vunpack.c.l.b16 %v3712
    %v4966 = vunpack.c.l.b16 %v3713
    %v4967 = vunpack.c.h.b16 %v3713
    %v4968 = vunpack.c.l.b16 %v3714
    %v4969 = vunpack.c.h.b16 %v3714
    %v4970 = vunpack.c.l.b16 %v3715
    %v4971 = vunpack.c.h.b16 %v3715
    %v4972 = vunpack.c.l.b16 %v3716
    %v4973 = vunpack.c.l.b16 %v3717
    %v4974 = vunpack.c.h.b16 %v3717
    %v4975 = vunpack.c.l.b16 %v3718
    %v4976 = vunpack.c.h.b16 %v3718
    %v4977 = vunpack.c.l.b16 %v3719
    %v4978 = vunpack.c.h.b16 %v3719
    %v4979 = vunpack.c.l.b16 %v3720
    %v4980 = vunpack.c.l.b16 %v3721
    %v4981 = vunpack.c.h.b16 %v3721
    %v4982 = vunpack.c.l.b16 %v3722
    %v4983 = vunpack.c.h.b16 %v3722
    %v4984 = vunpack.c.l.b16 %v3723
    %v4985 = vunpack.c.h.b16 %v3723
    %v4986 = vunpack.c.l.b16 %v3724
    %v4987 = vunpack.c.l.b16 %v3725
    %v4988 = vunpack.c.h.b16 %v3725
    %v4989 = vunpack.c.l.b16 %v3726
    %v4990 = vunpack.c.h.b16 %v3726
    %v4991 = vunpack.c.l.b16 %v3727
    %v4992 = vunpack.c.h.b16 %v3727
    %v4993 = vunpack.c.l.b16 %v3728
    %v4994 = vunpack.c.l.b16 %v3729
    %v4995 = vunpack.c.h.b16 %v3729
    %v4996 = vunpack.c.l.b16 %v3730
    %v4997 = vunpack.c.h.b16 %v3730
    %v4998 = vunpack.c.l.b16 %v3731
    %v4999 = vunpack.c.h.b16 %v3731
    %v5000 = vunpack.c.l.b16 %v3732
    %v5001 = vunpack.c.l.b16 %v3733
    %v5002 = vunpack.c.h.b16 %v3733
    %v5003 = vunpack.c.l.b16 %v3734
    %v5004 = vunpack.c.h.b16 %v3734
    %v5005 = vunpack.c.l.b16 %v3735
    %v5006 = vunpack.c.h.b16 %v3735
    %v5007 = vunpack.c.l.b16 %v3736
    %v5008 = vunpack.c.l.b16 %v3737
    %v5009 = vunpack.c.h.b16 %v3737
    %v5010 = vunpack.c.l.b16 %v3738
    %v5011 = vunpack.c.h.b16 %v3738
    %v5012 = vunpack.c.l.b16 %v3739
    %v5013 = vunpack.c.h.b16 %v3739
    %v5014 = vunpack.c.l.b16 %v3740
    %v5015 = vunpack.c.l.b16 %v3741
    %v5016 = vunpack.c.h.b16 %v3741
    %v5017 = vunpack.c.l.b16 %v3742
    %v5018 = vunpack.c.h.b16 %v3742
    %v5019 = vunpack.c.l.b16 %v3743
    %v5020 = vunpack.c.h.b16 %v3743
    %v5021 = vunpack.c.l.b16 %v3744
    %v5022 = vunpack.c.l.b16 %v3745
    %v5023 = vunpack.c.h.b16 %v3745
    %v5024 = vunpack.c.l.b16 %v3746
    %v5025 = vunpack.c.h.b16 %v3746
    %v5026 = vunpack.c.l.b16 %v3747
    %v5027 = vunpack.c.h.b16 %v3747
    %v5028 = vunpack.c.l.b16 %v3748
    %v5029 = vunpack.c.l.b16 %v3749
    %v5030 = vunpack.c.h.b16 %v3749
    %v5031 = vunpack.c.l.b16 %v3750
    %v5032 = vunpack.c.h.b16 %v3750
    %v5033 = vunpack.c.l.b16 %v3751
    %v5034 = vunpack.c.h.b16 %v3751
    %v5035 = vunpack.c.l.b16 %v3752
    %v5036 = vunpack.c.l.b16 %v3753
    %v5037 = vunpack.c.h.b16 %v3753
    %v5038 = vunpack.c.l.b16 %v3754
    %v5039 = vunpack.c.h.b16 %v3754
    %v5040 = vunpack.c.l.b16 %v3755
    %v5041 = vunpack.c.h.b16 %v3755
    %v5042 = vunpack.c.l.b16 %v3756
    %v5043 = vunpack.c.l.b16 %v3757
    %v5044 = vunpack.c.h.b16 %v3757
    %v5045 = vunpack.c.l.b16 %v3758
    %v5046 = vunpack.c.h.b16 %v3758
    %v5047 = vunpack.c.l.b16 %v3759
    %v5048 = vunpack.c.h.b16 %v3759
    %v5049 = vunpack.c.l.b16 %v3760
    %v5050 = vunpack.c.l.b16 %v3761
    %v5051 = vunpack.c.h.b16 %v3761
    %v5052 = vunpack.c.l.b16 %v3762
    %v5053 = vunpack.c.h.b16 %v3762
    %v5054 = vunpack.c.l.b16 %v3763
    %v5055 = vunpack.c.h.b16 %v3763
    %v5056 = vunpack.c.l.b16 %v3764
    %v5057 = vunpack.c.l.b16 %v3765
    %v5058 = vunpack.c.h.b16 %v3765
    %v5059 = vunpack.c.l.b16 %v3766
    %v5060 = vunpack.c.h.b16 %v3766
    %v5061 = vunpack.c.l.b16 %v3767
    %v5062 = vunpack.c.h.b16 %v3767
    %v5063 = vunpack.c.l.b16 %v3768
    %v5064 = vunpack.c.l.b16 %v3769
    %v5065 = vunpack.c.h.b16 %v3769
    %v5066 = vunpack.c.l.b16 %v3770
    %v5067 = vunpack.c.h.b16 %v3770
    %v5068 = vunpack.c.l.b16 %v3771
    %v5069 = vunpack.c.h.b16 %v3771
    %v5070 = vunpack.c.l.b16 %v3772
    %v5071 = vunpack.c.l.b16 %v3773
    %v5072 = vunpack.c.h.b16 %v3773
    %v5073 = vunpack.c.l.b16 %v3774
    %v5074 = vunpack.c.h.b16 %v3774
    %v5075 = vunpack.c.l.b16 %v3775
    %v5076 = vunpack.c.h.b16 %v3775
    %v5077 = vunpack.c.l.b16 %v3776
    %v5078 = vunpack.c.l.b16 %v3777
    %v5079 = vunpack.c.h.b16 %v3777
    %v5080 = vunpack.c.l.b16 %v3778
    %v5081 = vunpack.c.h.b16 %v3778
    %v5082 = vunpack.c.l.b16 %v3779
    %v5083 = vunpack.c.h.b16 %v3779
    %v5084 = vunpack.c.l.b16 %v3780
    %v5085 = vunpack.c.l.b16 %v3781
    %v5086 = vunpack.c.h.b16 %v3781
    %v5087 = vunpack.c.l.b16 %v3782
    %v5088 = vunpack.c.h.b16 %v3782
    %v5089 = vunpack.c.l.b16 %v3783
    %v5090 = vunpack.c.h.b16 %v3783
    %v5091 = vunpack.c.l.b16 %v3784
    %v5092 = vunpack.c.l.b16 %v3785
    %v5093 = vunpack.c.h.b16 %v3785
    %v5094 = vunpack.c.l.b16 %v3786
    %v5095 = vunpack.c.h.b16 %v3786
    %v5096 = vunpack.c.l.b16 %v3787
    %v5097 = vunpack.c.h.b16 %v3787
    %v5098 = vunpack.c.l.b16 %v3788
    %v5099 = vunpack.c.l.b16 %v3789
    %v5100 = vunpack.c.h.b16 %v3789
    %v5101 = vunpack.c.l.b16 %v3790
    %v5102 = vunpack.c.h.b16 %v3790
    %v5103 = vunpack.c.l.b16 %v3791
    %v5104 = vunpack.c.h.b16 %v3791
    %v5105 = vunpack.c.l.b16 %v3792
    %v5106 = vunpack.c.l.b16 %v3793
    %v5107 = vunpack.c.h.b16 %v3793
    %v5108 = vunpack.c.l.b16 %v3794
    %v5109 = vunpack.c.h.b16 %v3794
    %v5110 = vunpack.c.l.b16 %v3795
    %v5111 = vunpack.c.h.b16 %v3795
    %v5112 = vunpack.c.l.b16 %v3796
    %v5113 = vunpack.c.l.b16 %v3797
    %v5114 = vunpack.c.h.b16 %v3797
    %v5115 = vunpack.c.l.b16 %v3798
    %v5116 = vunpack.c.h.b16 %v3798
    %v5117 = vunpack.c.l.b16 %v3799
    %v5118 = vunpack.c.h.b16 %v3799
    %v5119 = vunpack.c.l.b16 %v3800
    %v5120 = vunpack.c.l.b16 %v3801
    %v5121 = vunpack.c.h.b16 %v3801
    %v5122 = vunpack.c.l.b16 %v3802
    %v5123 = vunpack.c.h.b16 %v3802
    %v5124 = vunpack.c.l.b16 %v3803
    %v5125 = vunpack.c.h.b16 %v3803
    %v5126 = vunpack.c.l.b16 %v3804
    %v5127 = vunpack.c.l.b16 %v3805
    %v5128 = vunpack.c.h.b16 %v3805
    %v5129 = vunpack.c.l.b16 %v3806
    %v5130 = vunpack.c.h.b16 %v3806
    %v5131 = vunpack.c.l.b16 %v3807
    %v5132 = vunpack.c.h.b16 %v3807
    %v5133 = vunpack.c.l.b16 %v3808
    %v5134 = vunpack.c.l.b16 %v3809
    %v5135 = vunpack.c.h.b16 %v3809
    %v5136 = vunpack.c.l.b16 %v3810
    %v5137 = vunpack.c.h.b16 %v3810
    %v5138 = vunpack.c.l.b16 %v3811
    %v5139 = vunpack.c.h.b16 %v3811
    %v5140 = vunpack.c.l.b16 %v3812
    %v5141 = vunpack.c.l.b16 %v3813
    %v5142 = vunpack.c.h.b16 %v3813
    %v5143 = vunpack.c.l.b16 %v3814
    %v5144 = vunpack.c.h.b16 %v3814
    %v5145 = vunpack.c.l.b16 %v3815
    %v5146 = vunpack.c.h.b16 %v3815
    %v5147 = vunpack.c.l.b16 %v3816
    %v5148 = vunpack.c.l.b16 %v3817
    %v5149 = vunpack.c.h.b16 %v3817
    %v5150 = vunpack.c.l.b16 %v3818
    %v5151 = vunpack.c.h.b16 %v3818
    %v5152 = vunpack.c.l.b16 %v3819
    %v5153 = vunpack.c.h.b16 %v3819
    %v5154 = vunpack.c.l.b16 %v3820
    %v5155 = vunpack.c.l.b16 %v3821
    %v5156 = vunpack.c.h.b16 %v3821
    %v5157 = vunpack.c.l.b16 %v3822
    %v5158 = vunpack.c.h.b16 %v3822
    %v5159 = vunpack.c.l.b16 %v3823
    %v5160 = vunpack.c.h.b16 %v3823
    %v5161 = vunpack.c.l.b16 %v3824
    %v5162 = vunpack.c.l.b16 %v3825
    %v5163 = vunpack.c.h.b16 %v3825
    %v5164 = vunpack.c.l.b16 %v3826
    %v5165 = vunpack.c.h.b16 %v3826
    %v5166 = vunpack.c.l.b16 %v3827
    %v5167 = vunpack.c.h.b16 %v3827
    %v5168 = vunpack.c.l.b16 %v3828
    %v5169 = vunpack.c.l.b16 %v3829
    %v5170 = vunpack.c.h.b16 %v3829
    %v5171 = vunpack.c.l.b16 %v3830
    %v5172 = vunpack.c.h.b16 %v3830
    %v5173 = vunpack.c.l.b16 %v3831
    %v5174 = vunpack.c.h.b16 %v3831
    %v5175 = vunpack.c.l.b16 %v3832
    %v5176 = vunpack.c.l.b16 %v3833
    %v5177 = vunpack.c.h.b16 %v3833
    %v5178 = vunpack.c.l.b16 %v3834
    %v5179 = vunpack.c.h.b16 %v3834
    %v5180 = vunpack.c.l.b16 %v3835
    %v5181 = vunpack.c.h.b16 %v3835
    %v5182 = vunpack.c.l.b16 %v3836
    %v5183 = vunpack.c.l.b16 %v3837
    %v5184 = vunpack.c.h.b16 %v3837
    %v5185 = vunpack.c.l.b16 %v3838
    %v5186 = vunpack.c.h.b16 %v3838
    %v5187 = vunpack.c.l.b16 %v3839
    %v5188 = vunpack.c.h.b16 %v3839
    %v5189 = vunpack.c.l.b16 %v3840
    %v5190 = vunpack.c.l.b16 %v3841
    %v5191 = vunpack.c.h.b16 %v3841
    %v5192 = vunpack.c.l.b16 %v3842
    %v5193 = vunpack.c.h.b16 %v3842
    %v5194 = vunpack.c.l.b16 %v3843
    %v5195 = vunpack.c.h.b16 %v3843
    %v5196 = vunpack.c.l.b16 %v3844
    %v5197 = vunpack.c.l.b16 %v3845
    %v5198 = vunpack.c.h.b16 %v3845
    %v5199 = vunpack.c.l.b16 %v3846
    %v5200 = vunpack.c.h.b16 %v3846
    %v5201 = vunpack.c.l.b16 %v3847
    %v5202 = vunpack.c.h.b16 %v3847
    %v5203 = vunpack.c.l.b16 %v3848
    %v5204 = vunpack.c.l.b16 %v3849
    %v5205 = vunpack.c.h.b16 %v3849
    %v5206 = vunpack.c.l.b16 %v3850
    %v5207 = vunpack.c.h.b16 %v3850
    %v5208 = vunpack.c.l.b16 %v3851
    %v5209 = vunpack.c.h.b16 %v3851
    %v5210 = vunpack.c.l.b16 %v3852
    %v5211 = vunpack.c.l.b16 %v3853
    %v5212 = vunpack.c.h.b16 %v3853
    %v5213 = vunpack.c.l.b16 %v3854
    %v5214 = vunpack.c.h.b16 %v3854
    %v5215 = vunpack.c.l.b16 %v3855
    %v5216 = vunpack.c.h.b16 %v3855
    %v5217 = vunpack.c.l.b16 %v3856
    %v5218 = vunpack.c.l.b16 %v3857
    %v5219 = vunpack.c.h.b16 %v3857
    %v5220 = vunpack.c.l.b16 %v3858
    %v5221 = vunpack.c.h.b16 %v3858
    %v5222 = vunpack.c.l.b16 %v3859
    %v5223 = vunpack.c.h.b16 %v3859
    %v5224 = vunpack.c.l.b16 %v3860
    %v5225 = vunpack.c.l.b16 %v3861
    %v5226 = vunpack.c.h.b16 %v3861
    %v5227 = vunpack.c.l.b16 %v3862
    %v5228 = vunpack.c.h.b16 %v3862
    %v5229 = vunpack.c.l.b16 %v3863
    %v5230 = vunpack.c.h.b16 %v3863
    %v5231 = vunpack.c.l.b16 %v3864
    %v5232 = vunpack.c.l.b16 %v3865
    %v5233 = vunpack.c.h.b16 %v3865
    %v5234 = vunpack.c.l.b16 %v3866
    %v5235 = vunpack.c.h.b16 %v3866
    %v5236 = vunpack.c.l.b16 %v3867
    %v5237 = vunpack.c.h.b16 %v3867
    %v5238 = vunpack.c.l.b16 %v3868
    %v5239 = vunpack.c.l.b16 %v3869
    %v5240 = vunpack.c.h.b16 %v3869
    %v5241 = vunpack.c.l.b16 %v3870
    %v5242 = vunpack.c.h.b16 %v3870
    %v5243 = vunpack.c.l.b16 %v3871
    %v5244 = vunpack.c.h.b16 %v3871
    %v5245 = vunpack.c.l.b16 %v3872
    %v5246 = vunpack.c.l.b16 %v3873
    %v5247 = vunpack.c.h.b16 %v3873
    %v5248 = vunpack.c.l.b16 %v3874
    %v5249 = vunpack.c.h.b16 %v3874
    %v5250 = vunpack.c.l.b16 %v3875
    %v5251 = vunpack.c.h.b16 %v3875
    %v5252 = vunpack.c.l.b16 %v3876
    %v5253 = vunpack.c.l.b16 %v3877
    %v5254 = vunpack.c.h.b16 %v3877
    %v5255 = vunpack.c.l.b16 %v3878
    %v5256 = vunpack.c.h.b16 %v3878
    %v5257 = vunpack.c.l.b16 %v3879
    %v5258 = vunpack.c.h.b16 %v3879
    %v5259 = vunpack.c.l.b16 %v3880
    %v5260 = vunpack.c.l.b16 %v3881
    %v5261 = vunpack.c.h.b16 %v3881
    %v5262 = vunpack.c.l.b16 %v3882
    %v5263 = vunpack.c.h.b16 %v3882
    %v5264 = vunpack.c.l.b16 %v3883
    %v5265 = vunpack.c.h.b16 %v3883
    %v5266 = vunpack.c.l.b16 %v3884
    %v5267 = vunpack.c.l.b16 %v3885
    %v5268 = vunpack.c.h.b16 %v3885
    %v5269 = vunpack.c.l.b16 %v3886
    %v5270 = vunpack.c.h.b16 %v3886
    %v5271 = vunpack.c.l.b16 %v3887
    %v5272 = vunpack.c.h.b16 %v3887
    %v5273 = vunpack.c.l.b16 %v3888
    %v5274 = vunpack.c.l.b16 %v3889
    %v5275 = vunpack.c.h.b16 %v3889
    %v5276 = vunpack.c.l.b16 %v3890
    %v5277 = vunpack.c.h.b16 %v3890
    %v5278 = vunpack.c.l.b16 %v3891
    %v5279 = vunpack.c.h.b16 %v3891
    %v5280 = vunpack.c.l.b16 %v3892
    %v5281 = vunpack.c.l.b16 %v3893
    %v5282 = vunpack.c.h.b16 %v3893
    %v5283 = vunpack.c.l.b16 %v3894
    %v5284 = vunpack.c.h.b16 %v3894
    %v5285 = vunpack.c.l.b16 %v3895
    %v5286 = vunpack.c.h.b16 %v3895
    %v5287 = vunpack.c.l.b16 %v3896
    %v5288 = vunpack.c.l.b16 %v3897
    %v5289 = vunpack.c.h.b16 %v3897
    %v5290 = vunpack.c.l.b16 %v3898
    %v5291 = vunpack.c.h.b16 %v3898
    %v5292 = vunpack.c.l.b16 %v3899
    %v5293 = vunpack.c.h.b16 %v3899
    %v5294 = vunpack.c.l.b16 %v3900
    %v5295 = vunpack.c.l.b16 %v3901
    %v5296 = vunpack.c.h.b16 %v3901
    %v5297 = vunpack.c.l.b16 %v3902
    %v5298 = vunpack.c.h.b16 %v3902
    %v5299 = vunpack.c.l.b16 %v3903
    %v5300 = vunpack.c.h.b16 %v3903
    %v5301 = vunpack.c.l.b16 %v3904
    %v5302 = vunpack.c.l.b16 %v3905
    %v5303 = vunpack.c.h.b16 %v3905
    %v5304 = vunpack.c.l.b16 %v3906
    %v5305 = vunpack.c.h.b16 %v3906
    %v5306 = vunpack.c.l.b16 %v3907
    %v5307 = vunpack.c.h.b16 %v3907
    %v5308 = vunpack.c.l.b16 %v3908
    %v5309 = vunpack.c.l.b16 %v3909
    %v5310 = vunpack.c.h.b16 %v3909
    %v5311 = vunpack.c.l.b16 %v3910
    %v5312 = vunpack.c.h.b16 %v3910
    %v5313 = vunpack.c.l.b16 %v3911
    %v5314 = vunpack.c.h.b16 %v3911
    %v5315 = vunpack.c.l.b16 %v3912
    %v5316 = vunpack.c.l.b16 %v3913
    %v5317 = vunpack.c.h.b16 %v3913
    %v5318 = vunpack.c.l.b16 %v3914
    %v5319 = vunpack.c.h.b16 %v3914
    %v5320 = vunpack.c.l.b16 %v3915
    %v5321 = vunpack.c.h.b16 %v3915
    %v5322 = vunpack.c.l.b16 %v3916
    %v5323 = vunpack.c.l.b16 %v3917
    %v5324 = vunpack.c.h.b16 %v3917
    %v5325 = vunpack.c.l.b16 %v3918
    %v5326 = vunpack.c.h.b16 %v3918
    %v5327 = vunpack.c.l.b16 %v3919
    %v5328 = vunpack.c.h.b16 %v3919
    %v5329 = vunpack.c.l.b16 %v3920
    %v5330 = vunpack.c.l.b16 %v3921
    %v5331 = vunpack.c.h.b16 %v3921
    %v5332 = vunpack.c.l.b16 %v3922
    %v5333 = vunpack.c.h.b16 %v3922
    %v5334 = vunpack.c.l.b16 %v3923
    %v5335 = vunpack.c.h.b16 %v3923
    %v5336 = vunpack.c.l.b16 %v3924
    %v5337 = vunpack.c.l.b16 %v3925
    %v5338 = vunpack.c.h.b16 %v3925
    %v5339 = vunpack.c.l.b16 %v3926
    %v5340 = vunpack.c.h.b16 %v3926
    %v5341 = vunpack.c.l.b16 %v3927
    %v5342 = vunpack.c.h.b16 %v3927
    %v5343 = vunpack.c.l.b16 %v3928
    %v5344 = vunpack.c.l.b16 %v3929
    %v5345 = vunpack.c.h.b16 %v3929
    %v5346 = vunpack.c.l.b16 %v3930
    %v5347 = vunpack.c.h.b16 %v3930
    %v5348 = vunpack.c.l.b16 %v3931
    %v5349 = vunpack.c.h.b16 %v3931
    %v5350 = vunpack.c.l.b16 %v3932
    %v5351 = vunpack.c.l.b16 %v3933
    %v5352 = vunpack.c.h.b16 %v3933
    %v5353 = vunpack.c.l.b16 %v3934
    %v5354 = vunpack.c.h.b16 %v3934
    %v5355 = vunpack.c.l.b16 %v3935
    %v5356 = vunpack.c.h.b16 %v3935
    %v5357 = vunpack.c.l.b16 %v3936
    %v5358 = vunpack.c.l.b16 %v3937
    %v5359 = vunpack.c.h.b16 %v3937
    %v5360 = vunpack.c.l.b16 %v3938
    %v5361 = vunpack.c.h.b16 %v3938
    %v5362 = vunpack.c.l.b16 %v3939
    %v5363 = vunpack.c.h.b16 %v3939
    %v5364 = vunpack.c.l.b16 %v3940
    %v5365 = vpack.c.b16 %v4476, %v4469
    %v5366 = vpack.c.b16 %v4477, %v4470
    %v5367 = vpack.c.b16 %v4478, %v4471
    %v5368 = vpack.c.b16 %v4479, %v4472
    %v5369 = vpack.c.b16 %v4480, %v4473
    %v5370 = vpack.c.b16 %v4481, %v4474
    %v5371 = vpack.c.b16 %v4482, %v4475
    %v5372 = vpack.c.b16 %v4490, %v4483
    %v5373 = vpack.c.b16 %v4491, %v4484
    %v5374 = vpack.c.b16 %v4492, %v4485
    %v5375 = vpack.c.b16 %v4493, %v4486
    %v5376 = vpack.c.b16 %v4494, %v4487
    %v5377 = vpack.c.b16 %v4495, %v4488
    %v5378 = vpack.c.b16 %v4496, %v4489
    %v5379 = vpack.c.b16 %v4504, %v4497
    %v5380 = vpack.c.b16 %v4505, %v4498
    %v5381 = vpack.c.b16 %v4506, %v4499
    %v5382 = vpack.c.b16 %v4507, %v4500
    %v5383 = vpack.c.b16 %v4508, %v4501
    %v5384 = vpack.c.b16 %v4509, %v4502
    %v5385 = vpack.c.b16 %v4510, %v4503
    %v5386 = vpack.c.b16 %v4518, %v4511
    %v5387 = vpack.c.b16 %v4519, %v4512
    %v5388 = vpack.c.b16 %v4520, %v4513
    %v5389 = vpack.c.b16 %v4521, %v4514
    %v5390 = vpack.c.b16 %v4522, %v4515
    %v5391 = vpack.c.b16 %v4523, %v4516
    %v5392 = vpack.c.b16 %v4524, %v4517
    %v5393 = vpack.c.b16 %v4532, %v4525
    %v5394 = vpack.c.b16 %v4533, %v4526
    %v5395 = vpack.c.b16 %v4534, %v4527
    %v5396 = vpack.c.b16 %v4535, %v4528
    %v5397 = vpack.c.b16 %v4536, %v4529
    %v5398 = vpack.c.b16 %v4537, %v4530
    %v5399 = vpack.c.b16 %v4538, %v4531
    %v5400 = vpack.c.b16 %v4546, %v4539
    %v5401 = vpack.c.b16 %v4547, %v4540
    %v5402 = vpack.c.b16 %v4548, %v4541
    %v5403 = vpack.c.b16 %v4549, %v4542
    %v5404 = vpack.c.b16 %v4550, %v4543
    %v5405 = vpack.c.b16 %v4551, %v4544
    %v5406 = vpack.c.b16 %v4552, %v4545
    %v5407 = vpack.c.b16 %v4560, %v4553
    %v5408 = vpack.c.b16 %v4561, %v4554
    %v5409 = vpack.c.b16 %v4562, %v4555
    %v5410 = vpack.c.b16 %v4563, %v4556
    %v5411 = vpack.c.b16 %v4564, %v4557
    %v5412 = vpack.c.b16 %v4565, %v4558
    %v5413 = vpack.c.b16 %v4566, %v4559
    %v5414 = vpack.c.b16 %v4574, %v4567
    %v5415 = vpack.c.b16 %v4575, %v4568
    %v5416 = vpack.c.b16 %v4576, %v4569
    %v5417 = vpack.c.b16 %v4577, %v4570
    %v5418 = vpack.c.b16 %v4578, %v4571
    %v5419 = vpack.c.b16 %v4579, %v4572
    %v5420 = vpack.c.b16 %v4580, %v4573
    %v5421 = vpack.c.b16 %v4588, %v4581
    %v5422 = vpack.c.b16 %v4589, %v4582
    %v5423 = vpack.c.b16 %v4590, %v4583
    %v5424 = vpack.c.b16 %v4591, %v4584
    %v5425 = vpack.c.b16 %v4592, %v4585
    %v5426 = vpack.c.b16 %v4593, %v4586
    %v5427 = vpack.c.b16 %v4594, %v4587
    %v5428 = vpack.c.b16 %v4602, %v4595
    %v5429 = vpack.c.b16 %v4603, %v4596
    %v5430 = vpack.c.b16 %v4604, %v4597
    %v5431 = vpack.c.b16 %v4605, %v4598
    %v5432 = vpack.c.b16 %v4606, %v4599
    %v5433 = vpack.c.b16 %v4607, %v4600
    %v5434 = vpack.c.b16 %v4608, %v4601
    %v5435 = vpack.c.b16 %v4616, %v4609
    %v5436 = vpack.c.b16 %v4617, %v4610
    %v5437 = vpack.c.b16 %v4618, %v4611
    %v5438 = vpack.c.b16 %v4619, %v4612
    %v5439 = vpack.c.b16 %v4620, %v4613
    %v5440 = vpack.c.b16 %v4621, %v4614
    %v5441 = vpack.c.b16 %v4622, %v4615
    %v5442 = vpack.c.b16 %v4630, %v4623
    %v5443 = vpack.c.b16 %v4631, %v4624
    %v5444 = vpack.c.b16 %v4632, %v4625
    %v5445 = vpack.c.b16 %v4633, %v4626
    %v5446 = vpack.c.b16 %v4634, %v4627
    %v5447 = vpack.c.b16 %v4635, %v4628
    %v5448 = vpack.c.b16 %v4636, %v4629
    %v5449 = vpack.c.b16 %v4644, %v4637
    %v5450 = vpack.c.b16 %v4645, %v4638
    %v5451 = vpack.c.b16 %v4646, %v4639
    %v5452 = vpack.c.b16 %v4647, %v4640
    %v5453 = vpack.c.b16 %v4648, %v4641
    %v5454 = vpack.c.b16 %v4649, %v4642
    %v5455 = vpack.c.b16 %v4650, %v4643
    %v5456 = vpack.c.b16 %v4658, %v4651
    %v5457 = vpack.c.b16 %v4659, %v4652
    %v5458 = vpack.c.b16 %v4660, %v4653
    %v5459 = vpack.c.b16 %v4661, %v4654
    %v5460 = vpack.c.b16 %v4662, %v4655
    %v5461 = vpack.c.b16 %v4663, %v4656
    %v5462 = vpack.c.b16 %v4664, %v4657
    %v5463 = vpack.c.b16 %v4672, %v4665
    %v5464 = vpack.c.b16 %v4673, %v4666
    %v5465 = vpack.c.b16 %v4674, %v4667
    %v5466 = vpack.c.b16 %v4675, %v4668
    %v5467 = vpack.c.b16 %v4676, %v4669
    %v5468 = vpack.c.b16 %v4677, %v4670
    %v5469 = vpack.c.b16 %v4678, %v4671
    %v5470 = vpack.c.b16 %v4686, %v4679
    %v5471 = vpack.c.b16 %v4687, %v4680
    %v5472 = vpack.c.b16 %v4688, %v4681
    %v5473 = vpack.c.b16 %v4689, %v4682
    %v5474 = vpack.c.b16 %v4690, %v4683
    %v5475 = vpack.c.b16 %v4691, %v4684
    %v5476 = vpack.c.b16 %v4692, %v4685
    %v5477 = vpack.c.b16 %v4700, %v4693
    %v5478 = vpack.c.b16 %v4701, %v4694
    %v5479 = vpack.c.b16 %v4702, %v4695
    %v5480 = vpack.c.b16 %v4703, %v4696
    %v5481 = vpack.c.b16 %v4704, %v4697
    %v5482 = vpack.c.b16 %v4705, %v4698
    %v5483 = vpack.c.b16 %v4706, %v4699
    %v5484 = vpack.c.b16 %v4714, %v4707
    %v5485 = vpack.c.b16 %v4715, %v4708
    %v5486 = vpack.c.b16 %v4716, %v4709
    %v5487 = vpack.c.b16 %v4717, %v4710
    %v5488 = vpack.c.b16 %v4718, %v4711
    %v5489 = vpack.c.b16 %v4719, %v4712
    %v5490 = vpack.c.b16 %v4720, %v4713
    %v5491 = vpack.c.b16 %v4728, %v4721
    %v5492 = vpack.c.b16 %v4729, %v4722
    %v5493 = vpack.c.b16 %v4730, %v4723
    %v5494 = vpack.c.b16 %v4731, %v4724
    %v5495 = vpack.c.b16 %v4732, %v4725
    %v5496 = vpack.c.b16 %v4733, %v4726
    %v5497 = vpack.c.b16 %v4734, %v4727
    %v5498 = vpack.c.b16 %v4742, %v4735
    %v5499 = vpack.c.b16 %v4743, %v4736
    %v5500 = vpack.c.b16 %v4744, %v4737
    %v5501 = vpack.c.b16 %v4745, %v4738
    %v5502 = vpack.c.b16 %v4746, %v4739
    %v5503 = vpack.c.b16 %v4747, %v4740
    %v5504 = vpack.c.b16 %v4748, %v4741
    %v5505 = vpack.c.b16 %v4756, %v4749
    %v5506 = vpack.c.b16 %v4757, %v4750
    %v5507 = vpack.c.b16 %v4758, %v4751
    %v5508 = vpack.c.b16 %v4759, %v4752
    %v5509 = vpack.c.b16 %v4760, %v4753
    %v5510 = vpack.c.b16 %v4761, %v4754
    %v5511 = vpack.c.b16 %v4762, %v4755
    %v5512 = vpack.c.b16 %v4770, %v4763
    %v5513 = vpack.c.b16 %v4771, %v4764
    %v5514 = vpack.c.b16 %v4772, %v4765
    %v5515 = vpack.c.b16 %v4773, %v4766
    %v5516 = vpack.c.b16 %v4774, %v4767
    %v5517 = vpack.c.b16 %v4775, %v4768
    %v5518 = vpack.c.b16 %v4776, %v4769
    %v5519 = vpack.c.b16 %v4784, %v4777
    %v5520 = vpack.c.b16 %v4785, %v4778
    %v5521 = vpack.c.b16 %v4786, %v4779
    %v5522 = vpack.c.b16 %v4787, %v4780
    %v5523 = vpack.c.b16 %v4788, %v4781
    %v5524 = vpack.c.b16 %v4789, %v4782
    %v5525 = vpack.c.b16 %v4790, %v4783
    %v5526 = vpack.c.b16 %v4798, %v4791
    %v5527 = vpack.c.b16 %v4799, %v4792
    %v5528 = vpack.c.b16 %v4800, %v4793
    %v5529 = vpack.c.b16 %v4801, %v4794
    %v5530 = vpack.c.b16 %v4802, %v4795
    %v5531 = vpack.c.b16 %v4803, %v4796
    %v5532 = vpack.c.b16 %v4804, %v4797
    %v5533 = vpack.c.b16 %v4812, %v4805
    %v5534 = vpack.c.b16 %v4813, %v4806
    %v5535 = vpack.c.b16 %v4814, %v4807
    %v5536 = vpack.c.b16 %v4815, %v4808
    %v5537 = vpack.c.b16 %v4816, %v4809
    %v5538 = vpack.c.b16 %v4817, %v4810
    %v5539 = vpack.c.b16 %v4818, %v4811
    %v5540 = vpack.c.b16 %v4826, %v4819
    %v5541 = vpack.c.b16 %v4827, %v4820
    %v5542 = vpack.c.b16 %v4828, %v4821
    %v5543 = vpack.c.b16 %v4829, %v4822
    %v5544 = vpack.c.b16 %v4830, %v4823
    %v5545 = vpack.c.b16 %v4831, %v4824
    %v5546 = vpack.c.b16 %v4832, %v4825
    %v5547 = vpack.c.b16 %v4840, %v4833
    %v5548 = vpack.c.b16 %v4841, %v4834
    %v5549 = vpack.c.b16 %v4842, %v4835
    %v5550 = vpack.c.b16 %v4843, %v4836
    %v5551 = vpack.c.b16 %v4844, %v4837
    %v5552 = vpack.c.b16 %v4845, %v4838
    %v5553 = vpack.c.b16 %v4846, %v4839
    %v5554 = vpack.c.b16 %v4854, %v4847
    %v5555 = vpack.c.b16 %v4855, %v4848
    %v5556 = vpack.c.b16 %v4856, %v4849
    %v5557 = vpack.c.b16 %v4857, %v4850
    %v5558 = vpack.c.b16 %v4858, %v4851
    %v5559 = vpack.c.b16 %v4859, %v4852
    %v5560 = vpack.c.b16 %v4860, %v4853
    %v5561 = vpack.c.b16 %v4868, %v4861
    %v5562 = vpack.c.b16 %v4869, %v4862
    %v5563 = vpack.c.b16 %v4870, %v4863
    %v5564 = vpack.c.b16 %v4871, %v4864
    %v5565 = vpack.c.b16 %v4872, %v4865
    %v5566 = vpack.c.b16 %v4873, %v4866
    %v5567 = vpack.c.b16 %v4874, %v4867
    %v5568 = vpack.c.b16 %v4882, %v4875
    %v5569 = vpack.c.b16 %v4883, %v4876
    %v5570 = vpack.c.b16 %v4884, %v4877
    %v5571 = vpack.c.b16 %v4885, %v4878
    %v5572 = vpack.c.b16 %v4886, %v4879
    %v5573 = vpack.c.b16 %v4887, %v4880
    %v5574 = vpack.c.b16 %v4888, %v4881
    %v5575 = vpack.c.b16 %v4896, %v4889
    %v5576 = vpack.c.b16 %v4897, %v4890
    %v5577 = vpack.c.b16 %v4898, %v4891
    %v5578 = vpack.c.b16 %v4899, %v4892
    %v5579 = vpack.c.b16 %v4900, %v4893
    %v5580 = vpack.c.b16 %v4901, %v4894
    %v5581 = vpack.c.b16 %v4902, %v4895
    %v5582 = vpack.c.b16 %v4910, %v4903
    %v5583 = vpack.c.b16 %v4911, %v4904
    %v5584 = vpack.c.b16 %v4912, %v4905
    %v5585 = vpack.c.b16 %v4913, %v4906
    %v5586 = vpack.c.b16 %v4914, %v4907
    %v5587 = vpack.c.b16 %v4915, %v4908
    %v5588 = vpack.c.b16 %v4916, %v4909
    %v5589 = vpack.c.b16 %v4924, %v4917
    %v5590 = vpack.c.b16 %v4925, %v4918
    %v5591 = vpack.c.b16 %v4926, %v4919
    %v5592 = vpack.c.b16 %v4927, %v4920
    %v5593 = vpack.c.b16 %v4928, %v4921
    %v5594 = vpack.c.b16 %v4929, %v4922
    %v5595 = vpack.c.b16 %v4930, %v4923
    %v5596 = vpack.c.b16 %v4938, %v4931
    %v5597 = vpack.c.b16 %v4939, %v4932
    %v5598 = vpack.c.b16 %v4940, %v4933
    %v5599 = vpack.c.b16 %v4941, %v4934
    %v5600 = vpack.c.b16 %v4942, %v4935
    %v5601 = vpack.c.b16 %v4943, %v4936
    %v5602 = vpack.c.b16 %v4944, %v4937
    %v5603 = vpack.c.b16 %v4952, %v4945
    %v5604 = vpack.c.b16 %v4953, %v4946
    %v5605 = vpack.c.b16 %v4954, %v4947
    %v5606 = vpack.c.b16 %v4955, %v4948
    %v5607 = vpack.c.b16 %v4956, %v4949
    %v5608 = vpack.c.b16 %v4957, %v4950
    %v5609 = vpack.c.b16 %v4958, %v4951
    %v5610 = vpack.c.b16 %v4966, %v4959
    %v5611 = vpack.c.b16 %v4967, %v4960
    %v5612 = vpack.c.b16 %v4968, %v4961
    %v5613 = vpack.c.b16 %v4969, %v4962
    %v5614 = vpack.c.b16 %v4970, %v4963
    %v5615 = vpack.c.b16 %v4971, %v4964
    %v5616 = vpack.c.b16 %v4972, %v4965
    %v5617 = vpack.c.b16 %v4980, %v4973
    %v5618 = vpack.c.b16 %v4981, %v4974
    %v5619 = vpack.c.b16 %v4982, %v4975
    %v5620 = vpack.c.b16 %v4983, %v4976
    %v5621 = vpack.c.b16 %v4984, %v4977
    %v5622 = vpack.c.b16 %v4985, %v4978
    %v5623 = vpack.c.b16 %v4986, %v4979
    %v5624 = vpack.c.b16 %v4994, %v4987
    %v5625 = vpack.c.b16 %v4995, %v4988
    %v5626 = vpack.c.b16 %v4996, %v4989
    %v5627 = vpack.c.b16 %v4997, %v4990
    %v5628 = vpack.c.b16 %v4998, %v4991
    %v5629 = vpack.c.b16 %v4999, %v4992
    %v5630 = vpack.c.b16 %v5000, %v4993
    %v5631 = vpack.c.b16 %v5008, %v5001
    %v5632 = vpack.c.b16 %v5009, %v5002
    %v5633 = vpack.c.b16 %v5010, %v5003
    %v5634 = vpack.c.b16 %v5011, %v5004
    %v5635 = vpack.c.b16 %v5012, %v5005
    %v5636 = vpack.c.b16 %v5013, %v5006
    %v5637 = vpack.c.b16 %v5014, %v5007
    %v5638 = vpack.c.b16 %v5022, %v5015
    %v5639 = vpack.c.b16 %v5023, %v5016
    %v5640 = vpack.c.b16 %v5024, %v5017
    %v5641 = vpack.c.b16 %v5025, %v5018
    %v5642 = vpack.c.b16 %v5026, %v5019
    %v5643 = vpack.c.b16 %v5027, %v5020
    %v5644 = vpack.c.b16 %v5028, %v5021
    %v5645 = vpack.c.b16 %v5036, %v5029
    %v5646 = vpack.c.b16 %v5037, %v5030
    %v5647 = vpack.c.b16 %v5038, %v5031
    %v5648 = vpack.c.b16 %v5039, %v5032
    %v5649 = vpack.c.b16 %v5040, %v5033
    %v5650 = vpack.c.b16 %v5041, %v5034
    %v5651 = vpack.c.b16 %v5042, %v5035
    %v5652 = vpack.c.b16 %v5050, %v5043
    %v5653 = vpack.c.b16 %v5051, %v5044
    %v5654 = vpack.c.b16 %v5052, %v5045
    %v5655 = vpack.c.b16 %v5053, %v5046
    %v5656 = vpack.c.b16 %v5054, %v5047
    %v5657 = vpack.c.b16 %v5055, %v5048
    %v5658 = vpack.c.b16 %v5056, %v5049
    %v5659 = vpack.c.b16 %v5064, %v5057
    %v5660 = vpack.c.b16 %v5065, %v5058
    %v5661 = vpack.c.b16 %v5066, %v5059
    %v5662 = vpack.c.b16 %v5067, %v5060
    %v5663 = vpack.c.b16 %v5068, %v5061
    %v5664 = vpack.c.b16 %v5069, %v5062
    %v5665 = vpack.c.b16 %v5070, %v5063
    %v5666 = vpack.c.b16 %v5078, %v5071
    %v5667 = vpack.c.b16 %v5079, %v5072
    %v5668 = vpack.c.b16 %v5080, %v5073
    %v5669 = vpack.c.b16 %v5081, %v5074
    %v5670 = vpack.c.b16 %v5082, %v5075
    %v5671 = vpack.c.b16 %v5083, %v5076
    %v5672 = vpack.c.b16 %v5084, %v5077
    %v5673 = vpack.c.b16 %v5092, %v5085
    %v5674 = vpack.c.b16 %v5093, %v5086
    %v5675 = vpack.c.b16 %v5094, %v5087
    %v5676 = vpack.c.b16 %v5095, %v5088
    %v5677 = vpack.c.b16 %v5096, %v5089
    %v5678 = vpack.c.b16 %v5097, %v5090
    %v5679 = vpack.c.b16 %v5098, %v5091
    %v5680 = vpack.c.b16 %v5106, %v5099
    %v5681 = vpack.c.b16 %v5107, %v5100
    %v5682 = vpack.c.b16 %v5108, %v5101
    %v5683 = vpack.c.b16 %v5109, %v5102
    %v5684 = vpack.c.b16 %v5110, %v5103
    %v5685 = vpack.c.b16 %v5111, %v5104
    %v5686 = vpack.c.b16 %v5112, %v5105
    %v5687 = vpack.c.b16 %v5120, %v5113
    %v5688 = vpack.c.b16 %v5121, %v5114
    %v5689 = vpack.c.b16 %v5122, %v5115
    %v5690 = vpack.c.b16 %v5123, %v5116
    %v5691 = vpack.c.b16 %v5124, %v5117
    %v5692 = vpack.c.b16 %v5125, %v5118
    %v5693 = vpack.c.b16 %v5126, %v5119
    %v5694 = vpack.c.b16 %v5134, %v5127
    %v5695 = vpack.c.b16 %v5135, %v5128
    %v5696 = vpack.c.b16 %v5136, %v5129
    %v5697 = vpack.c.b16 %v5137, %v5130
    %v5698 = vpack.c.b16 %v5138, %v5131
    %v5699 = vpack.c.b16 %v5139, %v5132
    %v5700 = vpack.c.b16 %v5140, %v5133
    %v5701 = vpack.c.b16 %v5148, %v5141
    %v5702 = vpack.c.b16 %v5149, %v5142
    %v5703 = vpack.c.b16 %v5150, %v5143
    %v5704 = vpack.c.b16 %v5151, %v5144
    %v5705 = vpack.c.b16 %v5152, %v5145
    %v5706 = vpack.c.b16 %v5153, %v5146
    %v5707 = vpack.c.b16 %v5154, %v5147
    %v5708 = vpack.c.b16 %v5162, %v5155
    %v5709 = vpack.c.b16 %v5163, %v5156
    %v5710 = vpack.c.b16 %v5164, %v5157
    %v5711 = vpack.c.b16 %v5165, %v5158
    %v5712 = vpack.c.b16 %v5166, %v5159
    %v5713 = vpack.c.b16 %v5167, %v5160
    %v5714 = vpack.c.b16 %v5168, %v5161
    %v5715 = vpack.c.b16 %v5176, %v5169
    %v5716 = vpack.c.b16 %v5177, %v5170
    %v5717 = vpack.c.b16 %v5178, %v5171
    %v5718 = vpack.c.b16 %v5179, %v5172
    %v5719 = vpack.c.b16 %v5180, %v5173
    %v5720 = vpack.c.b16 %v5181, %v5174
    %v5721 = vpack.c.b16 %v5182, %v5175
    %v5722 = vpack.c.b16 %v5190, %v5183
    %v5723 = vpack.c.b16 %v5191, %v5184
    %v5724 = vpack.c.b16 %v5192, %v5185
    %v5725 = vpack.c.b16 %v5193, %v5186
    %v5726 = vpack.c.b16 %v5194, %v5187
    %v5727 = vpack.c.b16 %v5195, %v5188
    %v5728 = vpack.c.b16 %v5196, %v5189
    %v5729 = vpack.c.b16 %v5204, %v5197
    %v5730 = vpack.c.b16 %v5205, %v5198
    %v5731 = vpack.c.b16 %v5206, %v5199
    %v5732 = vpack.c.b16 %v5207, %v5200
    %v5733 = vpack.c.b16 %v5208, %v5201
    %v5734 = vpack.c.b16 %v5209, %v5202
    %v5735 = vpack.c.b16 %v5210, %v5203
    %v5736 = vpack.c.b16 %v5218, %v5211
    %v5737 = vpack.c.b16 %v5219, %v5212
    %v5738 = vpack.c.b16 %v5220, %v5213
    %v5739 = vpack.c.b16 %v5221, %v5214
    %v5740 = vpack.c.b16 %v5222, %v5215
    %v5741 = vpack.c.b16 %v5223, %v5216
    %v5742 = vpack.c.b16 %v5224, %v5217
    %v5743 = vpack.c.b16 %v5232, %v5225
    %v5744 = vpack.c.b16 %v5233, %v5226
    %v5745 = vpack.c.b16 %v5234, %v5227
    %v5746 = vpack.c.b16 %v5235, %v5228
    %v5747 = vpack.c.b16 %v5236, %v5229
    %v5748 = vpack.c.b16 %v5237, %v5230
    %v5749 = vpack.c.b16 %v5238, %v5231
    %v5750 = vpack.c.b16 %v5246, %v5239
    %v5751 = vpack.c.b16 %v5247, %v5240
    %v5752 = vpack.c.b16 %v5248, %v5241
    %v5753 = vpack.c.b16 %v5249, %v5242
    %v5754 = vpack.c.b16 %v5250, %v5243
    %v5755 = vpack.c.b16 %v5251, %v5244
    %v5756 = vpack.c.b16 %v5252, %v5245
    %v5757 = vpack.c.b16 %v5260, %v5253
    %v5758 = vpack.c.b16 %v5261, %v5254
    %v5759 = vpack.c.b16 %v5262, %v5255
    %v5760 = vpack.c.b16 %v5263, %v5256
    %v5761 = vpack.c.b16 %v5264, %v5257
    %v5762 = vpack.c.b16 %v5265, %v5258
    %v5763 = vpack.c.b16 %v5266, %v5259
    %v5764 = vpack.c.b16 %v5274, %v5267
    %v5765 = vpack.c.b16 %v5275, %v5268
    %v5766 = vpack.c.b16 %v5276, %v5269
    %v5767 = vpack.c.b16 %v5277, %v5270
    %v5768 = vpack.c.b16 %v5278, %v5271
    %v5769 = vpack.c.b16 %v5279, %v5272
    %v5770 = vpack.c.b16 %v5280, %v5273
    %v5771 = vpack.c.b16 %v5288, %v5281
    %v5772 = vpack.c.b16 %v5289, %v5282
    %v5773 = vpack.c.b16 %v5290, %v5283
    %v5774 = vpack.c.b16 %v5291, %v5284
    %v5775 = vpack.c.b16 %v5292, %v5285
    %v5776 = vpack.c.b16 %v5293, %v5286
    %v5777 = vpack.c.b16 %v5294, %v5287
    %v5778 = vpack.c.b16 %v5302, %v5295
    %v5779 = vpack.c.b16 %v5303, %v5296
    %v5780 = vpack.c.b16 %v5304, %v5297
    %v5781 = vpack.c.b16 %v5305, %v5298
    %v5782 = vpack.c.b16 %v5306, %v5299
    %v5783 = vpack.c.b16 %v5307, %v5300
    %v5784 = vpack.c.b16 %v5308, %v5301
    %v5785 = vpack.c.b16 %v5316, %v5309
    %v5786 = vpack.c.b16 %v5317, %v5310
    %v5787 = vpack.c.b16 %v5318, %v5311
    %v5788 = vpack.c.b16 %v5319, %v5312
    %v5789 = vpack.c.b16 %v5320, %v5313
    %v5790 = vpack.c.b16 %v5321, %v5314
    %v5791 = vpack.c.b16 %v5322, %v5315
    %v5792 = vpack.c.b16 %v5330, %v5323
    %v5793 = vpack.c.b16 %v5331, %v5324
    %v5794 = vpack.c.b16 %v5332, %v5325
    %v5795 = vpack.c.b16 %v5333, %v5326
    %v5796 = vpack.c.b16 %v5334, %v5327
    %v5797 = vpack.c.b16 %v5335, %v5328
    %v5798 = vpack.c.b16 %v5336, %v5329
    %v5799 = vpack.c.b16 %v5344, %v5337
    %v5800 = vpack.c.b16 %v5345, %v5338
    %v5801 = vpack.c.b16 %v5346, %v5339
    %v5802 = vpack.c.b16 %v5347, %v5340
    %v5803 = vpack.c.b16 %v5348, %v5341
    %v5804 = vpack.c.b16 %v5349, %v5342
    %v5805 = vpack.c.b16 %v5350, %v5343
    %v5806 = vpack.c.b16 %v5358, %v5351
    %v5807 = vpack.c.b16 %v5359, %v5352
    %v5808 = vpack.c.b16 %v5360, %v5353
    %v5809 = vpack.c.b16 %v5361, %v5354
    %v5810 = vpack.c.b16 %v5362, %v5355
    %v5811 = vpack.c.b16 %v5363, %v5356
    %v5812 = vpack.c.b16 %v5364, %v5357
    %6261 = vmatpush.bf16.msra.mxu0 %v5414
    %6262 = vmatpush.bf16.msra.mxu0 %v5407
    %6263 = vmatpush.bf16.msra.mxu0 %v5400
    %6264 = vmatpush.bf16.msra.mxu0 %v5393
    %6265 = vmatpush.bf16.msra.mxu0 %v5386
    %6266 = vmatpush.bf16.msra.mxu0 %v5379
    %6267 = vmatpush.bf16.msra.mxu0 %v5372
    %6268 = vmatpush.bf16.msra.mxu0 %v5365
    %6269 = vmatmul.bf16.gmra.mxu0 %v3421
    %v6270 = vpop.f32.mrf.mxu0
    %v6271 = vadd.f32 %v3943, %v6270
    %v6272 = vpop.f32.mrf.mxu0
    %6273 = vdwg.mxu0
    %6274 = vmatpush.bf16.msra.mxu0 %v5470
    %6275 = vmatpush.bf16.msra.mxu0 %v5463
    %6276 = vmatpush.bf16.msra.mxu0 %v5456
    %6277 = vmatpush.bf16.msra.mxu0 %v5449
    %6278 = vmatpush.bf16.msra.mxu0 %v5442
    %6279 = vmatpush.bf16.msra.mxu0 %v5435
    %6280 = vmatpush.bf16.msra.mxu0 %v5428
    %6281 = vmatpush.bf16.msra.mxu0 %v5421
    %6282 = vmatmul.bf16.gmra.mxu0 %v3422
    %v6283 = vpop.f32.mrf.mxu0
    %v6284 = vadd.f32 %v6271, %v6283
    %v6285 = vpop.f32.mrf.mxu0
    %6286 = vdwg.mxu0
    %6287 = vmatpush.bf16.msra.mxu0 %v5526
    %6288 = vmatpush.bf16.msra.mxu0 %v5519
    %6289 = vmatpush.bf16.msra.mxu0 %v5512
    %6290 = vmatpush.bf16.msra.mxu0 %v5505
    %6291 = vmatpush.bf16.msra.mxu0 %v5498
    %6292 = vmatpush.bf16.msra.mxu0 %v5491
    %6293 = vmatpush.bf16.msra.mxu0 %v5484
    %6294 = vmatpush.bf16.msra.mxu0 %v5477
    %6295 = vmatmul.bf16.gmra.mxu0 %v3423
    %v6296 = vpop.f32.mrf.mxu0
    %v6297 = vadd.f32 %v6284, %v6296
    %v6298 = vpop.f32.mrf.mxu0
    %6299 = vdwg.mxu0
    %6300 = vmatpush.bf16.msra.mxu0 %v5582
    %6301 = vmatpush.bf16.msra.mxu0 %v5575
    %6302 = vmatpush.bf16.msra.mxu0 %v5568
    %6303 = vmatpush.bf16.msra.mxu0 %v5561
    %6304 = vmatpush.bf16.msra.mxu0 %v5554
    %6305 = vmatpush.bf16.msra.mxu0 %v5547
    %6306 = vmatpush.bf16.msra.mxu0 %v5540
    %6307 = vmatpush.bf16.msra.mxu0 %v5533
    %6308 = vmatmul.bf16.gmra.mxu0 %v3424
    %v6309 = vpop.f32.mrf.mxu0
    %v6310 = vadd.f32 %v6297, %v6309
    %v6311 = vpop.f32.mrf.mxu0
    %6312 = vdwg.mxu0
    %6313 = vmatpush.bf16.msra.mxu0 %v5638
    %6314 = vmatpush.bf16.msra.mxu0 %v5631
    %6315 = vmatpush.bf16.msra.mxu0 %v5624
    %6316 = vmatpush.bf16.msra.mxu0 %v5617
    %6317 = vmatpush.bf16.msra.mxu0 %v5610
    %6318 = vmatpush.bf16.msra.mxu0 %v5603
    %6319 = vmatpush.bf16.msra.mxu0 %v5596
    %6320 = vmatpush.bf16.msra.mxu0 %v5589
    %6321 = vmatmul.bf16.gmra.mxu0 %v3425
    %v6322 = vpop.f32.mrf.mxu0
    %v6323 = vadd.f32 %v6310, %v6322
    %v6324 = vpop.f32.mrf.mxu0
    %6325 = vdwg.mxu0
    %6326 = vmatpush.bf16.msra.mxu0 %v5694
    %6327 = vmatpush.bf16.msra.mxu0 %v5687
    %6328 = vmatpush.bf16.msra.mxu0 %v5680
    %6329 = vmatpush.bf16.msra.mxu0 %v5673
    %6330 = vmatpush.bf16.msra.mxu0 %v5666
    %6331 = vmatpush.bf16.msra.mxu0 %v5659
    %6332 = vmatpush.bf16.msra.mxu0 %v5652
    %6333 = vmatpush.bf16.msra.mxu0 %v5645
    %6334 = vmatmul.bf16.gmra.mxu0 %v3426
    %v6335 = vpop.f32.mrf.mxu0
    %v6336 = vadd.f32 %v6323, %v6335
    %v6337 = vpop.f32.mrf.mxu0
    %6338 = vdwg.mxu0
    %6339 = vmatpush.bf16.msra.mxu0 %v5750
    %6340 = vmatpush.bf16.msra.mxu0 %v5743
    %6341 = vmatpush.bf16.msra.mxu0 %v5736
    %6342 = vmatpush.bf16.msra.mxu0 %v5729
    %6343 = vmatpush.bf16.msra.mxu0 %v5722
    %6344 = vmatpush.bf16.msra.mxu0 %v5715
    %6345 = vmatpush.bf16.msra.mxu0 %v5708
    %6346 = vmatpush.bf16.msra.mxu0 %v5701
    %6347 = vmatmul.bf16.gmra.mxu0 %v3427
    %v6348 = vpop.f32.mrf.mxu0
    %v6349 = vadd.f32 %v6336, %v6348
    %v6350 = vpop.f32.mrf.mxu0
    %6351 = vdwg.mxu0
    %6352 = vmatpush.bf16.msra.mxu0 %v5806
    %6353 = vmatpush.bf16.msra.mxu0 %v5799
    %6354 = vmatpush.bf16.msra.mxu0 %v5792
    %6355 = vmatpush.bf16.msra.mxu0 %v5785
    %6356 = vmatpush.bf16.msra.mxu0 %v5778
    %6357 = vmatpush.bf16.msra.mxu0 %v5771
    %6358 = vmatpush.bf16.msra.mxu0 %v5764
    %6359 = vmatpush.bf16.msra.mxu0 %v5757
    %6360 = vmatmul.bf16.gmra.mxu0 %v3428
    %v6361 = vpop.f32.mrf.mxu0
    %v6362 = vadd.f32 %v6349, %v6361
    %v6363 = vpop.f32.mrf.mxu0
    %6364 = vdwg.mxu0
    %6365 = vmatpush.bf16.msra.mxu0 %v5415
    %6366 = vmatpush.bf16.msra.mxu0 %v5408
    %6367 = vmatpush.bf16.msra.mxu0 %v5401
    %6368 = vmatpush.bf16.msra.mxu0 %v5394
    %6369 = vmatpush.bf16.msra.mxu0 %v5387
    %6370 = vmatpush.bf16.msra.mxu0 %v5380
    %6371 = vmatpush.bf16.msra.mxu0 %v5373
    %6372 = vmatpush.bf16.msra.mxu0 %v5366
    %6373 = vmatmul.bf16.gmra.mxu0 %v3421
    %v6374 = vpop.f32.mrf.mxu0
    %v6375 = vadd.f32 %v3944, %v6374
    %v6376 = vpop.f32.mrf.mxu0
    %6377 = vdwg.mxu0
    %6378 = vmatpush.bf16.msra.mxu0 %v5471
    %6379 = vmatpush.bf16.msra.mxu0 %v5464
    %6380 = vmatpush.bf16.msra.mxu0 %v5457
    %6381 = vmatpush.bf16.msra.mxu0 %v5450
    %6382 = vmatpush.bf16.msra.mxu0 %v5443
    %6383 = vmatpush.bf16.msra.mxu0 %v5436
    %6384 = vmatpush.bf16.msra.mxu0 %v5429
    %6385 = vmatpush.bf16.msra.mxu0 %v5422
    %6386 = vmatmul.bf16.gmra.mxu0 %v3422
    %v6387 = vpop.f32.mrf.mxu0
    %v6388 = vadd.f32 %v6375, %v6387
    %v6389 = vpop.f32.mrf.mxu0
    %6390 = vdwg.mxu0
    %6391 = vmatpush.bf16.msra.mxu0 %v5527
    %6392 = vmatpush.bf16.msra.mxu0 %v5520
    %6393 = vmatpush.bf16.msra.mxu0 %v5513
    %6394 = vmatpush.bf16.msra.mxu0 %v5506
    %6395 = vmatpush.bf16.msra.mxu0 %v5499
    %6396 = vmatpush.bf16.msra.mxu0 %v5492
    %6397 = vmatpush.bf16.msra.mxu0 %v5485
    %6398 = vmatpush.bf16.msra.mxu0 %v5478
    %6399 = vmatmul.bf16.gmra.mxu0 %v3423
    %v6400 = vpop.f32.mrf.mxu0
    %v6401 = vadd.f32 %v6388, %v6400
    %v6402 = vpop.f32.mrf.mxu0
    %6403 = vdwg.mxu0
    %6404 = vmatpush.bf16.msra.mxu0 %v5583
    %6405 = vmatpush.bf16.msra.mxu0 %v5576
    %6406 = vmatpush.bf16.msra.mxu0 %v5569
    %6407 = vmatpush.bf16.msra.mxu0 %v5562
    %6408 = vmatpush.bf16.msra.mxu0 %v5555
    %6409 = vmatpush.bf16.msra.mxu0 %v5548
    %6410 = vmatpush.bf16.msra.mxu0 %v5541
    %6411 = vmatpush.bf16.msra.mxu0 %v5534
    %6412 = vmatmul.bf16.gmra.mxu0 %v3424
    %v6413 = vpop.f32.mrf.mxu0
    %v6414 = vadd.f32 %v6401, %v6413
    %v6415 = vpop.f32.mrf.mxu0
    %6416 = vdwg.mxu0
    %6417 = vmatpush.bf16.msra.mxu0 %v5639
    %6418 = vmatpush.bf16.msra.mxu0 %v5632
    %6419 = vmatpush.bf16.msra.mxu0 %v5625
    %6420 = vmatpush.bf16.msra.mxu0 %v5618
    %6421 = vmatpush.bf16.msra.mxu0 %v5611
    %6422 = vmatpush.bf16.msra.mxu0 %v5604
    %6423 = vmatpush.bf16.msra.mxu0 %v5597
    %6424 = vmatpush.bf16.msra.mxu0 %v5590
    %6425 = vmatmul.bf16.gmra.mxu0 %v3425
    %v6426 = vpop.f32.mrf.mxu0
    %v6427 = vadd.f32 %v6414, %v6426
    %v6428 = vpop.f32.mrf.mxu0
    %6429 = vdwg.mxu0
    %6430 = vmatpush.bf16.msra.mxu0 %v5695
    %6431 = vmatpush.bf16.msra.mxu0 %v5688
    %6432 = vmatpush.bf16.msra.mxu0 %v5681
    %6433 = vmatpush.bf16.msra.mxu0 %v5674
    %6434 = vmatpush.bf16.msra.mxu0 %v5667
    %6435 = vmatpush.bf16.msra.mxu0 %v5660
    %6436 = vmatpush.bf16.msra.mxu0 %v5653
    %6437 = vmatpush.bf16.msra.mxu0 %v5646
    %6438 = vmatmul.bf16.gmra.mxu0 %v3426
    %v6439 = vpop.f32.mrf.mxu0
    %v6440 = vadd.f32 %v6427, %v6439
    %v6441 = vpop.f32.mrf.mxu0
    %6442 = vdwg.mxu0
    %6443 = vmatpush.bf16.msra.mxu0 %v5751
    %6444 = vmatpush.bf16.msra.mxu0 %v5744
    %6445 = vmatpush.bf16.msra.mxu0 %v5737
    %6446 = vmatpush.bf16.msra.mxu0 %v5730
    %6447 = vmatpush.bf16.msra.mxu0 %v5723
    %6448 = vmatpush.bf16.msra.mxu0 %v5716
    %6449 = vmatpush.bf16.msra.mxu0 %v5709
    %6450 = vmatpush.bf16.msra.mxu0 %v5702
    %6451 = vmatmul.bf16.gmra.mxu0 %v3427
    %v6452 = vpop.f32.mrf.mxu0
    %v6453 = vadd.f32 %v6440, %v6452
    %v6454 = vpop.f32.mrf.mxu0
    %6455 = vdwg.mxu0
    %6456 = vmatpush.bf16.msra.mxu0 %v5807
    %6457 = vmatpush.bf16.msra.mxu0 %v5800
    %6458 = vmatpush.bf16.msra.mxu0 %v5793
    %6459 = vmatpush.bf16.msra.mxu0 %v5786
    %6460 = vmatpush.bf16.msra.mxu0 %v5779
    %6461 = vmatpush.bf16.msra.mxu0 %v5772
    %6462 = vmatpush.bf16.msra.mxu0 %v5765
    %6463 = vmatpush.bf16.msra.mxu0 %v5758
    %6464 = vmatmul.bf16.gmra.mxu0 %v3428
    %v6465 = vpop.f32.mrf.mxu0
    %v6466 = vadd.f32 %v6453, %v6465
    %v6467 = vpop.f32.mrf.mxu0
    %6468 = vdwg.mxu0
    %6469 = vmatpush.bf16.msra.mxu0 %v5416
    %6470 = vmatpush.bf16.msra.mxu0 %v5409
    %6471 = vmatpush.bf16.msra.mxu0 %v5402
    %6472 = vmatpush.bf16.msra.mxu0 %v5395
    %6473 = vmatpush.bf16.msra.mxu0 %v5388
    %6474 = vmatpush.bf16.msra.mxu0 %v5381
    %6475 = vmatpush.bf16.msra.mxu0 %v5374
    %6476 = vmatpush.bf16.msra.mxu0 %v5367
    %6477 = vmatmul.bf16.gmra.mxu0 %v3421
    %v6478 = vpop.f32.mrf.mxu0
    %v6479 = vadd.f32 %v3945, %v6478
    %v6480 = vpop.f32.mrf.mxu0
    %6481 = vdwg.mxu0
    %6482 = vmatpush.bf16.msra.mxu0 %v5472
    %6483 = vmatpush.bf16.msra.mxu0 %v5465
    %6484 = vmatpush.bf16.msra.mxu0 %v5458
    %6485 = vmatpush.bf16.msra.mxu0 %v5451
    %6486 = vmatpush.bf16.msra.mxu0 %v5444
    %6487 = vmatpush.bf16.msra.mxu0 %v5437
    %6488 = vmatpush.bf16.msra.mxu0 %v5430
    %6489 = vmatpush.bf16.msra.mxu0 %v5423
    %6490 = vmatmul.bf16.gmra.mxu0 %v3422
    %v6491 = vpop.f32.mrf.mxu0
    %v6492 = vadd.f32 %v6479, %v6491
    %v6493 = vpop.f32.mrf.mxu0
    %6494 = vdwg.mxu0
    %6495 = vmatpush.bf16.msra.mxu0 %v5528
    %6496 = vmatpush.bf16.msra.mxu0 %v5521
    %6497 = vmatpush.bf16.msra.mxu0 %v5514
    %6498 = vmatpush.bf16.msra.mxu0 %v5507
    %6499 = vmatpush.bf16.msra.mxu0 %v5500
    %6500 = vmatpush.bf16.msra.mxu0 %v5493
    %6501 = vmatpush.bf16.msra.mxu0 %v5486
    %6502 = vmatpush.bf16.msra.mxu0 %v5479
    %6503 = vmatmul.bf16.gmra.mxu0 %v3423
    %v6504 = vpop.f32.mrf.mxu0
    %v6505 = vadd.f32 %v6492, %v6504
    %v6506 = vpop.f32.mrf.mxu0
    %6507 = vdwg.mxu0
    %6508 = vmatpush.bf16.msra.mxu0 %v5584
    %6509 = vmatpush.bf16.msra.mxu0 %v5577
    %6510 = vmatpush.bf16.msra.mxu0 %v5570
    %6511 = vmatpush.bf16.msra.mxu0 %v5563
    %6512 = vmatpush.bf16.msra.mxu0 %v5556
    %6513 = vmatpush.bf16.msra.mxu0 %v5549
    %6514 = vmatpush.bf16.msra.mxu0 %v5542
    %6515 = vmatpush.bf16.msra.mxu0 %v5535
    %6516 = vmatmul.bf16.gmra.mxu0 %v3424
    %v6517 = vpop.f32.mrf.mxu0
    %v6518 = vadd.f32 %v6505, %v6517
    %v6519 = vpop.f32.mrf.mxu0
    %6520 = vdwg.mxu0
    %6521 = vmatpush.bf16.msra.mxu0 %v5640
    %6522 = vmatpush.bf16.msra.mxu0 %v5633
    %6523 = vmatpush.bf16.msra.mxu0 %v5626
    %6524 = vmatpush.bf16.msra.mxu0 %v5619
    %6525 = vmatpush.bf16.msra.mxu0 %v5612
    %6526 = vmatpush.bf16.msra.mxu0 %v5605
    %6527 = vmatpush.bf16.msra.mxu0 %v5598
    %6528 = vmatpush.bf16.msra.mxu0 %v5591
    %6529 = vmatmul.bf16.gmra.mxu0 %v3425
    %v6530 = vpop.f32.mrf.mxu0
    %v6531 = vadd.f32 %v6518, %v6530
    %v6532 = vpop.f32.mrf.mxu0
    %6533 = vdwg.mxu0
    %6534 = vmatpush.bf16.msra.mxu0 %v5696
    %6535 = vmatpush.bf16.msra.mxu0 %v5689
    %6536 = vmatpush.bf16.msra.mxu0 %v5682
    %6537 = vmatpush.bf16.msra.mxu0 %v5675
    %6538 = vmatpush.bf16.msra.mxu0 %v5668
    %6539 = vmatpush.bf16.msra.mxu0 %v5661
    %6540 = vmatpush.bf16.msra.mxu0 %v5654
    %6541 = vmatpush.bf16.msra.mxu0 %v5647
    %6542 = vmatmul.bf16.gmra.mxu0 %v3426
    %v6543 = vpop.f32.mrf.mxu0
    %v6544 = vadd.f32 %v6531, %v6543
    %v6545 = vpop.f32.mrf.mxu0
    %6546 = vdwg.mxu0
    %6547 = vmatpush.bf16.msra.mxu0 %v5752
    %6548 = vmatpush.bf16.msra.mxu0 %v5745
    %6549 = vmatpush.bf16.msra.mxu0 %v5738
    %6550 = vmatpush.bf16.msra.mxu0 %v5731
    %6551 = vmatpush.bf16.msra.mxu0 %v5724
    %6552 = vmatpush.bf16.msra.mxu0 %v5717
    %6553 = vmatpush.bf16.msra.mxu0 %v5710
    %6554 = vmatpush.bf16.msra.mxu0 %v5703
    %6555 = vmatmul.bf16.gmra.mxu0 %v3427
    %v6556 = vpop.f32.mrf.mxu0
    %v6557 = vadd.f32 %v6544, %v6556
    %v6558 = vpop.f32.mrf.mxu0
    %6559 = vdwg.mxu0
    %6560 = vmatpush.bf16.msra.mxu0 %v5808
    %6561 = vmatpush.bf16.msra.mxu0 %v5801
    %6562 = vmatpush.bf16.msra.mxu0 %v5794
    %6563 = vmatpush.bf16.msra.mxu0 %v5787
    %6564 = vmatpush.bf16.msra.mxu0 %v5780
    %6565 = vmatpush.bf16.msra.mxu0 %v5773
    %6566 = vmatpush.bf16.msra.mxu0 %v5766
    %6567 = vmatpush.bf16.msra.mxu0 %v5759
    %6568 = vmatmul.bf16.gmra.mxu0 %v3428
    %v6569 = vpop.f32.mrf.mxu0
    %v6570 = vadd.f32 %v6557, %v6569
    %v6571 = vpop.f32.mrf.mxu0
    %6572 = vdwg.mxu0
    %6573 = vmatpush.bf16.msra.mxu0 %v5417
    %6574 = vmatpush.bf16.msra.mxu0 %v5410
    %6575 = vmatpush.bf16.msra.mxu0 %v5403
    %6576 = vmatpush.bf16.msra.mxu0 %v5396
    %6577 = vmatpush.bf16.msra.mxu0 %v5389
    %6578 = vmatpush.bf16.msra.mxu0 %v5382
    %6579 = vmatpush.bf16.msra.mxu0 %v5375
    %6580 = vmatpush.bf16.msra.mxu0 %v5368
    %6581 = vmatmul.bf16.gmra.mxu0 %v3421
    %v6582 = vpop.f32.mrf.mxu0
    %v6583 = vadd.f32 %v3946, %v6582
    %v6584 = vpop.f32.mrf.mxu0
    %6585 = vdwg.mxu0
    %6586 = vmatpush.bf16.msra.mxu0 %v5473
    %6587 = vmatpush.bf16.msra.mxu0 %v5466
    %6588 = vmatpush.bf16.msra.mxu0 %v5459
    %6589 = vmatpush.bf16.msra.mxu0 %v5452
    %6590 = vmatpush.bf16.msra.mxu0 %v5445
    %6591 = vmatpush.bf16.msra.mxu0 %v5438
    %6592 = vmatpush.bf16.msra.mxu0 %v5431
    %6593 = vmatpush.bf16.msra.mxu0 %v5424
    %6594 = vmatmul.bf16.gmra.mxu0 %v3422
    %v6595 = vpop.f32.mrf.mxu0
    %v6596 = vadd.f32 %v6583, %v6595
    %v6597 = vpop.f32.mrf.mxu0
    %6598 = vdwg.mxu0
    %6599 = vmatpush.bf16.msra.mxu0 %v5529
    %6600 = vmatpush.bf16.msra.mxu0 %v5522
    %6601 = vmatpush.bf16.msra.mxu0 %v5515
    %6602 = vmatpush.bf16.msra.mxu0 %v5508
    %6603 = vmatpush.bf16.msra.mxu0 %v5501
    %6604 = vmatpush.bf16.msra.mxu0 %v5494
    %6605 = vmatpush.bf16.msra.mxu0 %v5487
    %6606 = vmatpush.bf16.msra.mxu0 %v5480
    %6607 = vmatmul.bf16.gmra.mxu0 %v3423
    %v6608 = vpop.f32.mrf.mxu0
    %v6609 = vadd.f32 %v6596, %v6608
    %v6610 = vpop.f32.mrf.mxu0
    %6611 = vdwg.mxu0
    %6612 = vmatpush.bf16.msra.mxu0 %v5585
    %6613 = vmatpush.bf16.msra.mxu0 %v5578
    %6614 = vmatpush.bf16.msra.mxu0 %v5571
    %6615 = vmatpush.bf16.msra.mxu0 %v5564
    %6616 = vmatpush.bf16.msra.mxu0 %v5557
    %6617 = vmatpush.bf16.msra.mxu0 %v5550
    %6618 = vmatpush.bf16.msra.mxu0 %v5543
    %6619 = vmatpush.bf16.msra.mxu0 %v5536
    %6620 = vmatmul.bf16.gmra.mxu0 %v3424
    %v6621 = vpop.f32.mrf.mxu0
    %v6622 = vadd.f32 %v6609, %v6621
    %v6623 = vpop.f32.mrf.mxu0
    %6624 = vdwg.mxu0
    %6625 = vmatpush.bf16.msra.mxu0 %v5641
    %6626 = vmatpush.bf16.msra.mxu0 %v5634
    %6627 = vmatpush.bf16.msra.mxu0 %v5627
    %6628 = vmatpush.bf16.msra.mxu0 %v5620
    %6629 = vmatpush.bf16.msra.mxu0 %v5613
    %6630 = vmatpush.bf16.msra.mxu0 %v5606
    %6631 = vmatpush.bf16.msra.mxu0 %v5599
    %6632 = vmatpush.bf16.msra.mxu0 %v5592
    %6633 = vmatmul.bf16.gmra.mxu0 %v3425
    %v6634 = vpop.f32.mrf.mxu0
    %v6635 = vadd.f32 %v6622, %v6634
    %v6636 = vpop.f32.mrf.mxu0
    %6637 = vdwg.mxu0
    %6638 = vmatpush.bf16.msra.mxu0 %v5697
    %6639 = vmatpush.bf16.msra.mxu0 %v5690
    %6640 = vmatpush.bf16.msra.mxu0 %v5683
    %6641 = vmatpush.bf16.msra.mxu0 %v5676
    %6642 = vmatpush.bf16.msra.mxu0 %v5669
    %6643 = vmatpush.bf16.msra.mxu0 %v5662
    %6644 = vmatpush.bf16.msra.mxu0 %v5655
    %6645 = vmatpush.bf16.msra.mxu0 %v5648
    %6646 = vmatmul.bf16.gmra.mxu0 %v3426
    %v6647 = vpop.f32.mrf.mxu0
    %v6648 = vadd.f32 %v6635, %v6647
    %v6649 = vpop.f32.mrf.mxu0
    %6650 = vdwg.mxu0
    %6651 = vmatpush.bf16.msra.mxu0 %v5753
    %6652 = vmatpush.bf16.msra.mxu0 %v5746
    %6653 = vmatpush.bf16.msra.mxu0 %v5739
    %6654 = vmatpush.bf16.msra.mxu0 %v5732
    %6655 = vmatpush.bf16.msra.mxu0 %v5725
    %6656 = vmatpush.bf16.msra.mxu0 %v5718
    %6657 = vmatpush.bf16.msra.mxu0 %v5711
    %6658 = vmatpush.bf16.msra.mxu0 %v5704
    %6659 = vmatmul.bf16.gmra.mxu0 %v3427
    %v6660 = vpop.f32.mrf.mxu0
    %v6661 = vadd.f32 %v6648, %v6660
    %v6662 = vpop.f32.mrf.mxu0
    %6663 = vdwg.mxu0
    %6664 = vmatpush.bf16.msra.mxu0 %v5809
    %6665 = vmatpush.bf16.msra.mxu0 %v5802
    %6666 = vmatpush.bf16.msra.mxu0 %v5795
    %6667 = vmatpush.bf16.msra.mxu0 %v5788
    %6668 = vmatpush.bf16.msra.mxu0 %v5781
    %6669 = vmatpush.bf16.msra.mxu0 %v5774
    %6670 = vmatpush.bf16.msra.mxu0 %v5767
    %6671 = vmatpush.bf16.msra.mxu0 %v5760
    %6672 = vmatmul.bf16.gmra.mxu0 %v3428
    %v6673 = vpop.f32.mrf.mxu0
    %v6674 = vadd.f32 %v6661, %v6673
    %v6675 = vpop.f32.mrf.mxu0
    %6676 = vdwg.mxu0
    %6677 = vmatpush.bf16.msra.mxu0 %v5418
    %6678 = vmatpush.bf16.msra.mxu0 %v5411
    %6679 = vmatpush.bf16.msra.mxu0 %v5404
    %6680 = vmatpush.bf16.msra.mxu0 %v5397
    %6681 = vmatpush.bf16.msra.mxu0 %v5390
    %6682 = vmatpush.bf16.msra.mxu0 %v5383
    %6683 = vmatpush.bf16.msra.mxu0 %v5376
    %6684 = vmatpush.bf16.msra.mxu0 %v5369
    %6685 = vmatmul.bf16.gmra.mxu0 %v3421
    %v6686 = vpop.f32.mrf.mxu0
    %v6687 = vadd.f32 %v3947, %v6686
    %v6688 = vpop.f32.mrf.mxu0
    %6689 = vdwg.mxu0
    %6690 = vmatpush.bf16.msra.mxu0 %v5474
    %6691 = vmatpush.bf16.msra.mxu0 %v5467
    %6692 = vmatpush.bf16.msra.mxu0 %v5460
    %6693 = vmatpush.bf16.msra.mxu0 %v5453
    %6694 = vmatpush.bf16.msra.mxu0 %v5446
    %6695 = vmatpush.bf16.msra.mxu0 %v5439
    %6696 = vmatpush.bf16.msra.mxu0 %v5432
    %6697 = vmatpush.bf16.msra.mxu0 %v5425
    %6698 = vmatmul.bf16.gmra.mxu0 %v3422
    %v6699 = vpop.f32.mrf.mxu0
    %v6700 = vadd.f32 %v6687, %v6699
    %v6701 = vpop.f32.mrf.mxu0
    %6702 = vdwg.mxu0
    %6703 = vmatpush.bf16.msra.mxu0 %v5530
    %6704 = vmatpush.bf16.msra.mxu0 %v5523
    %6705 = vmatpush.bf16.msra.mxu0 %v5516
    %6706 = vmatpush.bf16.msra.mxu0 %v5509
    %6707 = vmatpush.bf16.msra.mxu0 %v5502
    %6708 = vmatpush.bf16.msra.mxu0 %v5495
    %6709 = vmatpush.bf16.msra.mxu0 %v5488
    %6710 = vmatpush.bf16.msra.mxu0 %v5481
    %6711 = vmatmul.bf16.gmra.mxu0 %v3423
    %v6712 = vpop.f32.mrf.mxu0
    %v6713 = vadd.f32 %v6700, %v6712
    %v6714 = vpop.f32.mrf.mxu0
    %6715 = vdwg.mxu0
    %6716 = vmatpush.bf16.msra.mxu0 %v5586
    %6717 = vmatpush.bf16.msra.mxu0 %v5579
    %6718 = vmatpush.bf16.msra.mxu0 %v5572
    %6719 = vmatpush.bf16.msra.mxu0 %v5565
    %6720 = vmatpush.bf16.msra.mxu0 %v5558
    %6721 = vmatpush.bf16.msra.mxu0 %v5551
    %6722 = vmatpush.bf16.msra.mxu0 %v5544
    %6723 = vmatpush.bf16.msra.mxu0 %v5537
    %6724 = vmatmul.bf16.gmra.mxu0 %v3424
    %v6725 = vpop.f32.mrf.mxu0
    %v6726 = vadd.f32 %v6713, %v6725
    %v6727 = vpop.f32.mrf.mxu0
    %6728 = vdwg.mxu0
    %6729 = vmatpush.bf16.msra.mxu0 %v5642
    %6730 = vmatpush.bf16.msra.mxu0 %v5635
    %6731 = vmatpush.bf16.msra.mxu0 %v5628
    %6732 = vmatpush.bf16.msra.mxu0 %v5621
    %6733 = vmatpush.bf16.msra.mxu0 %v5614
    %6734 = vmatpush.bf16.msra.mxu0 %v5607
    %6735 = vmatpush.bf16.msra.mxu0 %v5600
    %6736 = vmatpush.bf16.msra.mxu0 %v5593
    %6737 = vmatmul.bf16.gmra.mxu0 %v3425
    %v6738 = vpop.f32.mrf.mxu0
    %v6739 = vadd.f32 %v6726, %v6738
    %v6740 = vpop.f32.mrf.mxu0
    %6741 = vdwg.mxu0
    %6742 = vmatpush.bf16.msra.mxu0 %v5698
    %6743 = vmatpush.bf16.msra.mxu0 %v5691
    %6744 = vmatpush.bf16.msra.mxu0 %v5684
    %6745 = vmatpush.bf16.msra.mxu0 %v5677
    %6746 = vmatpush.bf16.msra.mxu0 %v5670
    %6747 = vmatpush.bf16.msra.mxu0 %v5663
    %6748 = vmatpush.bf16.msra.mxu0 %v5656
    %6749 = vmatpush.bf16.msra.mxu0 %v5649
    %6750 = vmatmul.bf16.gmra.mxu0 %v3426
    %v6751 = vpop.f32.mrf.mxu0
    %v6752 = vadd.f32 %v6739, %v6751
    %v6753 = vpop.f32.mrf.mxu0
    %6754 = vdwg.mxu0
    %6755 = vmatpush.bf16.msra.mxu0 %v5754
    %6756 = vmatpush.bf16.msra.mxu0 %v5747
    %6757 = vmatpush.bf16.msra.mxu0 %v5740
    %6758 = vmatpush.bf16.msra.mxu0 %v5733
    %6759 = vmatpush.bf16.msra.mxu0 %v5726
    %6760 = vmatpush.bf16.msra.mxu0 %v5719
    %6761 = vmatpush.bf16.msra.mxu0 %v5712
    %6762 = vmatpush.bf16.msra.mxu0 %v5705
    %6763 = vmatmul.bf16.gmra.mxu0 %v3427
    %v6764 = vpop.f32.mrf.mxu0
    %v6765 = vadd.f32 %v6752, %v6764
    %v6766 = vpop.f32.mrf.mxu0
    %6767 = vdwg.mxu0
    %6768 = vmatpush.bf16.msra.mxu0 %v5810
    %6769 = vmatpush.bf16.msra.mxu0 %v5803
    %6770 = vmatpush.bf16.msra.mxu0 %v5796
    %6771 = vmatpush.bf16.msra.mxu0 %v5789
    %6772 = vmatpush.bf16.msra.mxu0 %v5782
    %6773 = vmatpush.bf16.msra.mxu0 %v5775
    %6774 = vmatpush.bf16.msra.mxu0 %v5768
    %6775 = vmatpush.bf16.msra.mxu0 %v5761
    %6776 = vmatmul.bf16.gmra.mxu0 %v3428
    %v6777 = vpop.f32.mrf.mxu0
    %v6778 = vadd.f32 %v6765, %v6777
    %v6779 = vpop.f32.mrf.mxu0
    %6780 = vdwg.mxu0
    %6781 = vmatpush.bf16.msra.mxu0 %v5419
    %6782 = vmatpush.bf16.msra.mxu0 %v5412
    %6783 = vmatpush.bf16.msra.mxu0 %v5405
    %6784 = vmatpush.bf16.msra.mxu0 %v5398
    %6785 = vmatpush.bf16.msra.mxu0 %v5391
    %6786 = vmatpush.bf16.msra.mxu0 %v5384
    %6787 = vmatpush.bf16.msra.mxu0 %v5377
    %6788 = vmatpush.bf16.msra.mxu0 %v5370
    %6789 = vmatmul.bf16.gmra.mxu0 %v3421
    %v6790 = vpop.f32.mrf.mxu0
    %v6791 = vadd.f32 %v3948, %v6790
    %v6792 = vpop.f32.mrf.mxu0
    %6793 = vdwg.mxu0
    %6794 = vmatpush.bf16.msra.mxu0 %v5475
    %6795 = vmatpush.bf16.msra.mxu0 %v5468
    %6796 = vmatpush.bf16.msra.mxu0 %v5461
    %6797 = vmatpush.bf16.msra.mxu0 %v5454
    %6798 = vmatpush.bf16.msra.mxu0 %v5447
    %6799 = vmatpush.bf16.msra.mxu0 %v5440
    %6800 = vmatpush.bf16.msra.mxu0 %v5433
    %6801 = vmatpush.bf16.msra.mxu0 %v5426
    %6802 = vmatmul.bf16.gmra.mxu0 %v3422
    %v6803 = vpop.f32.mrf.mxu0
    %v6804 = vadd.f32 %v6791, %v6803
    %v6805 = vpop.f32.mrf.mxu0
    %6806 = vdwg.mxu0
    %6807 = vmatpush.bf16.msra.mxu0 %v5531
    %6808 = vmatpush.bf16.msra.mxu0 %v5524
    %6809 = vmatpush.bf16.msra.mxu0 %v5517
    %6810 = vmatpush.bf16.msra.mxu0 %v5510
    %6811 = vmatpush.bf16.msra.mxu0 %v5503
    %6812 = vmatpush.bf16.msra.mxu0 %v5496
    %6813 = vmatpush.bf16.msra.mxu0 %v5489
    %6814 = vmatpush.bf16.msra.mxu0 %v5482
    %6815 = vmatmul.bf16.gmra.mxu0 %v3423
    %v6816 = vpop.f32.mrf.mxu0
    %v6817 = vadd.f32 %v6804, %v6816
    %v6818 = vpop.f32.mrf.mxu0
    %6819 = vdwg.mxu0
    %6820 = vmatpush.bf16.msra.mxu0 %v5587
    %6821 = vmatpush.bf16.msra.mxu0 %v5580
    %6822 = vmatpush.bf16.msra.mxu0 %v5573
    %6823 = vmatpush.bf16.msra.mxu0 %v5566
    %6824 = vmatpush.bf16.msra.mxu0 %v5559
    %6825 = vmatpush.bf16.msra.mxu0 %v5552
    %6826 = vmatpush.bf16.msra.mxu0 %v5545
    %6827 = vmatpush.bf16.msra.mxu0 %v5538
    %6828 = vmatmul.bf16.gmra.mxu0 %v3424
    %v6829 = vpop.f32.mrf.mxu0
    %v6830 = vadd.f32 %v6817, %v6829
    %v6831 = vpop.f32.mrf.mxu0
    %6832 = vdwg.mxu0
    %6833 = vmatpush.bf16.msra.mxu0 %v5643
    %6834 = vmatpush.bf16.msra.mxu0 %v5636
    %6835 = vmatpush.bf16.msra.mxu0 %v5629
    %6836 = vmatpush.bf16.msra.mxu0 %v5622
    %6837 = vmatpush.bf16.msra.mxu0 %v5615
    %6838 = vmatpush.bf16.msra.mxu0 %v5608
    %6839 = vmatpush.bf16.msra.mxu0 %v5601
    %6840 = vmatpush.bf16.msra.mxu0 %v5594
    %6841 = vmatmul.bf16.gmra.mxu0 %v3425
    %v6842 = vpop.f32.mrf.mxu0
    %v6843 = vadd.f32 %v6830, %v6842
    %v6844 = vpop.f32.mrf.mxu0
    %6845 = vdwg.mxu0
    %6846 = vmatpush.bf16.msra.mxu0 %v5699
    %6847 = vmatpush.bf16.msra.mxu0 %v5692
    %6848 = vmatpush.bf16.msra.mxu0 %v5685
    %6849 = vmatpush.bf16.msra.mxu0 %v5678
    %6850 = vmatpush.bf16.msra.mxu0 %v5671
    %6851 = vmatpush.bf16.msra.mxu0 %v5664
    %6852 = vmatpush.bf16.msra.mxu0 %v5657
    %6853 = vmatpush.bf16.msra.mxu0 %v5650
    %6854 = vmatmul.bf16.gmra.mxu0 %v3426
    %v6855 = vpop.f32.mrf.mxu0
    %v6856 = vadd.f32 %v6843, %v6855
    %v6857 = vpop.f32.mrf.mxu0
    %6858 = vdwg.mxu0
    %6859 = vmatpush.bf16.msra.mxu0 %v5755
    %6860 = vmatpush.bf16.msra.mxu0 %v5748
    %6861 = vmatpush.bf16.msra.mxu0 %v5741
    %6862 = vmatpush.bf16.msra.mxu0 %v5734
    %6863 = vmatpush.bf16.msra.mxu0 %v5727
    %6864 = vmatpush.bf16.msra.mxu0 %v5720
    %6865 = vmatpush.bf16.msra.mxu0 %v5713
    %6866 = vmatpush.bf16.msra.mxu0 %v5706
    %6867 = vmatmul.bf16.gmra.mxu0 %v3427
    %v6868 = vpop.f32.mrf.mxu0
    %v6869 = vadd.f32 %v6856, %v6868
    %v6870 = vpop.f32.mrf.mxu0
    %6871 = vdwg.mxu0
    %6872 = vmatpush.bf16.msra.mxu0 %v5811
    %6873 = vmatpush.bf16.msra.mxu0 %v5804
    %6874 = vmatpush.bf16.msra.mxu0 %v5797
    %6875 = vmatpush.bf16.msra.mxu0 %v5790
    %6876 = vmatpush.bf16.msra.mxu0 %v5783
    %6877 = vmatpush.bf16.msra.mxu0 %v5776
    %6878 = vmatpush.bf16.msra.mxu0 %v5769
    %6879 = vmatpush.bf16.msra.mxu0 %v5762
    %6880 = vmatmul.bf16.gmra.mxu0 %v3428
    %v6881 = vpop.f32.mrf.mxu0
    %v6882 = vadd.f32 %v6869, %v6881
    %v6883 = vpop.f32.mrf.mxu0
    %6884 = vdwg.mxu0
    %6885 = vmatpush.bf16.msra.mxu0 %v5420
    %6886 = vmatpush.bf16.msra.mxu0 %v5413
    %6887 = vmatpush.bf16.msra.mxu0 %v5406
    %6888 = vmatpush.bf16.msra.mxu0 %v5399
    %6889 = vmatpush.bf16.msra.mxu0 %v5392
    %6890 = vmatpush.bf16.msra.mxu0 %v5385
    %6891 = vmatpush.bf16.msra.mxu0 %v5378
    %6892 = vmatpush.bf16.msra.mxu0 %v5371
    %6893 = vmatmul.bf16.gmra.mxu0 %v3421
    %v6894 = vpop.f32.mrf.mxu0
    %v6895 = vadd.f32 %v3949, %v6894
    %v6896 = vpop.f32.mrf.mxu0
    %6897 = vdwg.mxu0
    %6898 = vmatpush.bf16.msra.mxu0 %v5476
    %6899 = vmatpush.bf16.msra.mxu0 %v5469
    %6900 = vmatpush.bf16.msra.mxu0 %v5462
    %6901 = vmatpush.bf16.msra.mxu0 %v5455
    %6902 = vmatpush.bf16.msra.mxu0 %v5448
    %6903 = vmatpush.bf16.msra.mxu0 %v5441
    %6904 = vmatpush.bf16.msra.mxu0 %v5434
    %6905 = vmatpush.bf16.msra.mxu0 %v5427
    %6906 = vmatmul.bf16.gmra.mxu0 %v3422
    %v6907 = vpop.f32.mrf.mxu0
    %v6908 = vadd.f32 %v6895, %v6907
    %v6909 = vpop.f32.mrf.mxu0
    %6910 = vdwg.mxu0
    %6911 = vmatpush.bf16.msra.mxu0 %v5532
    %6912 = vmatpush.bf16.msra.mxu0 %v5525
    %6913 = vmatpush.bf16.msra.mxu0 %v5518
    %6914 = vmatpush.bf16.msra.mxu0 %v5511
    %6915 = vmatpush.bf16.msra.mxu0 %v5504
    %6916 = vmatpush.bf16.msra.mxu0 %v5497
    %6917 = vmatpush.bf16.msra.mxu0 %v5490
    %6918 = vmatpush.bf16.msra.mxu0 %v5483
    %6919 = vmatmul.bf16.gmra.mxu0 %v3423
    %v6920 = vpop.f32.mrf.mxu0
    %v6921 = vadd.f32 %v6908, %v6920
    %v6922 = vpop.f32.mrf.mxu0
    %6923 = vdwg.mxu0
    %6924 = vmatpush.bf16.msra.mxu0 %v5588
    %6925 = vmatpush.bf16.msra.mxu0 %v5581
    %6926 = vmatpush.bf16.msra.mxu0 %v5574
    %6927 = vmatpush.bf16.msra.mxu0 %v5567
    %6928 = vmatpush.bf16.msra.mxu0 %v5560
    %6929 = vmatpush.bf16.msra.mxu0 %v5553
    %6930 = vmatpush.bf16.msra.mxu0 %v5546
    %6931 = vmatpush.bf16.msra.mxu0 %v5539
    %6932 = vmatmul.bf16.gmra.mxu0 %v3424
    %v6933 = vpop.f32.mrf.mxu0
    %v6934 = vadd.f32 %v6921, %v6933
    %v6935 = vpop.f32.mrf.mxu0
    %6936 = vdwg.mxu0
    %6937 = vmatpush.bf16.msra.mxu0 %v5644
    %6938 = vmatpush.bf16.msra.mxu0 %v5637
    %6939 = vmatpush.bf16.msra.mxu0 %v5630
    %6940 = vmatpush.bf16.msra.mxu0 %v5623
    %6941 = vmatpush.bf16.msra.mxu0 %v5616
    %6942 = vmatpush.bf16.msra.mxu0 %v5609
    %6943 = vmatpush.bf16.msra.mxu0 %v5602
    %6944 = vmatpush.bf16.msra.mxu0 %v5595
    %6945 = vmatmul.bf16.gmra.mxu0 %v3425
    %v6946 = vpop.f32.mrf.mxu0
    %v6947 = vadd.f32 %v6934, %v6946
    %v6948 = vpop.f32.mrf.mxu0
    %6949 = vdwg.mxu0
    %6950 = vmatpush.bf16.msra.mxu0 %v5700
    %6951 = vmatpush.bf16.msra.mxu0 %v5693
    %6952 = vmatpush.bf16.msra.mxu0 %v5686
    %6953 = vmatpush.bf16.msra.mxu0 %v5679
    %6954 = vmatpush.bf16.msra.mxu0 %v5672
    %6955 = vmatpush.bf16.msra.mxu0 %v5665
    %6956 = vmatpush.bf16.msra.mxu0 %v5658
    %6957 = vmatpush.bf16.msra.mxu0 %v5651
    %6958 = vmatmul.bf16.gmra.mxu0 %v3426
    %v6959 = vpop.f32.mrf.mxu0
    %v6960 = vadd.f32 %v6947, %v6959
    %v6961 = vpop.f32.mrf.mxu0
    %6962 = vdwg.mxu0
    %6963 = vmatpush.bf16.msra.mxu0 %v5756
    %6964 = vmatpush.bf16.msra.mxu0 %v5749
    %6965 = vmatpush.bf16.msra.mxu0 %v5742
    %6966 = vmatpush.bf16.msra.mxu0 %v5735
    %6967 = vmatpush.bf16.msra.mxu0 %v5728
    %6968 = vmatpush.bf16.msra.mxu0 %v5721
    %6969 = vmatpush.bf16.msra.mxu0 %v5714
    %6970 = vmatpush.bf16.msra.mxu0 %v5707
    %6971 = vmatmul.bf16.gmra.mxu0 %v3427
    %v6972 = vpop.f32.mrf.mxu0
    %v6973 = vadd.f32 %v6960, %v6972
    %v6974 = vpop.f32.mrf.mxu0
    %6975 = vdwg.mxu0
    %6976 = vmatpush.bf16.msra.mxu0 %v5812
    %6977 = vmatpush.bf16.msra.mxu0 %v5805
    %6978 = vmatpush.bf16.msra.mxu0 %v5798
    %6979 = vmatpush.bf16.msra.mxu0 %v5791
    %6980 = vmatpush.bf16.msra.mxu0 %v5784
    %6981 = vmatpush.bf16.msra.mxu0 %v5777
    %6982 = vmatpush.bf16.msra.mxu0 %v5770
    %6983 = vmatpush.bf16.msra.mxu0 %v5763
    %6984 = vmatmul.bf16.gmra.mxu0 %v3428
    %v6985 = vpop.f32.mrf.mxu0
    %v6986 = vadd.f32 %v6973, %v6985
    %v6987 = vpop.f32.mrf.mxu0
    %6988 = vdwg.mxu0
    %v6989 = vxor.u32 %v6362, 2147483648
    %v6990 = vxor.u32 %v6466, 2147483648
    %v6991 = vxor.u32 %v6570, 2147483648
    %v6992 = vxor.u32 %v6674, 2147483648
    %v6993 = vxor.u32 %v6778, 2147483648
    %v6994 = vxor.u32 %v6882, 2147483648
    %v6995 = vxor.u32 %v6986, 2147483648
    %v6996 = vmul.f32 %v6989, 1.442695
    %v6997 = vpow.pop %v6996
    %v6998 = vmul.f32 %v6990, 1.442695
    %v6999 = vpow.pop %v6998
    %v7000 = vmul.f32 %v6991, 1.442695
    %v7001 = vpow.pop %v7000
    %v7002 = vmul.f32 %v6992, 1.442695
    %v7003 = vpow.pop %v7002
    %v7004 = vmul.f32 %v6993, 1.442695
    %v7005 = vpow.pop %v7004
    %v7006 = vmul.f32 %v6994, 1.442695
    %v7007 = vpow.pop %v7006
    %v7008 = vmul.f32 %v6995, 1.442695
    %v7009 = vpow.pop %v7008
    %v7010 = vadd.f32 %v6997, 1.0
    %v7011 = vadd.f32 %v6999, 1.0
    %v7012 = vadd.f32 %v7001, 1.0
    %v7013 = vadd.f32 %v7003, 1.0
    %v7014 = vadd.f32 %v7005, 1.0
    %v7015 = vadd.f32 %v7007, 1.0
    %v7016 = vadd.f32 %v7009, 1.0
    %v7017 = vrcp.pop %v7010
    %v7018 = vmul.f32 %v7010, %v7017
    %v7019 = vsub.f32 1.0, %v7018
    %v7020 = vmul.f32 %v7017, %v7019
    %v7021 = vadd.f32 %v7017, %v7020
    %vm7022 = vweird.f32 %v7010
    %vm7023 = vweird.f32 %v7017
    %vm7024 = vmor %vm7022, %vm7023
    %v7025 = vsel %vm7024, %v7017, %v7021
    %v7026 = vand.u32 2147483647, %v7010
    %vm7027 = vcmp.eq.f32.partialorder %v7026, 8.507059e+37
    %v7028 = vand.u32 %v7010, 2147483648
    %v7029 = vor.u32 1.1754944e-38, %v7028
    %v7030 = vsel %vm7027, %v7029, %v7025
    %v7031 = vmul.f32 1.0, %v7030
    %v7032 = vrcp.pop %v7011
    %v7033 = vmul.f32 %v7011, %v7032
    %v7034 = vsub.f32 1.0, %v7033
    %v7035 = vmul.f32 %v7032, %v7034
    %v7036 = vadd.f32 %v7032, %v7035
    %vm7037 = vweird.f32 %v7011
    %vm7038 = vweird.f32 %v7032
    %vm7039 = vmor %vm7037, %vm7038
    %v7040 = vsel %vm7039, %v7032, %v7036
    %v7041 = vand.u32 2147483647, %v7011
    %vm7042 = vcmp.eq.f32.partialorder %v7041, 8.507059e+37
    %v7043 = vand.u32 %v7011, 2147483648
    %v7044 = vor.u32 1.1754944e-38, %v7043
    %v7045 = vsel %vm7042, %v7044, %v7040
    %v7046 = vmul.f32 1.0, %v7045
    %v7047 = vrcp.pop %v7012
    %v7048 = vmul.f32 %v7012, %v7047
    %v7049 = vsub.f32 1.0, %v7048
    %v7050 = vmul.f32 %v7047, %v7049
    %v7051 = vadd.f32 %v7047, %v7050
    %vm7052 = vweird.f32 %v7012
    %vm7053 = vweird.f32 %v7047
    %vm7054 = vmor %vm7052, %vm7053
    %v7055 = vsel %vm7054, %v7047, %v7051
    %v7056 = vand.u32 2147483647, %v7012
    %vm7057 = vcmp.eq.f32.partialorder %v7056, 8.507059e+37
    %v7058 = vand.u32 %v7012, 2147483648
    %v7059 = vor.u32 1.1754944e-38, %v7058
    %v7060 = vsel %vm7057, %v7059, %v7055
    %v7061 = vmul.f32 1.0, %v7060
    %v7062 = vrcp.pop %v7013
    %v7063 = vmul.f32 %v7013, %v7062
    %v7064 = vsub.f32 1.0, %v7063
    %v7065 = vmul.f32 %v7062, %v7064
    %v7066 = vadd.f32 %v7062, %v7065
    %vm7067 = vweird.f32 %v7013
    %vm7068 = vweird.f32 %v7062
    %vm7069 = vmor %vm7067, %vm7068
    %v7070 = vsel %vm7069, %v7062, %v7066
    %v7071 = vand.u32 2147483647, %v7013
    %vm7072 = vcmp.eq.f32.partialorder %v7071, 8.507059e+37
    %v7073 = vand.u32 %v7013, 2147483648
    %v7074 = vor.u32 1.1754944e-38, %v7073
    %v7075 = vsel %vm7072, %v7074, %v7070
    %v7076 = vmul.f32 1.0, %v7075
    %v7077 = vrcp.pop %v7014
    %v7078 = vmul.f32 %v7014, %v7077
    %v7079 = vsub.f32 1.0, %v7078
    %v7080 = vmul.f32 %v7077, %v7079
    %v7081 = vadd.f32 %v7077, %v7080
    %vm7082 = vweird.f32 %v7014
    %vm7083 = vweird.f32 %v7077
    %vm7084 = vmor %vm7082, %vm7083
    %v7085 = vsel %vm7084, %v7077, %v7081
    %v7086 = vand.u32 2147483647, %v7014
    %vm7087 = vcmp.eq.f32.partialorder %v7086, 8.507059e+37
    %v7088 = vand.u32 %v7014, 2147483648
    %v7089 = vor.u32 1.1754944e-38, %v7088
    %v7090 = vsel %vm7087, %v7089, %v7085
    %v7091 = vmul.f32 1.0, %v7090
    %v7092 = vrcp.pop %v7015
    %v7093 = vmul.f32 %v7015, %v7092
    %v7094 = vsub.f32 1.0, %v7093
    %v7095 = vmul.f32 %v7092, %v7094
    %v7096 = vadd.f32 %v7092, %v7095
    %vm7097 = vweird.f32 %v7015
    %vm7098 = vweird.f32 %v7092
    %vm7099 = vmor %vm7097, %vm7098
    %v7100 = vsel %vm7099, %v7092, %v7096
    %v7101 = vand.u32 2147483647, %v7015
    %vm7102 = vcmp.eq.f32.partialorder %v7101, 8.507059e+37
    %v7103 = vand.u32 %v7015, 2147483648
    %v7104 = vor.u32 1.1754944e-38, %v7103
    %v7105 = vsel %vm7102, %v7104, %v7100
    %v7106 = vmul.f32 1.0, %v7105
    %v7107 = vrcp.pop %v7016
    %v7108 = vmul.f32 %v7016, %v7107
    %v7109 = vsub.f32 1.0, %v7108
    %v7110 = vmul.f32 %v7107, %v7109
    %v7111 = vadd.f32 %v7107, %v7110
    %vm7112 = vweird.f32 %v7016
    %vm7113 = vweird.f32 %v7107
    %vm7114 = vmor %vm7112, %vm7113
    %v7115 = vsel %vm7114, %v7107, %v7111
    %v7116 = vand.u32 2147483647, %v7016
    %vm7117 = vcmp.eq.f32.partialorder %v7116, 8.507059e+37
    %v7118 = vand.u32 %v7016, 2147483648
    %v7119 = vor.u32 1.1754944e-38, %v7118
    %v7120 = vsel %vm7117, %v7119, %v7115
    %v7121 = vmul.f32 1.0, %v7120
    %7122 = vst [vmem:[#allocation18] sm:$0xff] %v7031
    %7123 = vst [vmem:[#allocation18 + $0x8] sm:$0xff] %v7046
    %7124 = vst [vmem:[#allocation18 + $0x10] sm:$0xff] %v7061
    %7125 = vst [vmem:[#allocation18 + $0x18] sm:$0xff] %v7076
    %7126 = vst [vmem:[#allocation18 + $0x20] sm:$0xff] %v7091
    %7127 = vst [vmem:[#allocation18 + $0x28] sm:$0xff] %v7106
    %7128 = vst [vmem:[#allocation18 + $0x30] sm:$0xff] %v7121
    // Predicated region
    $region66: #{tpu_custom_call.1} parent=1 // pred_check
      _
    $region67: #{tpu_custom_call.1} parent=1 // pred_check_branch
      %7130 = sbr.rel (0) target = $region69
    $region68: #{tpu_custom_call.1} parent=1 // pred_region
      %7132 = vsyncadd [#allocation8], 0
      %s7134 = sshll.u32 [#allocation18], 4
      %s7135 = int_to_ptr.vmem [resolvable:$true] %s7134
      %s7136 = sshll.u32 %s9, 4
      %s7137 = int_to_ptr.hbm [resolvable:$true] %s7136
      %7139 = dma.vmem_to_hbm [thread:$0]  %s7135, 896, %s7137, [#allocation8]
    $region69: #{tpu_custom_call.1} parent=1 // pred_fallthru
      _
    // Predicated region
    $region70: #{tpu_custom_call.1} parent=1 // pred_check
      _
    $region71: #{tpu_custom_call.1} parent=1 // pred_check_branch
      %7141 = sbr.rel (0) target = $region73
    $region72: #{tpu_custom_call.1} parent=1 // pred_region
      %7143 = dma.done [#allocation8], 896
    $region73: #{tpu_custom_call.1} parent=1 // pred_fallthru
      _
    %7144 = vsyncpa [#allocation7], 1
    %7145 = vsyncpa [#allocation10], 1
    %7146 = vsyncpa [#allocation13], 1
    %7147 = vsyncpa [#allocation16], 1
    %7148 = vsyncpa [#allocation8], 1
  %7149 = vsyncmov [#allocation4]
  %s7150 = vpop.sfrf %7149
  %p7151 = scmp.eq.s32.totalorder %s7150, 0
  %p7152 = pneg %p7151
  %7154 = shalt.err (%p7152)
  %7155 = vsyncmov [#allocation5]
  %s7156 = vpop.sfrf %7155
  %p7157 = scmp.eq.s32.totalorder %s7156, 0
  %p7158 = pneg %p7157
  %7160 = shalt.err (%p7158)

</llo_original>
